<compile_context>
chip_gen: v7x
topology: tpu7x:2x2x1
jax: 0.10.0
libtpu: 0.0.40
codegen_flags: <defaults>
</compile_context>

<pallas_src>
import functools

import jax
import jax.numpy as jnp
from jax import lax
from jax.experimental import pallas as pl
from jax.experimental.pallas import tpu as pltpu

# Force f32-accurate matmuls/convs on both the Pallas and the XLA-reference side so
# the numerical check below is meaningful.
jax.config.update("jax_default_matmul_precision", "highest")

_VMEM_LIMIT = 32 * 1024 * 1024  # explicit scoped-VMEM limit (safe on v5e/v6e/v7x)


def _pick_spatial_tile(C, HW, itemsize, *, max_tile_bytes=4 * 1024 * 1024, min_lanes=512):
    """Largest lane-dim (H*W) tile such that one (C, tile) buffer stays under budget.

    Tile is a multiple of 128 (layout rule) and >= min_lanes (>=512 lanes reaches the
    HBM roofline), or simply the full extent when it already fits.  The budget is
    conservative so 2x double-buffering fits every generation's scoped VMEM."""
    lanes = max(min_lanes, (max_tile_bytes // max(1, C * itemsize)) // 128 * 128)
    return HW if HW <= lanes else lanes


# ----------------------------------------------------------------------------------
# Kernel 1: conv3x3 (as im2col matmul) + folded BatchNorm affine + ReLU
# ----------------------------------------------------------------------------------
def _conv_bn_relu_kernel(p_ref, w_ref, scale_ref, shift_ref, o_ref):
    p = p_ref[...].astype(jnp.float32)                      # (TM, K)
    w = w_ref[...].astype(jnp.float32)                      # (K, Cout)
    y = jnp.dot(p, w, preferred_element_type=jnp.float32)   # MXU
    y = y * scale_ref[...] + shift_ref[...]                 # folded BN (+ conv bias)
    o_ref[...] = jnp.maximum(y, 0.0).astype(o_ref.dtype)


def conv_bn_relu(x, w_conv, b_conv, gamma, beta, mean, var, *, eps=1e-5):
    """x: (N, Cin, H, W).  Returns ReLU(BN(conv2d_valid(x))) as (N, Cout, Ho, Wo).
    (Inference-mode BatchNorm: running statistics.)"""
    N, Cin, H, W = x.shape
    Cout, _, kh, kw = w_conv.shape
    Ho, Wo = H - kh + 1, W - kw + 1

    # im2col (layout plumbing, plain JAX).  K ordering is (ci, dy, dx), matching
    # w_conv.reshape(Cout, Cin*kh*kw).
    cols = [x[:, :, dy:dy + Ho, dx:dx + Wo] for dy in range(kh) for dx in range(kw)]
    patches = jnp.stack(cols, axis=2)                                   # (N, Cin, kh*kw, Ho, Wo)
    patches = patches.transpose(0, 3, 4, 1, 2).reshape(N * Ho * Wo, Cin * kh * kw)
    w2d = w_conv.reshape(Cout, Cin * kh * kw).T                         # (K, Cout)

    scale = (gamma / jnp.sqrt(var + eps)).astype(jnp.float32)           # (Cout,)
    shift = ((b_conv - mean) * scale + beta).astype(jnp.float32)
    scale = scale.reshape(1, Cout)
    shift = shift.reshape(1, Cout)

    M, K = patches.shape
    tm = M if M <= 512 else 512
    grid_m = pl.cdiv(M, tm)

    out = pl.pallas_call(
        _conv_bn_relu_kernel,
        out_shape=jax.ShapeDtypeStruct((M, Cout), x.dtype),
        grid_spec=pltpu.PrefetchScalarGridSpec(
            num_scalar_prefetch=0,
            grid=(grid_m,),
            in_specs=[
                pl.BlockSpec((tm, K), lambda m: (m, 0)),
                pl.BlockSpec((K, Cout), lambda m: (0, 0)),
                pl.BlockSpec((1, Cout), lambda m: (0, 0)),
                pl.BlockSpec((1, Cout), lambda m: (0, 0)),
            ],
            out_specs=pl.BlockSpec((tm, Cout), lambda m: (m, 0)),
        ),
        compiler_params=pltpu.CompilerParams(
            dimension_semantics=("parallel",),
            vmem_limit_bytes=_VMEM_LIMIT,
        ),
    )(patches, w2d, scale, shift)
    return out.reshape(N, Ho, Wo, Cout).transpose(0, 3, 1, 2)           # NCHW


# ----------------------------------------------------------------------------------
# Kernel 2: CBAM channel attention (the reviewed kernel), tiled spatial reduction
# ----------------------------------------------------------------------------------
def _channel_attention_kernel(x_ref, w1_ref, w2_ref, o_ref, sum_ref, max_ref, *, hw_total):
    # Grid = (N, num_hw_tiles): batch axis parallel, spatial reduction axis last.
    k = pl.program_id(1)
    last = pl.num_programs(1) - 1
    thw = x_ref.shape[-1]

    @pl.when(k == 0)
    def _init():
        sum_ref[...] = jnp.zeros_like(sum_ref)
        max_ref[...] = jnp.full_like(max_ref, -jnp.inf)

    # Per-tile partial reduction with tail-tile masking: padded lanes of the last
    # tile must not pollute the running max or the running sum.
    x = x_ref[...]                                              # (1, C, thw), input dtype
    lane = lax.broadcasted_iota(jnp.int32, x.shape, 2)
    valid = lane < (hw_total - k * thw)
    xf = x.astype(jnp.float32)                                  # upcast per tile only
    sum_ref[...] += jnp.sum(jnp.where(valid, xf, 0.0), axis=-1)
    max_ref[...] = jnp.maximum(
        max_ref[...], jnp.max(jnp.where(valid, xf, -jnp.inf), axis=-1))

    @pl.when(k == last)
    def _finalize():
        avg = sum_ref[...] * (1.0 / hw_total)                   # true mean (not padded count)
        pooled = jnp.concatenate([avg, max_ref[...]], axis=0)   # (2, C): fused avg/max branches
        w1 = w1_ref[...].astype(jnp.float32)                    # (C, hidden)  pre-transposed
        w2 = w2_ref[...].astype(jnp.float32)                    # (hidden, C)  pre-transposed
        h = jnp.maximum(jnp.dot(pooled, w1, preferred_element_type=jnp.float32), 0.0)
        y = jnp.dot(h, w2, preferred_element_type=jnp.float32)  # (2, C)
        att = jax.nn.sigmoid(y[0:1, :] + y[1:2, :])             # (1, C)
        o_ref[...] = att[:, None, :].astype(o_ref.dtype)        # (1, 1, C)


def channel_attention(x, w1, w2, *, max_tile_bytes=4 * 1024 * 1024):
    """CBAM channel attention.  x: (N, C, H, W); w1: (hidden, C); w2: (C, hidden).
    Returns sigmoid(fc(avg_pool(x)) + fc(max_pool(x))) with shape (N, C, 1, 1)."""
    N, C, H, W = x.shape
    hidden = w1.shape[0]
    assert w1.shape == (hidden, C) and w2.shape == (C, hidden)
    HW = H * W
    x_flat = x.reshape(N, C, HW)

    # Pre-transpose the 1x1-conv weights once in the wrapper (no in-kernel .T).
    w1t = jnp.transpose(w1)                                     # (C, hidden)
    w2t = jnp.transpose(w2)                                     # (hidden, C)

    itemsize = jnp.dtype(x.dtype).itemsize
    thw = _pick_spatial_tile(C, HW, itemsize, max_tile_bytes=max_tile_bytes)
    num_hw = pl.cdiv(HW, thw)

    kernel = functools.partial(_channel_attention_kernel, hw_total=HW)

    out = pl.pallas_call(
        kernel,
        out_shape=jax.ShapeDtypeStruct((N, 1, C), x.dtype),
        grid_spec=pltpu.PrefetchScalarGridSpec(
            num_scalar_prefetch=0,
            grid=(N, num_hw),
            in_specs=[
                pl.BlockSpec((1, C, thw), lambda n, k: (n, 0, k)),
                pl.BlockSpec((C, hidden), lambda n, k: (0, 0)),
                pl.BlockSpec((hidden, C), lambda n, k: (0, 0)),
            ],
            out_specs=pl.BlockSpec((1, 1, C), lambda n, k: (n, 0, 0)),
            scratch_shapes=[
                pltpu.VMEM((1, C), jnp.float32),    # running sum
                pltpu.VMEM((1, C), jnp.float32),    # running max
            ],
        ),
        compiler_params=pltpu.CompilerParams(
            dimension_semantics=("parallel", "arbitrary"),
            vmem_limit_bytes=_VMEM_LIMIT,
        ),
    )(x_flat, w1t, w2t)

    return jnp.transpose(out, (0, 2, 1)).reshape(N, C, 1, 1)


# ----------------------------------------------------------------------------------
# Kernel 3: apply channel attention + channel mean/max pooling (for spatial attention)
# ----------------------------------------------------------------------------------
def _ca_apply_pool_kernel(y_ref, ca_ref, x2_ref, cm_ref):
    y = y_ref[...].astype(jnp.float32)                 # (1, C, t)
    ca = ca_ref[...].astype(jnp.float32)               # (1, C, 1)
    x2 = y * ca                                        # lane-broadcast of per-channel gate
    x2_ref[...] = x2.astype(x2_ref.dtype)
    avg = jnp.mean(x2, axis=1, keepdims=True)          # (1, 1, t) channel mean
    mx = jnp.max(x2, axis=1, keepdims=True)            # (1, 1, t) channel max
    cm_ref[...] = jnp.concatenate([avg, mx], axis=1).astype(cm_ref.dtype)


def apply_channel_attention(y_flat, ca):
    """y_flat: (N, C, H*W); ca: (N, C, 1).  Returns (y*ca, concat([mean_c, max_c]))."""
    N, C, HW = y_flat.shape
    t = _pick_spatial_tile(C, HW, jnp.dtype(y_flat.dtype).itemsize)
    num_t = pl.cdiv(HW, t)
    return pl.pallas_call(
        _ca_apply_pool_kernel,
        out_shape=(jax.ShapeDtypeStruct((N, C, HW), y_flat.dtype),
                   jax.ShapeDtypeStruct((N, 2, HW), y_flat.dtype)),
        grid_spec=pltpu.PrefetchScalarGridSpec(
            num_scalar_prefetch=0,
            grid=(N, num_t),
            in_specs=[
                pl.BlockSpec((1, C, t), lambda n, k: (n, 0, k)),
                pl.BlockSpec((1, C, 1), lambda n, k: (n, 0, 0)),
            ],
            out_specs=[
                pl.BlockSpec((1, C, t), lambda n, k: (n, 0, k)),
                pl.BlockSpec((1, 2, t), lambda n, k: (n, 0, k)),
            ],
        ),
        compiler_params=pltpu.CompilerParams(
            dimension_semantics=("parallel", "parallel"),
            vmem_limit_bytes=_VMEM_LIMIT,
        ),
    )(y_flat, ca)


# ----------------------------------------------------------------------------------
# Kernel 4: spatial attention (7x7, 2->1 channel conv) + sigmoid + apply
# ----------------------------------------------------------------------------------
def _spatial_attention_kernel(x2_ref, cmp_ref, w_ref, o_ref):
    # x2_ref: (1, C, H, W); cmp_ref: (1, 2, H+6, W+6) zero-padded; w_ref: (2, 49) in SMEM.
    _, C, H, W = x2_ref.shape
    acc = jnp.zeros((1, H, W), jnp.float32)
    for c in range(2):                       # static unroll: 2 channels x 7x7 taps
        for dy in range(7):
            for dx in range(7):
                tap = cmp_ref[:, c, dy:dy + H, dx:dx + W].astype(jnp.float32)  # (1, H, W)
                acc = acc + w_ref[c, dy * 7 + dx] * tap
    att = jax.nn.sigmoid(acc)                                  # (1, H, W)
    x2 = x2_ref[...].astype(jnp.float32)
    o_ref[...] = (x2 * att[:, None, :, :]).astype(o_ref.dtype)


def apply_spatial_attention(x2, cm, w_sa):
    """x2: (N, C, H, W); cm: (N, 2, H, W); w_sa: (1, 2, 7, 7) bias-free conv weight.
    Returns x2 * sigmoid(conv7x7(cm, padding=3))."""
    N, C, H, W = x2.shape
    cm_pad = jnp.pad(cm, ((0, 0), (0, 0), (3, 3), (3, 3)))      # SAME padding, plain JAX
    w_flat = w_sa.reshape(2, 49).astype(jnp.float32)            # (in=2, 7*7), dy-major

    return pl.pallas_call(
        _spatial_attention_kernel,
        out_shape=jax.ShapeDtypeStruct((N, C, H, W), x2.dtype),
        grid_spec=pltpu.PrefetchScalarGridSpec(
            num_scalar_prefetch=0,
            grid=(N,),
            in_specs=[
                pl.BlockSpec((1, C, H, W), lambda n: (n, 0, 0, 0)),
                pl.BlockSpec((1, 2, H + 6, W + 6), lambda n: (n, 0, 0, 0)),
                pl.BlockSpec(memory_space=pltpu.MemorySpace.SMEM),
            ],
            out_specs=pl.BlockSpec((1, C, H, W), lambda n: (n, 0, 0, 0)),
        ),
        compiler_params=pltpu.CompilerParams(
            dimension_semantics=("parallel",),
            vmem_limit_bytes=_VMEM_LIMIT,
        ),
    )(x2, cm_pad, w_flat)


# ----------------------------------------------------------------------------------
# ConvBlock forward
# ----------------------------------------------------------------------------------
def max_pool(x, k):
    # TODO(synk): fuse the kxk max-pool into the spatial-attention kernel (needs strided
    # ref reads inside the kernel); done as a plain-JAX reshape-max for now.
    N, C, H, W = x.shape
    Hc, Wc = (H // k) * k, (W // k) * k
    x = x[:, :, :Hc, :Wc].reshape(N, C, Hc // k, k, Wc // k, k)
    return x.max(axis=(3, 5))


def conv_block_forward(x, params, *, maxpool=2, bn_eps=1e-5):
    """ConvBlock: conv3x3 -> BN -> ReLU -> ChannelAttention -> SpatialAttention -> MaxPool."""
    N = x.shape[0]
    y = conv_bn_relu(x, params["w_conv"], params["b_conv"], params["bn_gamma"],
                     params["bn_beta"], params["bn_mean"], params["bn_var"], eps=bn_eps)
    _, C, Ho, Wo = y.shape

    ca = channel_attention(y, params["w_ca1"], params["w_ca2"])          # (N, C, 1, 1)
    x2_flat, cm_flat = apply_channel_attention(y.reshape(N, C, Ho * Wo),
                                               ca.reshape(N, C, 1))
    x2 = x2_flat.reshape(N, C, Ho, Wo)
    cm = cm_flat.reshape(N, 2, Ho, Wo)

    x3 = apply_spatial_attention(x2, cm, params["w_sa"])

    if maxpool > 1:
        x3 = max_pool(x3, maxpool)
    return x3


if __name__ == "__main__":
    key = jax.random.PRNGKey(0)
    ks = jax.random.split(key, 10)

    N, ch_from, ch_to, H, W = 2, 4, 32, 16, 16
    hidden = ch_to // 16                            # module hardcodes ratio 16 -> 2

    x = jax.random.normal(ks[0], (N, ch_from, H, W), dtype=jnp.float32)
    params = {
        "w_conv": jax.random.normal(ks[1], (ch_to, ch_from, 3, 3), jnp.float32) * 0.1,
        "b_conv": jax.random.normal(ks[2], (ch_to,), jnp.float32) * 0.1,
        "bn_gamma": 1.0 + 0.1 * jax.random.normal(ks[3], (ch_to,), jnp.float32),
        "bn_beta": 0.1 * jax.random.normal(ks[4], (ch_to,), jnp.float32),
        "bn_mean": 0.1 * jax.random.normal(ks[5], (ch_to,), jnp.float32),
        "bn_var": jnp.abs(1.0 + 0.1 * jax.random.normal(ks[6], (ch_to,), jnp.float32)),
        "w_ca1": jax.random.normal(ks[7], (hidden, ch_to), jnp.float32) * 0.1,
        "w_ca2": jax.random.normal(ks[8], (ch_to, hidden), jnp.float32) * 0.1,
        "w_sa": jax.random.normal(ks[9], (1, 2, 7, 7), jnp.float32) * 0.1,
    }

    out = conv_block_forward(x, params)
    out = jax.block_until_ready(out)

    # ---- plain-JAX reference (same math as the PyTorch module, eval-mode BN) ----
    def ref_forward(x, p, eps=1e-5):
        dn = ("NCHW", "OIHW", "NCHW")
        y = lax.conv_general_dilated(x, p["w_conv"], (1, 1), "VALID", dimension_numbers=dn)
        y = y + p["b_conv"][None, :, None, None]
        y = (y - p["bn_mean"][None, :, None, None]) / jnp.sqrt(
            p["bn_var"][None, :, None, None] + eps)
        y = y * p["bn_gamma"][None, :, None, None] + p["bn_beta"][None, :, None, None]
        y = jnp.maximum(y, 0.0)
        # channel attention
        avg = jnp.mean(y, axis=(2, 3))
        mx = jnp.max(y, axis=(2, 3))
        fc = lambda v: jnp.maximum(v @ p["w_ca1"].T, 0.0) @ p["w_ca2"].T
        y = y * jax.nn.sigmoid(fc(avg) + fc(mx))[:, :, None, None]
        # spatial attention
        cm = jnp.concatenate([jnp.mean(y, axis=1, keepdims=True),
                              jnp.max(y, axis=1, keepdims=True)], axis=1)
        sa = lax.conv_general_dilated(cm, p["w_sa"], (1, 1), ((3, 3), (3, 3)),
                                      dimension_numbers=dn)
        y = y * jax.nn.sigmoid(sa)
        # 2x2 max-pool
        n, c, h, w = y.shape
        y = y[:, :, :(h // 2) * 2, :(w // 2) * 2].reshape(
            n, c, h // 2, 2, w // 2, 2).max((3, 5))
        return y

    ref = ref_forward(x, params)
    assert out.shape == ref.shape == (N, ch_to, (H - 2) // 2, (W - 2) // 2)
    assert jnp.allclose(out, ref, atol=1e-4, rtol=1e-4), float(jnp.max(jnp.abs(out - ref)))

    # ---- standalone check of the tiled channel-attention kernel: forces a small
    # ---- spatial tile so the multi-tile path + tail-lane masking is exercised.
    xt = jax.random.normal(ks[0], (2, ch_to, 23, 29), dtype=jnp.float32)   # H*W = 667
    ca_t = channel_attention(xt, params["w_ca1"], params["w_ca2"],
                             max_tile_bytes=512 * ch_to * 4)               # -> tile=512, 2 tiles
    ca_t = jax.block_until_ready(ca_t)
    avg_t = jnp.mean(xt, axis=(2, 3))
    max_t = jnp.max(xt, axis=(2, 3))
    fc = lambda v: jnp.maximum(v @ params["w_ca1"].T, 0.0) @ params["w_ca2"].T
    ca_ref = jax.nn.sigmoid(fc(avg_t) + fc(max_t)).reshape(2, ch_to, 1, 1)
    assert jnp.allclose(ca_t, ca_ref, atol=1e-5, rtol=1e-5), \
        float(jnp.max(jnp.abs(ca_t - ca_ref)))

    print("KERNEL_OK")
</pallas_src>

<mosaic_0001>
module attributes {stable_mosaic.version = 11 : i64} {
  func.func @_conv_bn_relu_kernel(%arg0: i32, %arg1: memref<392x36xf32, #tpu.memory_space<vmem>>, %arg2: memref<36x32xf32, #tpu.memory_space<vmem>>, %arg3: memref<1x32xf32, #tpu.memory_space<vmem>>, %arg4: memref<1x32xf32, #tpu.memory_space<vmem>>, %arg5: memref<392x32xf32, #tpu.memory_space<vmem>>) attributes {dimension_semantics = [#tpu.dimension_semantics<parallel>], iteration_bounds = array<i64: 1>, scalar_prefetch = 0 : i64, scratch_operands = 0 : i64, tpu.core_type = #tpu.core_type<tc>, window_params = [{transform_indices = @transform_0, window_bounds = array<i64: 392, 36>}, {pipeline_mode = #tpu.pipeline_mode<synchronous>, transform_indices = @transform_1, window_bounds = array<i64: 36, 32>}, {pipeline_mode = #tpu.pipeline_mode<synchronous>, transform_indices = @transform_2, window_bounds = array<i64: 1, 32>}, {pipeline_mode = #tpu.pipeline_mode<synchronous>, transform_indices = @transform_3, window_bounds = array<i64: 1, 32>}, {transform_indices = @transform_4, window_bounds = array<i64: 392, 32>}]} {
    %c0 = arith.constant 0 : index
    %c0_0 = arith.constant 0 : index
    %0 = vector.load %arg1[%c0, %c0_0] : memref<392x36xf32, #tpu.memory_space<vmem>>, vector<392x36xf32>
    %c0_1 = arith.constant 0 : index
    %c0_2 = arith.constant 0 : index
    %1 = vector.load %arg2[%c0_1, %c0_2] : memref<36x32xf32, #tpu.memory_space<vmem>>, vector<36x32xf32>
    %cst = arith.constant dense<0.000000e+00> : vector<392x32xf32>
    %2 = tpu.matmul %0, %1, %cst {dimension_numbers = #tpu.dot_dimension_numbers<[1], [0], [0], [1], [0, 0, 1, 1], [], []>, precision = #tpu.contract_precision<fp32>} : vector<392x36xf32>, vector<36x32xf32>, vector<392x32xf32> -> vector<392x32xf32>
    %c0_3 = arith.constant 0 : index
    %c0_4 = arith.constant 0 : index
    %3 = vector.load %arg3[%c0_3, %c0_4] : memref<1x32xf32, #tpu.memory_space<vmem>>, vector<1x32xf32>
    %4 = vector.broadcast %3 : vector<1x32xf32> to vector<392x32xf32>
    %5 = arith.mulf %2, %4 : vector<392x32xf32>
    %c0_5 = arith.constant 0 : index
    %c0_6 = arith.constant 0 : index
    %6 = vector.load %arg4[%c0_5, %c0_6] : memref<1x32xf32, #tpu.memory_space<vmem>>, vector<1x32xf32>
    %7 = vector.broadcast %6 : vector<1x32xf32> to vector<392x32xf32>
    %8 = arith.addf %5, %7 : vector<392x32xf32>
    %cst_7 = arith.constant 0.000000e+00 : f32
    %9 = vector.broadcast %cst_7 : f32 to vector<392x32xf32>
    %10 = arith.maximumf %8, %9 : vector<392x32xf32>
    %c0_8 = arith.constant 0 : index
    %c0_9 = arith.constant 0 : index
    %11 = vector.load %arg5[%c0_8, %c0_9] : memref<392x32xf32, #tpu.memory_space<vmem>>, vector<392x32xf32>
    tpu.vector_store %arg5[%c0_8, %c0_9], %10 {strides = array<i32>} : memref<392x32xf32, #tpu.memory_space<vmem>>, vector<392x32xf32>,
    return
  }
  func.func @transform_0(%arg0: i32) -> (i32, i32) {
    %c0_i32 = arith.constant 0 : i32
    %c0_i32_0 = arith.constant 0 : i32
    return %arg0, %c0_i32 : i32, i32
  }
  func.func @transform_1(%arg0: i32) -> (i32, i32) {
    %c0_i32 = arith.constant 0 : i32
    %c0_i32_0 = arith.constant 0 : i32
    %c0_i32_1 = arith.constant 0 : i32
    return %c0_i32, %c0_i32_0 : i32, i32
  }
  func.func @transform_2(%arg0: i32) -> (i32, i32) {
    %c0_i32 = arith.constant 0 : i32
    %c0_i32_0 = arith.constant 0 : i32
    %c0_i32_1 = arith.constant 0 : i32
    return %c0_i32, %c0_i32_0 : i32, i32
  }
  func.func @transform_3(%arg0: i32) -> (i32, i32) {
    %c0_i32 = arith.constant 0 : i32
    %c0_i32_0 = arith.constant 0 : i32
    %c0_i32_1 = arith.constant 0 : i32
    return %c0_i32, %c0_i32_0 : i32, i32
  }
  func.func @transform_4(%arg0: i32) -> (i32, i32) {
    %c0_i32 = arith.constant 0 : i32
    %c0_i32_0 = arith.constant 0 : i32
    return %arg0, %c0_i32 : i32, i32
  }
}

</mosaic_0001>

<llo_original>
// kernel: tpu_custom_call.1
$region0: #{tpu_custom_call.1}
  #allocation0 [shape = 'u32[]', space=smem, size = 0x4, offset = 0x4, fixed_abs, tag = 'smem constant byte address 0x4 - core index']
  #allocation1 [shape = 'u32[144,128]{1,0:T(1,128)}', space=vmem, size = 0x12000, scoped, tag = 'internal scratch']
  %s0 = inlined_call_operand.vmem [shape: f32[392,36], index: 0, kind: input, shape index: {}]
  %s1 = inlined_call_operand.vmem [shape: f32[36,32], index: 1, kind: input, shape index: {}]
  %s2 = inlined_call_operand.vmem [shape: f32[1,32], index: 2, kind: input, shape index: {}]
  %s3 = inlined_call_operand.vmem [shape: f32[1,32], index: 3, kind: input, shape index: {}]
  %s4 = inlined_call_operand.vmem [shape: f32[392,32], index: 4, kind: output, shape index: {}]
  %s5 = sld [smem:[#allocation0]]
  $region26: #{tpu_custom_call.1} parent=0
    _
  %s7 = ssub.s32 1, %s5
  %s8 = scalar_select 0, %s7, %s5
  // Predicated region
  $region2: #{tpu_custom_call.1} parent=0 // pred_check
    _
  $region3: #{tpu_custom_call.1} parent=0 // pred_check_branch
    %10 = sbr.rel (0) target = $region5
  $region4: #{tpu_custom_call.1} parent=0 // pred_region
    _
  $region5: #{tpu_custom_call.1} parent=0 // pred_fallthru
    _
  // Predicated region
  $region6: #{tpu_custom_call.1} parent=0 // pred_check
    _
  $region7: #{tpu_custom_call.1} parent=0 // pred_check_branch
    %12 = sbr.rel (0) target = $region9
  $region8: #{tpu_custom_call.1} parent=0 // pred_region
    _
  $region9: #{tpu_custom_call.1} parent=0 // pred_fallthru
    _
  // Predicated region
  $region10: #{tpu_custom_call.1} parent=0 // pred_check
    _
  $region11: #{tpu_custom_call.1} parent=0 // pred_check_branch
    %14 = sbr.rel (0) target = $region13
  $region12: #{tpu_custom_call.1} parent=0 // pred_region
    _
  $region13: #{tpu_custom_call.1} parent=0 // pred_fallthru
    _
  // Predicated region
  $region14: #{tpu_custom_call.1} parent=0 // pred_check
    _
  $region15: #{tpu_custom_call.1} parent=0 // pred_check_branch
    %16 = sbr.rel (0) target = $region17
  $region16: #{tpu_custom_call.1} parent=0 // pred_region
    _
  $region17: #{tpu_custom_call.1} parent=0 // pred_fallthru
    _
  %v17 = vld [vmem:[%s0] sm:$0xff]
  %v18 = vld [vmem:[%s0 + $0x8] sm:$0xff]
  %v19 = vld [vmem:[%s0 + $0x10] sm:$0xff]
  %v20 = vld [vmem:[%s0 + $0x18] sm:$0xff]
  %v21 = vld [vmem:[%s0 + $0x20] sm:$0xff]
  %v22 = vld [vmem:[%s0 + $0x28] sm:$0xff]
  %v23 = vld [vmem:[%s0 + $0x30] sm:$0xff]
  %v24 = vld [vmem:[%s0 + $0x38] sm:$0xff]
  %v25 = vld [vmem:[%s0 + $0x40] sm:$0xff]
  %v26 = vld [vmem:[%s0 + $0x48] sm:$0xff]
  %v27 = vld [vmem:[%s0 + $0x50] sm:$0xff]
  %v28 = vld [vmem:[%s0 + $0x58] sm:$0xff]
  %v29 = vld [vmem:[%s0 + $0x60] sm:$0xff]
  %v30 = vld [vmem:[%s0 + $0x68] sm:$0xff]
  %v31 = vld [vmem:[%s0 + $0x70] sm:$0xff]
  %v32 = vld [vmem:[%s0 + $0x78] sm:$0xff]
  %v33 = vld [vmem:[%s0 + $0x80] sm:$0xff]
  %v34 = vld [vmem:[%s0 + $0x88] sm:$0xff]
  %v35 = vld [vmem:[%s0 + $0x90] sm:$0xff]
  %v36 = vld [vmem:[%s0 + $0x98] sm:$0xff]
  %v37 = vld [vmem:[%s0 + $0xa0] sm:$0xff]
  %v38 = vld [vmem:[%s0 + $0xa8] sm:$0xff]
  %v39 = vld [vmem:[%s0 + $0xb0] sm:$0xff]
  %v40 = vld [vmem:[%s0 + $0xb8] sm:$0xff]
  %v41 = vld [vmem:[%s0 + $0xc0] sm:$0xff]
  %v42 = vld [vmem:[%s0 + $0xc8] sm:$0xff]
  %v43 = vld [vmem:[%s0 + $0xd0] sm:$0xff]
  %v44 = vld [vmem:[%s0 + $0xd8] sm:$0xff]
  %v45 = vld [vmem:[%s0 + $0xe0] sm:$0xff]
  %v46 = vld [vmem:[%s0 + $0xe8] sm:$0xff]
  %v47 = vld [vmem:[%s0 + $0xf0] sm:$0xff]
  %v48 = vld [vmem:[%s0 + $0xf8] sm:$0xff]
  %v49 = vld [vmem:[%s0 + $0x100] sm:$0xff]
  %v50 = vld [vmem:[%s0 + $0x108] sm:$0xff]
  %v51 = vld [vmem:[%s0 + $0x110] sm:$0xff]
  %v52 = vld [vmem:[%s0 + $0x118] sm:$0xff]
  %v53 = vld [vmem:[%s0 + $0x120] sm:$0xff]
  %v54 = vld [vmem:[%s0 + $0x128] sm:$0xff]
  %v55 = vld [vmem:[%s0 + $0x130] sm:$0xff]
  %v56 = vld [vmem:[%s0 + $0x138] sm:$0xff]
  %v57 = vld [vmem:[%s0 + $0x140] sm:$0xff]
  %v58 = vld [vmem:[%s0 + $0x148] sm:$0xff]
  %v59 = vld [vmem:[%s0 + $0x150] sm:$0xff]
  %v60 = vld [vmem:[%s0 + $0x158] sm:$0xff]
  %v61 = vld [vmem:[%s0 + $0x160] sm:$0xff]
  %v62 = vld [vmem:[%s0 + $0x168] sm:$0xff]
  %v63 = vld [vmem:[%s0 + $0x170] sm:$0xff]
  %v64 = vld [vmem:[%s0 + $0x178] sm:$0xff]
  %v65 = vld [vmem:[%s0 + $0x180] sm:$0xff]
  %v66 = vld [vmem:[%s1] sm:$0xff]
  %v67 = vld [vmem:[%s1 + $0x8] sm:$0xff]
  %v68 = vld [vmem:[%s1 + $0x10] sm:$0xff]
  %v69 = vld [vmem:[%s1 + $0x18] sm:$0xff]
  %v70 = vld [vmem:[%s1 + $0x20] sm:$0xf]
  %vm71 = vcmask 293888
  %v73 = vsel %vm71, %v17, 0
  %v76 = vsel %vm71, %v18, 0
  %v79 = vsel %vm71, %v19, 0
  %v82 = vsel %vm71, %v20, 0
  %v85 = vsel %vm71, %v21, 0
  %v88 = vsel %vm71, %v22, 0
  %v91 = vsel %vm71, %v23, 0
  %v94 = vsel %vm71, %v24, 0
  %v97 = vsel %vm71, %v25, 0
  %v100 = vsel %vm71, %v26, 0
  %v103 = vsel %vm71, %v27, 0
  %v106 = vsel %vm71, %v28, 0
  %v109 = vsel %vm71, %v29, 0
  %v112 = vsel %vm71, %v30, 0
  %v115 = vsel %vm71, %v31, 0
  %v118 = vsel %vm71, %v32, 0
  %v121 = vsel %vm71, %v33, 0
  %v124 = vsel %vm71, %v34, 0
  %v127 = vsel %vm71, %v35, 0
  %v130 = vsel %vm71, %v36, 0
  %v133 = vsel %vm71, %v37, 0
  %v136 = vsel %vm71, %v38, 0
  %v139 = vsel %vm71, %v39, 0
  %v142 = vsel %vm71, %v40, 0
  %v145 = vsel %vm71, %v41, 0
  %v148 = vsel %vm71, %v42, 0
  %v151 = vsel %vm71, %v43, 0
  %v154 = vsel %vm71, %v44, 0
  %v157 = vsel %vm71, %v45, 0
  %v160 = vsel %vm71, %v46, 0
  %v163 = vsel %vm71, %v47, 0
  %v166 = vsel %vm71, %v48, 0
  %v169 = vsel %vm71, %v49, 0
  %v172 = vsel %vm71, %v50, 0
  %v175 = vsel %vm71, %v51, 0
  %v178 = vsel %vm71, %v52, 0
  %v181 = vsel %vm71, %v53, 0
  %v184 = vsel %vm71, %v54, 0
  %v187 = vsel %vm71, %v55, 0
  %v190 = vsel %vm71, %v56, 0
  %v193 = vsel %vm71, %v57, 0
  %v196 = vsel %vm71, %v58, 0
  %v199 = vsel %vm71, %v59, 0
  %v202 = vsel %vm71, %v60, 0
  %v205 = vsel %vm71, %v61, 0
  %v208 = vsel %vm71, %v62, 0
  %v211 = vsel %vm71, %v63, 0
  %v214 = vsel %vm71, %v64, 0
  %v217 = vsel %vm71, %v65, 0
  %vm219 = vcmask 1043456
  %v221 = vsel %vm219, %v70, 0
  %223 = vmatprep.subr.mxu0 0.0
  %v224 = vand.u32 %v66, 4294901760
  %225 = vmatpush1.msra.mxu0 %v224
  %226 = vmatprep.subr.mxu0 0.0
  %v227 = vand.u32 %v67, 4294901760
  %228 = vmatpush1.msra.mxu0 %v227
  %229 = vmatprep.subr.mxu0 0.0
  %v230 = vand.u32 %v68, 4294901760
  %231 = vmatpush1.msra.mxu0 %v230
  %232 = vmatprep.subr.mxu0 0.0
  %v233 = vand.u32 %v69, 4294901760
  %234 = vmatpush1.msra.mxu0 %v233
  %235 = vmatprep.subr.mxu0 0.0
  %v236 = vand.u32 %v221, 4294901760
  %237 = vmatpush1.msra.mxu0 %v236
  %238 = vmatprep.subr.mxu0 0.0
  %239 = vmatpush1.msra.mxu0 0.0
  %240 = vmatprep.subr.mxu0 0.0
  %241 = vmatpush1.msra.mxu0 0.0
  %242 = vmatprep.subr.mxu0 0.0
  %243 = vmatpush1.msra.mxu0 0.0
  %244 = vmatprep.subr.mxu0 0.0
  %245 = vmatpush1.msra.mxu0 0.0
  %246 = vmatprep.subr.mxu0 0.0
  %247 = vmatpush1.msra.mxu0 0.0
  %248 = vmatprep.subr.mxu0 0.0
  %249 = vmatpush1.msra.mxu0 0.0
  %250 = vmatprep.subr.mxu0 0.0
  %251 = vmatpush1.msra.mxu0 0.0
  %252 = vmatprep.subr.mxu0 0.0
  %253 = vmatpush1.msra.mxu0 0.0
  %254 = vmatprep.subr.mxu0 0.0
  %255 = vmatpush1.msra.mxu0 0.0
  %256 = vmatprep.subr.mxu0 0.0
  %257 = vmatpush1.msra.mxu0 0.0
  %258 = vmatprep.subr.mxu0 0.0
  %259 = vmatpush1.msra.mxu0 0.0
  %260 = vmatprep.subr.mxu0 0.0
  %261 = vmatpush1.msra.mxu0 0.0
  %262 = vmatprep.subr.mxu0 0.0
  %263 = vmatpush1.msra.mxu0 0.0
  %264 = vmatprep.subr.mxu0 0.0
  %265 = vmatpush1.msra.mxu0 0.0
  %266 = vmatprep.subr.mxu0 0.0
  %267 = vmatpush1.msra.mxu0 0.0
  %268 = vmatprep.subr.mxu0 0.0
  %269 = vmatpush1.msra.mxu0 0.0
  %270 = vmatprep.subr.mxu0 0.0
  %271 = vmatpush1.msra.mxu0 0.0
  %272 = vmatprep.subr.mxu0 0.0
  %273 = vmatpush1.msra.mxu0 0.0
  %274 = vmatprep.subr.mxu0 0.0
  %275 = vmatpush1.msra.mxu0 0.0
  %276 = vmatprep.subr.mxu0 0.0
  %277 = vmatpush1.msra.mxu0 0.0
  %278 = vmatprep.subr.mxu0 0.0
  %279 = vmatpush1.msra.mxu0 0.0
  %280 = vmatprep.subr.mxu0 0.0
  %281 = vmatpush1.msra.mxu0 0.0
  %282 = vmatprep.subr.mxu0 0.0
  %283 = vmatpush1.msra.mxu0 0.0
  %284 = vmatprep.subr.mxu0 0.0
  %285 = vmatpush1.msra.mxu0 0.0
  %286 = vmatprep.subr.mxu0 0.0
  %287 = vmatpush1.msra.mxu0 0.0
  %288 = vmatprep.subr.mxu0 0.0
  %289 = vmatpush1.msra.mxu0 0.0
  %290 = vmatprep.subr.mxu0 0.0
  %291 = vmatpush1.msra.mxu0 0.0
  %292 = vmatprep.mubr.f32.mxu0 0.0
  %v293 = vand.u32 %v73, 4294901760
  %v294 = vsub.f32 %v73, %v293
  %v295 = vand.u32 %v294, 4294901760
  %v296 = vsub.f32 %v294, %v295
  %v297 = vand.u32 %v296, 4294901760
  %298 = vmatmul.mubr.f32.gmra.mrb[0].mxu0 %v297
  %v299 = vpop.f32.mrb[0].mxu0
  %v300 = vadd.f32 0.0, %v299
  %v301 = vpop.f32.mrb[0].mxu0
  %302 = vmatprep.mubr.f32.mxu0 0.0
  %v303 = vand.u32 %v76, 4294901760
  %v304 = vsub.f32 %v76, %v303
  %v305 = vand.u32 %v304, 4294901760
  %v306 = vsub.f32 %v304, %v305
  %v307 = vand.u32 %v306, 4294901760
  %308 = vmatmul.mubr.f32.gmra.mrb[0].mxu0 %v307
  %v309 = vpop.f32.mrb[0].mxu0
  %v310 = vadd.f32 0.0, %v309
  %v311 = vpop.f32.mrb[0].mxu0
  %312 = vmatprep.mubr.f32.mxu0 0.0
  %v313 = vand.u32 %v79, 4294901760
  %v314 = vsub.f32 %v79, %v313
  %v315 = vand.u32 %v314, 4294901760
  %v316 = vsub.f32 %v314, %v315
  %v317 = vand.u32 %v316, 4294901760
  %318 = vmatmul.mubr.f32.gmra.mrb[0].mxu0 %v317
  %v319 = vpop.f32.mrb[0].mxu0
  %v320 = vadd.f32 0.0, %v319
  %v321 = vpop.f32.mrb[0].mxu0
  %322 = vmatprep.mubr.f32.mxu0 0.0
  %v323 = vand.u32 %v82, 4294901760
  %v324 = vsub.f32 %v82, %v323
  %v325 = vand.u32 %v324, 4294901760
  %v326 = vsub.f32 %v324, %v325
  %v327 = vand.u32 %v326, 4294901760
  %328 = vmatmul.mubr.f32.gmra.mrb[0].mxu0 %v327
  %v329 = vpop.f32.mrb[0].mxu0
  %v330 = vadd.f32 0.0, %v329
  %v331 = vpop.f32.mrb[0].mxu0
  %332 = vmatprep.mubr.f32.mxu0 0.0
  %v333 = vand.u32 %v85, 4294901760
  %v334 = vsub.f32 %v85, %v333
  %v335 = vand.u32 %v334, 4294901760
  %v336 = vsub.f32 %v334, %v335
  %v337 = vand.u32 %v336, 4294901760
  %338 = vmatmul.mubr.f32.gmra.mrb[0].mxu0 %v337
  %v339 = vpop.f32.mrb[0].mxu0
  %v340 = vadd.f32 0.0, %v339
  %v341 = vpop.f32.mrb[0].mxu0
  %342 = vmatprep.mubr.f32.mxu0 0.0
  %v343 = vand.u32 %v88, 4294901760
  %v344 = vsub.f32 %v88, %v343
  %v345 = vand.u32 %v344, 4294901760
  %v346 = vsub.f32 %v344, %v345
  %v347 = vand.u32 %v346, 4294901760
  %348 = vmatmul.mubr.f32.gmra.mrb[0].mxu0 %v347
  %v349 = vpop.f32.mrb[0].mxu0
  %v350 = vadd.f32 0.0, %v349
  %v351 = vpop.f32.mrb[0].mxu0
  %352 = vmatprep.mubr.f32.mxu0 0.0
  %v353 = vand.u32 %v91, 4294901760
  %v354 = vsub.f32 %v91, %v353
  %v355 = vand.u32 %v354, 4294901760
  %v356 = vsub.f32 %v354, %v355
  %v357 = vand.u32 %v356, 4294901760
  %358 = vmatmul.mubr.f32.gmra.mrb[0].mxu0 %v357
  %v359 = vpop.f32.mrb[0].mxu0
  %v360 = vadd.f32 0.0, %v359
  %v361 = vpop.f32.mrb[0].mxu0
  %362 = vmatprep.mubr.f32.mxu0 0.0
  %v363 = vand.u32 %v94, 4294901760
  %v364 = vsub.f32 %v94, %v363
  %v365 = vand.u32 %v364, 4294901760
  %v366 = vsub.f32 %v364, %v365
  %v367 = vand.u32 %v366, 4294901760
  %368 = vmatmul.mubr.f32.gmra.mrb[0].mxu0 %v367
  %v369 = vpop.f32.mrb[0].mxu0
  %v370 = vadd.f32 0.0, %v369
  %v371 = vpop.f32.mrb[0].mxu0
  %372 = vmatprep.mubr.f32.mxu0 0.0
  %v373 = vand.u32 %v97, 4294901760
  %v374 = vsub.f32 %v97, %v373
  %v375 = vand.u32 %v374, 4294901760
  %v376 = vsub.f32 %v374, %v375
  %v377 = vand.u32 %v376, 4294901760
  %378 = vmatmul.mubr.f32.gmra.mrb[0].mxu0 %v377
  %v379 = vpop.f32.mrb[0].mxu0
  %v380 = vadd.f32 0.0, %v379
  %v381 = vpop.f32.mrb[0].mxu0
  %382 = vmatprep.mubr.f32.mxu0 0.0
  %v383 = vand.u32 %v100, 4294901760
  %v384 = vsub.f32 %v100, %v383
  %v385 = vand.u32 %v384, 4294901760
  %v386 = vsub.f32 %v384, %v385
  %v387 = vand.u32 %v386, 4294901760
  %388 = vmatmul.mubr.f32.gmra.mrb[0].mxu0 %v387
  %v389 = vpop.f32.mrb[0].mxu0
  %v390 = vadd.f32 0.0, %v389
  %v391 = vpop.f32.mrb[0].mxu0
  %392 = vmatprep.mubr.f32.mxu0 0.0
  %v393 = vand.u32 %v103, 4294901760
  %v394 = vsub.f32 %v103, %v393
  %v395 = vand.u32 %v394, 4294901760
  %v396 = vsub.f32 %v394, %v395
  %v397 = vand.u32 %v396, 4294901760
  %398 = vmatmul.mubr.f32.gmra.mrb[0].mxu0 %v397
  %v399 = vpop.f32.mrb[0].mxu0
  %v400 = vadd.f32 0.0, %v399
  %v401 = vpop.f32.mrb[0].mxu0
  %402 = vmatprep.mubr.f32.mxu0 0.0
  %v403 = vand.u32 %v106, 4294901760
  %v404 = vsub.f32 %v106, %v403
  %v405 = vand.u32 %v404, 4294901760
  %v406 = vsub.f32 %v404, %v405
  %v407 = vand.u32 %v406, 4294901760
  %408 = vmatmul.mubr.f32.gmra.mrb[0].mxu0 %v407
  %v409 = vpop.f32.mrb[0].mxu0
  %v410 = vadd.f32 0.0, %v409
  %v411 = vpop.f32.mrb[0].mxu0
  %412 = vmatprep.mubr.f32.mxu0 0.0
  %v413 = vand.u32 %v109, 4294901760
  %v414 = vsub.f32 %v109, %v413
  %v415 = vand.u32 %v414, 4294901760
  %v416 = vsub.f32 %v414, %v415
  %v417 = vand.u32 %v416, 4294901760
  %418 = vmatmul.mubr.f32.gmra.mrb[0].mxu0 %v417
  %v419 = vpop.f32.mrb[0].mxu0
  %v420 = vadd.f32 0.0, %v419
  %v421 = vpop.f32.mrb[0].mxu0
  %422 = vmatprep.mubr.f32.mxu0 0.0
  %v423 = vand.u32 %v112, 4294901760
  %v424 = vsub.f32 %v112, %v423
  %v425 = vand.u32 %v424, 4294901760
  %v426 = vsub.f32 %v424, %v425
  %v427 = vand.u32 %v426, 4294901760
  %428 = vmatmul.mubr.f32.gmra.mrb[0].mxu0 %v427
  %v429 = vpop.f32.mrb[0].mxu0
  %v430 = vadd.f32 0.0, %v429
  %v431 = vpop.f32.mrb[0].mxu0
  %432 = vmatprep.mubr.f32.mxu0 0.0
  %v433 = vand.u32 %v115, 4294901760
  %v434 = vsub.f32 %v115, %v433
  %v435 = vand.u32 %v434, 4294901760
  %v436 = vsub.f32 %v434, %v435
  %v437 = vand.u32 %v436, 4294901760
  %438 = vmatmul.mubr.f32.gmra.mrb[0].mxu0 %v437
  %v439 = vpop.f32.mrb[0].mxu0
  %v440 = vadd.f32 0.0, %v439
  %v441 = vpop.f32.mrb[0].mxu0
  %442 = vmatprep.mubr.f32.mxu0 0.0
  %v443 = vand.u32 %v118, 4294901760
  %v444 = vsub.f32 %v118, %v443
  %v445 = vand.u32 %v444, 4294901760
  %v446 = vsub.f32 %v444, %v445
  %v447 = vand.u32 %v446, 4294901760
  %448 = vmatmul.mubr.f32.gmra.mrb[0].mxu0 %v447
  %v449 = vpop.f32.mrb[0].mxu0
  %v450 = vadd.f32 0.0, %v449
  %v451 = vpop.f32.mrb[0].mxu0
  %452 = vmatprep.mubr.f32.mxu0 0.0
  %v453 = vand.u32 %v121, 4294901760
  %v454 = vsub.f32 %v121, %v453
  %v455 = vand.u32 %v454, 4294901760
  %v456 = vsub.f32 %v454, %v455
  %v457 = vand.u32 %v456, 4294901760
  %458 = vmatmul.mubr.f32.gmra.mrb[0].mxu0 %v457
  %v459 = vpop.f32.mrb[0].mxu0
  %v460 = vadd.f32 0.0, %v459
  %v461 = vpop.f32.mrb[0].mxu0
  %462 = vmatprep.mubr.f32.mxu0 0.0
  %v463 = vand.u32 %v124, 4294901760
  %v464 = vsub.f32 %v124, %v463
  %v465 = vand.u32 %v464, 4294901760
  %v466 = vsub.f32 %v464, %v465
  %v467 = vand.u32 %v466, 4294901760
  %468 = vmatmul.mubr.f32.gmra.mrb[0].mxu0 %v467
  %v469 = vpop.f32.mrb[0].mxu0
  %v470 = vadd.f32 0.0, %v469
  %v471 = vpop.f32.mrb[0].mxu0
  %472 = vmatprep.mubr.f32.mxu0 0.0
  %v473 = vand.u32 %v127, 4294901760
  %v474 = vsub.f32 %v127, %v473
  %v475 = vand.u32 %v474, 4294901760
  %v476 = vsub.f32 %v474, %v475
  %v477 = vand.u32 %v476, 4294901760
  %478 = vmatmul.mubr.f32.gmra.mrb[0].mxu0 %v477
  %v479 = vpop.f32.mrb[0].mxu0
  %v480 = vadd.f32 0.0, %v479
  %v481 = vpop.f32.mrb[0].mxu0
  %482 = vmatprep.mubr.f32.mxu0 0.0
  %v483 = vand.u32 %v130, 4294901760
  %v484 = vsub.f32 %v130, %v483
  %v485 = vand.u32 %v484, 4294901760
  %v486 = vsub.f32 %v484, %v485
  %v487 = vand.u32 %v486, 4294901760
  %488 = vmatmul.mubr.f32.gmra.mrb[0].mxu0 %v487
  %v489 = vpop.f32.mrb[0].mxu0
  %v490 = vadd.f32 0.0, %v489
  %v491 = vpop.f32.mrb[0].mxu0
  %492 = vmatprep.mubr.f32.mxu0 0.0
  %v493 = vand.u32 %v133, 4294901760
  %v494 = vsub.f32 %v133, %v493
  %v495 = vand.u32 %v494, 4294901760
  %v496 = vsub.f32 %v494, %v495
  %v497 = vand.u32 %v496, 4294901760
  %498 = vmatmul.mubr.f32.gmra.mrb[0].mxu0 %v497
  %v499 = vpop.f32.mrb[0].mxu0
  %v500 = vadd.f32 0.0, %v499
  %v501 = vpop.f32.mrb[0].mxu0
  %502 = vmatprep.mubr.f32.mxu0 0.0
  %v503 = vand.u32 %v136, 4294901760
  %v504 = vsub.f32 %v136, %v503
  %v505 = vand.u32 %v504, 4294901760
  %v506 = vsub.f32 %v504, %v505
  %v507 = vand.u32 %v506, 4294901760
  %508 = vmatmul.mubr.f32.gmra.mrb[0].mxu0 %v507
  %v509 = vpop.f32.mrb[0].mxu0
  %v510 = vadd.f32 0.0, %v509
  %v511 = vpop.f32.mrb[0].mxu0
  %512 = vmatprep.mubr.f32.mxu0 0.0
  %v513 = vand.u32 %v139, 4294901760
  %v514 = vsub.f32 %v139, %v513
  %v515 = vand.u32 %v514, 4294901760
  %v516 = vsub.f32 %v514, %v515
  %v517 = vand.u32 %v516, 4294901760
  %518 = vmatmul.mubr.f32.gmra.mrb[0].mxu0 %v517
  %v519 = vpop.f32.mrb[0].mxu0
  %v520 = vadd.f32 0.0, %v519
  %v521 = vpop.f32.mrb[0].mxu0
  %522 = vmatprep.mubr.f32.mxu0 0.0
  %v523 = vand.u32 %v142, 4294901760
  %v524 = vsub.f32 %v142, %v523
  %v525 = vand.u32 %v524, 4294901760
  %v526 = vsub.f32 %v524, %v525
  %v527 = vand.u32 %v526, 4294901760
  %528 = vmatmul.mubr.f32.gmra.mrb[0].mxu0 %v527
  %v529 = vpop.f32.mrb[0].mxu0
  %v530 = vadd.f32 0.0, %v529
  %v531 = vpop.f32.mrb[0].mxu0
  %532 = vmatprep.mubr.f32.mxu0 0.0
  %v533 = vand.u32 %v145, 4294901760
  %v534 = vsub.f32 %v145, %v533
  %v535 = vand.u32 %v534, 4294901760
  %v536 = vsub.f32 %v534, %v535
  %v537 = vand.u32 %v536, 4294901760
  %538 = vmatmul.mubr.f32.gmra.mrb[0].mxu0 %v537
  %v539 = vpop.f32.mrb[0].mxu0
  %v540 = vadd.f32 0.0, %v539
  %v541 = vpop.f32.mrb[0].mxu0
  %542 = vmatprep.mubr.f32.mxu0 0.0
  %v543 = vand.u32 %v148, 4294901760
  %v544 = vsub.f32 %v148, %v543
  %v545 = vand.u32 %v544, 4294901760
  %v546 = vsub.f32 %v544, %v545
  %v547 = vand.u32 %v546, 4294901760
  %548 = vmatmul.mubr.f32.gmra.mrb[0].mxu0 %v547
  %v549 = vpop.f32.mrb[0].mxu0
  %v550 = vadd.f32 0.0, %v549
  %v551 = vpop.f32.mrb[0].mxu0
  %552 = vmatprep.mubr.f32.mxu0 0.0
  %v553 = vand.u32 %v151, 4294901760
  %v554 = vsub.f32 %v151, %v553
  %v555 = vand.u32 %v554, 4294901760
  %v556 = vsub.f32 %v554, %v555
  %v557 = vand.u32 %v556, 4294901760
  %558 = vmatmul.mubr.f32.gmra.mrb[0].mxu0 %v557
  %v559 = vpop.f32.mrb[0].mxu0
  %v560 = vadd.f32 0.0, %v559
  %v561 = vpop.f32.mrb[0].mxu0
  %562 = vmatprep.mubr.f32.mxu0 0.0
  %v563 = vand.u32 %v154, 4294901760
  %v564 = vsub.f32 %v154, %v563
  %v565 = vand.u32 %v564, 4294901760
  %v566 = vsub.f32 %v564, %v565
  %v567 = vand.u32 %v566, 4294901760
  %568 = vmatmul.mubr.f32.gmra.mrb[0].mxu0 %v567
  %v569 = vpop.f32.mrb[0].mxu0
  %v570 = vadd.f32 0.0, %v569
  %v571 = vpop.f32.mrb[0].mxu0
  %572 = vmatprep.mubr.f32.mxu0 0.0
  %v573 = vand.u32 %v157, 4294901760
  %v574 = vsub.f32 %v157, %v573
  %v575 = vand.u32 %v574, 4294901760
  %v576 = vsub.f32 %v574, %v575
  %v577 = vand.u32 %v576, 4294901760
  %578 = vmatmul.mubr.f32.gmra.mrb[0].mxu0 %v577
  %v579 = vpop.f32.mrb[0].mxu0
  %v580 = vadd.f32 0.0, %v579
  %v581 = vpop.f32.mrb[0].mxu0
  %582 = vmatprep.mubr.f32.mxu0 0.0
  %v583 = vand.u32 %v160, 4294901760
  %v584 = vsub.f32 %v160, %v583
  %v585 = vand.u32 %v584, 4294901760
  %v586 = vsub.f32 %v584, %v585
  %v587 = vand.u32 %v586, 4294901760
  %588 = vmatmul.mubr.f32.gmra.mrb[0].mxu0 %v587
  %v589 = vpop.f32.mrb[0].mxu0
  %v590 = vadd.f32 0.0, %v589
  %v591 = vpop.f32.mrb[0].mxu0
  %592 = vmatprep.mubr.f32.mxu0 0.0
  %v593 = vand.u32 %v163, 4294901760
  %v594 = vsub.f32 %v163, %v593
  %v595 = vand.u32 %v594, 4294901760
  %v596 = vsub.f32 %v594, %v595
  %v597 = vand.u32 %v596, 4294901760
  %598 = vmatmul.mubr.f32.gmra.mrb[0].mxu0 %v597
  %v599 = vpop.f32.mrb[0].mxu0
  %v600 = vadd.f32 0.0, %v599
  %v601 = vpop.f32.mrb[0].mxu0
  %602 = vmatprep.mubr.f32.mxu0 0.0
  %v603 = vand.u32 %v166, 4294901760
  %v604 = vsub.f32 %v166, %v603
  %v605 = vand.u32 %v604, 4294901760
  %v606 = vsub.f32 %v604, %v605
  %v607 = vand.u32 %v606, 4294901760
  %608 = vmatmul.mubr.f32.gmra.mrb[0].mxu0 %v607
  %v609 = vpop.f32.mrb[0].mxu0
  %v610 = vadd.f32 0.0, %v609
  %v611 = vpop.f32.mrb[0].mxu0
  %612 = vmatprep.mubr.f32.mxu0 0.0
  %v613 = vand.u32 %v169, 4294901760
  %v614 = vsub.f32 %v169, %v613
  %v615 = vand.u32 %v614, 4294901760
  %v616 = vsub.f32 %v614, %v615
  %v617 = vand.u32 %v616, 4294901760
  %618 = vmatmul.mubr.f32.gmra.mrb[0].mxu0 %v617
  %v619 = vpop.f32.mrb[0].mxu0
  %v620 = vadd.f32 0.0, %v619
  %v621 = vpop.f32.mrb[0].mxu0
  %622 = vmatprep.mubr.f32.mxu0 0.0
  %v623 = vand.u32 %v172, 4294901760
  %v624 = vsub.f32 %v172, %v623
  %v625 = vand.u32 %v624, 4294901760
  %v626 = vsub.f32 %v624, %v625
  %v627 = vand.u32 %v626, 4294901760
  %628 = vmatmul.mubr.f32.gmra.mrb[0].mxu0 %v627
  %v629 = vpop.f32.mrb[0].mxu0
  %v630 = vadd.f32 0.0, %v629
  %v631 = vpop.f32.mrb[0].mxu0
  %632 = vmatprep.mubr.f32.mxu0 0.0
  %v633 = vand.u32 %v175, 4294901760
  %v634 = vsub.f32 %v175, %v633
  %v635 = vand.u32 %v634, 4294901760
  %v636 = vsub.f32 %v634, %v635
  %v637 = vand.u32 %v636, 4294901760
  %638 = vmatmul.mubr.f32.gmra.mrb[0].mxu0 %v637
  %v639 = vpop.f32.mrb[0].mxu0
  %v640 = vadd.f32 0.0, %v639
  %v641 = vpop.f32.mrb[0].mxu0
  %642 = vmatprep.mubr.f32.mxu0 0.0
  %v643 = vand.u32 %v178, 4294901760
  %v644 = vsub.f32 %v178, %v643
  %v645 = vand.u32 %v644, 4294901760
  %v646 = vsub.f32 %v644, %v645
  %v647 = vand.u32 %v646, 4294901760
  %648 = vmatmul.mubr.f32.gmra.mrb[0].mxu0 %v647
  %v649 = vpop.f32.mrb[0].mxu0
  %v650 = vadd.f32 0.0, %v649
  %v651 = vpop.f32.mrb[0].mxu0
  %652 = vmatprep.mubr.f32.mxu0 0.0
  %v653 = vand.u32 %v181, 4294901760
  %v654 = vsub.f32 %v181, %v653
  %v655 = vand.u32 %v654, 4294901760
  %v656 = vsub.f32 %v654, %v655
  %v657 = vand.u32 %v656, 4294901760
  %658 = vmatmul.mubr.f32.gmra.mrb[0].mxu0 %v657
  %v659 = vpop.f32.mrb[0].mxu0
  %v660 = vadd.f32 0.0, %v659
  %v661 = vpop.f32.mrb[0].mxu0
  %662 = vmatprep.mubr.f32.mxu0 0.0
  %v663 = vand.u32 %v184, 4294901760
  %v664 = vsub.f32 %v184, %v663
  %v665 = vand.u32 %v664, 4294901760
  %v666 = vsub.f32 %v664, %v665
  %v667 = vand.u32 %v666, 4294901760
  %668 = vmatmul.mubr.f32.gmra.mrb[0].mxu0 %v667
  %v669 = vpop.f32.mrb[0].mxu0
  %v670 = vadd.f32 0.0, %v669
  %v671 = vpop.f32.mrb[0].mxu0
  %672 = vmatprep.mubr.f32.mxu0 0.0
  %v673 = vand.u32 %v187, 4294901760
  %v674 = vsub.f32 %v187, %v673
  %v675 = vand.u32 %v674, 4294901760
  %v676 = vsub.f32 %v674, %v675
  %v677 = vand.u32 %v676, 4294901760
  %678 = vmatmul.mubr.f32.gmra.mrb[0].mxu0 %v677
  %v679 = vpop.f32.mrb[0].mxu0
  %v680 = vadd.f32 0.0, %v679
  %v681 = vpop.f32.mrb[0].mxu0
  %682 = vmatprep.mubr.f32.mxu0 0.0
  %v683 = vand.u32 %v190, 4294901760
  %v684 = vsub.f32 %v190, %v683
  %v685 = vand.u32 %v684, 4294901760
  %v686 = vsub.f32 %v684, %v685
  %v687 = vand.u32 %v686, 4294901760
  %688 = vmatmul.mubr.f32.gmra.mrb[0].mxu0 %v687
  %v689 = vpop.f32.mrb[0].mxu0
  %v690 = vadd.f32 0.0, %v689
  %v691 = vpop.f32.mrb[0].mxu0
  %692 = vmatprep.mubr.f32.mxu0 0.0
  %v693 = vand.u32 %v193, 4294901760
  %v694 = vsub.f32 %v193, %v693
  %v695 = vand.u32 %v694, 4294901760
  %v696 = vsub.f32 %v694, %v695
  %v697 = vand.u32 %v696, 4294901760
  %698 = vmatmul.mubr.f32.gmra.mrb[0].mxu0 %v697
  %v699 = vpop.f32.mrb[0].mxu0
  %v700 = vadd.f32 0.0, %v699
  %v701 = vpop.f32.mrb[0].mxu0
  %702 = vmatprep.mubr.f32.mxu0 0.0
  %v703 = vand.u32 %v196, 4294901760
  %v704 = vsub.f32 %v196, %v703
  %v705 = vand.u32 %v704, 4294901760
  %v706 = vsub.f32 %v704, %v705
  %v707 = vand.u32 %v706, 4294901760
  %708 = vmatmul.mubr.f32.gmra.mrb[0].mxu0 %v707
  %v709 = vpop.f32.mrb[0].mxu0
  %v710 = vadd.f32 0.0, %v709
  %v711 = vpop.f32.mrb[0].mxu0
  %712 = vmatprep.mubr.f32.mxu0 0.0
  %v713 = vand.u32 %v199, 4294901760
  %v714 = vsub.f32 %v199, %v713
  %v715 = vand.u32 %v714, 4294901760
  %v716 = vsub.f32 %v714, %v715
  %v717 = vand.u32 %v716, 4294901760
  %718 = vmatmul.mubr.f32.gmra.mrb[0].mxu0 %v717
  %v719 = vpop.f32.mrb[0].mxu0
  %v720 = vadd.f32 0.0, %v719
  %v721 = vpop.f32.mrb[0].mxu0
  %722 = vmatprep.mubr.f32.mxu0 0.0
  %v723 = vand.u32 %v202, 4294901760
  %v724 = vsub.f32 %v202, %v723
  %v725 = vand.u32 %v724, 4294901760
  %v726 = vsub.f32 %v724, %v725
  %v727 = vand.u32 %v726, 4294901760
  %728 = vmatmul.mubr.f32.gmra.mrb[0].mxu0 %v727
  %v729 = vpop.f32.mrb[0].mxu0
  %v730 = vadd.f32 0.0, %v729
  %v731 = vpop.f32.mrb[0].mxu0
  %732 = vmatprep.mubr.f32.mxu0 0.0
  %v733 = vand.u32 %v205, 4294901760
  %v734 = vsub.f32 %v205, %v733
  %v735 = vand.u32 %v734, 4294901760
  %v736 = vsub.f32 %v734, %v735
  %v737 = vand.u32 %v736, 4294901760
  %738 = vmatmul.mubr.f32.gmra.mrb[0].mxu0 %v737
  %v739 = vpop.f32.mrb[0].mxu0
  %v740 = vadd.f32 0.0, %v739
  %v741 = vpop.f32.mrb[0].mxu0
  %742 = vmatprep.mubr.f32.mxu0 0.0
  %v743 = vand.u32 %v208, 4294901760
  %v744 = vsub.f32 %v208, %v743
  %v745 = vand.u32 %v744, 4294901760
  %v746 = vsub.f32 %v744, %v745
  %v747 = vand.u32 %v746, 4294901760
  %748 = vmatmul.mubr.f32.gmra.mrb[0].mxu0 %v747
  %v749 = vpop.f32.mrb[0].mxu0
  %v750 = vadd.f32 0.0, %v749
  %v751 = vpop.f32.mrb[0].mxu0
  %752 = vmatprep.mubr.f32.mxu0 0.0
  %v753 = vand.u32 %v211, 4294901760
  %v754 = vsub.f32 %v211, %v753
  %v755 = vand.u32 %v754, 4294901760
  %v756 = vsub.f32 %v754, %v755
  %v757 = vand.u32 %v756, 4294901760
  %758 = vmatmul.mubr.f32.gmra.mrb[0].mxu0 %v757
  %v759 = vpop.f32.mrb[0].mxu0
  %v760 = vadd.f32 0.0, %v759
  %v761 = vpop.f32.mrb[0].mxu0
  %762 = vmatprep.mubr.f32.mxu0 0.0
  %v763 = vand.u32 %v214, 4294901760
  %v764 = vsub.f32 %v214, %v763
  %v765 = vand.u32 %v764, 4294901760
  %v766 = vsub.f32 %v764, %v765
  %v767 = vand.u32 %v766, 4294901760
  %768 = vmatmul.mubr.f32.gmra.mrb[0].mxu0 %v767
  %v769 = vpop.f32.mrb[0].mxu0
  %v770 = vadd.f32 0.0, %v769
  %v771 = vpop.f32.mrb[0].mxu0
  %772 = vmatprep.mubr.f32.mxu0 0.0
  %v773 = vand.u32 %v217, 4294901760
  %v774 = vsub.f32 %v217, %v773
  %v775 = vand.u32 %v774, 4294901760
  %v776 = vsub.f32 %v774, %v775
  %v777 = vand.u32 %v776, 4294901760
  %778 = vmatmul.mubr.f32.gmra.mrb[0].mxu0 %v777
  %v779 = vpop.f32.mrb[0].mxu0
  %v780 = vadd.f32 0.0, %v779
  %v781 = vpop.f32.mrb[0].mxu0
  %782 = vdwg.mxu0
  %783 = vmatprep.subr.mxu0 0.0
  %v784 = vand.u32 %v66, 4294901760
  %v785 = vsub.f32 %v66, %v784
  %v786 = vand.u32 %v785, 4294901760
  %v787 = vsub.f32 %v785, %v786
  %v788 = vand.u32 %v787, 4294901760
  %789 = vmatpush1.msra.mxu0 %v788
  %790 = vmatprep.subr.mxu0 0.0
  %v791 = vand.u32 %v67, 4294901760
  %v792 = vsub.f32 %v67, %v791
  %v793 = vand.u32 %v792, 4294901760
  %v794 = vsub.f32 %v792, %v793
  %v795 = vand.u32 %v794, 4294901760
  %796 = vmatpush1.msra.mxu0 %v795
  %797 = vmatprep.subr.mxu0 0.0
  %v798 = vand.u32 %v68, 4294901760
  %v799 = vsub.f32 %v68, %v798
  %v800 = vand.u32 %v799, 4294901760
  %v801 = vsub.f32 %v799, %v800
  %v802 = vand.u32 %v801, 4294901760
  %803 = vmatpush1.msra.mxu0 %v802
  %804 = vmatprep.subr.mxu0 0.0
  %v805 = vand.u32 %v69, 4294901760
  %v806 = vsub.f32 %v69, %v805
  %v807 = vand.u32 %v806, 4294901760
  %v808 = vsub.f32 %v806, %v807
  %v809 = vand.u32 %v808, 4294901760
  %810 = vmatpush1.msra.mxu0 %v809
  %811 = vmatprep.subr.mxu0 0.0
  %v812 = vand.u32 %v221, 4294901760
  %v813 = vsub.f32 %v221, %v812
  %v814 = vand.u32 %v813, 4294901760
  %v815 = vsub.f32 %v813, %v814
  %v816 = vand.u32 %v815, 4294901760
  %817 = vmatpush1.msra.mxu0 %v816
  %818 = vmatprep.subr.mxu0 0.0
  %819 = vmatpush1.msra.mxu0 0.0
  %820 = vmatprep.subr.mxu0 0.0
  %821 = vmatpush1.msra.mxu0 0.0
  %822 = vmatprep.subr.mxu0 0.0
  %823 = vmatpush1.msra.mxu0 0.0
  %824 = vmatprep.subr.mxu0 0.0
  %825 = vmatpush1.msra.mxu0 0.0
  %826 = vmatprep.subr.mxu0 0.0
  %827 = vmatpush1.msra.mxu0 0.0
  %828 = vmatprep.subr.mxu0 0.0
  %829 = vmatpush1.msra.mxu0 0.0
  %830 = vmatprep.subr.mxu0 0.0
  %831 = vmatpush1.msra.mxu0 0.0
  %832 = vmatprep.subr.mxu0 0.0
  %833 = vmatpush1.msra.mxu0 0.0
  %834 = vmatprep.subr.mxu0 0.0
  %835 = vmatpush1.msra.mxu0 0.0
  %836 = vmatprep.subr.mxu0 0.0
  %837 = vmatpush1.msra.mxu0 0.0
  %838 = vmatprep.subr.mxu0 0.0
  %839 = vmatpush1.msra.mxu0 0.0
  %840 = vmatprep.subr.mxu0 0.0
  %841 = vmatpush1.msra.mxu0 0.0
  %842 = vmatprep.subr.mxu0 0.0
  %843 = vmatpush1.msra.mxu0 0.0
  %844 = vmatprep.subr.mxu0 0.0
  %845 = vmatpush1.msra.mxu0 0.0
  %846 = vmatprep.subr.mxu0 0.0
  %847 = vmatpush1.msra.mxu0 0.0
  %848 = vmatprep.subr.mxu0 0.0
  %849 = vmatpush1.msra.mxu0 0.0
  %850 = vmatprep.subr.mxu0 0.0
  %851 = vmatpush1.msra.mxu0 0.0
  %852 = vmatprep.subr.mxu0 0.0
  %853 = vmatpush1.msra.mxu0 0.0
  %854 = vmatprep.subr.mxu0 0.0
  %855 = vmatpush1.msra.mxu0 0.0
  %856 = vmatprep.subr.mxu0 0.0
  %857 = vmatpush1.msra.mxu0 0.0
  %858 = vmatprep.subr.mxu0 0.0
  %859 = vmatpush1.msra.mxu0 0.0
  %860 = vmatprep.subr.mxu0 0.0
  %861 = vmatpush1.msra.mxu0 0.0
  %862 = vmatprep.subr.mxu0 0.0
  %863 = vmatpush1.msra.mxu0 0.0
  %864 = vmatprep.subr.mxu0 0.0
  %865 = vmatpush1.msra.mxu0 0.0
  %866 = vmatprep.subr.mxu0 0.0
  %867 = vmatpush1.msra.mxu0 0.0
  %868 = vmatprep.subr.mxu0 0.0
  %869 = vmatpush1.msra.mxu0 0.0
  %870 = vmatprep.subr.mxu0 0.0
  %871 = vmatpush1.msra.mxu0 0.0
  %872 = vmatprep.mubr.f32.mxu0 0.0
  %v873 = vand.u32 %v73, 4294901760
  %874 = vmatmul.mubr.f32.gmra.mrb[0].mxu0 %v873
  %v875 = vpop.f32.mrb[0].mxu0
  %v876 = vadd.f32 %v300, %v875
  %v877 = vpop.f32.mrb[0].mxu0
  %878 = vmatprep.mubr.f32.mxu0 0.0
  %v879 = vand.u32 %v76, 4294901760
  %880 = vmatmul.mubr.f32.gmra.mrb[0].mxu0 %v879
  %v881 = vpop.f32.mrb[0].mxu0
  %v882 = vadd.f32 %v310, %v881
  %v883 = vpop.f32.mrb[0].mxu0
  %884 = vmatprep.mubr.f32.mxu0 0.0
  %v885 = vand.u32 %v79, 4294901760
  %886 = vmatmul.mubr.f32.gmra.mrb[0].mxu0 %v885
  %v887 = vpop.f32.mrb[0].mxu0
  %v888 = vadd.f32 %v320, %v887
  %v889 = vpop.f32.mrb[0].mxu0
  %890 = vmatprep.mubr.f32.mxu0 0.0
  %v891 = vand.u32 %v82, 4294901760
  %892 = vmatmul.mubr.f32.gmra.mrb[0].mxu0 %v891
  %v893 = vpop.f32.mrb[0].mxu0
  %v894 = vadd.f32 %v330, %v893
  %v895 = vpop.f32.mrb[0].mxu0
  %896 = vmatprep.mubr.f32.mxu0 0.0
  %v897 = vand.u32 %v85, 4294901760
  %898 = vmatmul.mubr.f32.gmra.mrb[0].mxu0 %v897
  %v899 = vpop.f32.mrb[0].mxu0
  %v900 = vadd.f32 %v340, %v899
  %v901 = vpop.f32.mrb[0].mxu0
  %902 = vmatprep.mubr.f32.mxu0 0.0
  %v903 = vand.u32 %v88, 4294901760
  %904 = vmatmul.mubr.f32.gmra.mrb[0].mxu0 %v903
  %v905 = vpop.f32.mrb[0].mxu0
  %v906 = vadd.f32 %v350, %v905
  %v907 = vpop.f32.mrb[0].mxu0
  %908 = vmatprep.mubr.f32.mxu0 0.0
  %v909 = vand.u32 %v91, 4294901760
  %910 = vmatmul.mubr.f32.gmra.mrb[0].mxu0 %v909
  %v911 = vpop.f32.mrb[0].mxu0
  %v912 = vadd.f32 %v360, %v911
  %v913 = vpop.f32.mrb[0].mxu0
  %914 = vmatprep.mubr.f32.mxu0 0.0
  %v915 = vand.u32 %v94, 4294901760
  %916 = vmatmul.mubr.f32.gmra.mrb[0].mxu0 %v915
  %v917 = vpop.f32.mrb[0].mxu0
  %v918 = vadd.f32 %v370, %v917
  %v919 = vpop.f32.mrb[0].mxu0
  %920 = vmatprep.mubr.f32.mxu0 0.0
  %v921 = vand.u32 %v97, 4294901760
  %922 = vmatmul.mubr.f32.gmra.mrb[0].mxu0 %v921
  %v923 = vpop.f32.mrb[0].mxu0
  %v924 = vadd.f32 %v380, %v923
  %v925 = vpop.f32.mrb[0].mxu0
  %926 = vmatprep.mubr.f32.mxu0 0.0
  %v927 = vand.u32 %v100, 4294901760
  %928 = vmatmul.mubr.f32.gmra.mrb[0].mxu0 %v927
  %v929 = vpop.f32.mrb[0].mxu0
  %v930 = vadd.f32 %v390, %v929
  %v931 = vpop.f32.mrb[0].mxu0
  %932 = vmatprep.mubr.f32.mxu0 0.0
  %v933 = vand.u32 %v103, 4294901760
  %934 = vmatmul.mubr.f32.gmra.mrb[0].mxu0 %v933
  %v935 = vpop.f32.mrb[0].mxu0
  %v936 = vadd.f32 %v400, %v935
  %v937 = vpop.f32.mrb[0].mxu0
  %938 = vmatprep.mubr.f32.mxu0 0.0
  %v939 = vand.u32 %v106, 4294901760
  %940 = vmatmul.mubr.f32.gmra.mrb[0].mxu0 %v939
  %v941 = vpop.f32.mrb[0].mxu0
  %v942 = vadd.f32 %v410, %v941
  %v943 = vpop.f32.mrb[0].mxu0
  %944 = vmatprep.mubr.f32.mxu0 0.0
  %v945 = vand.u32 %v109, 4294901760
  %946 = vmatmul.mubr.f32.gmra.mrb[0].mxu0 %v945
  %v947 = vpop.f32.mrb[0].mxu0
  %v948 = vadd.f32 %v420, %v947
  %v949 = vpop.f32.mrb[0].mxu0
  %950 = vmatprep.mubr.f32.mxu0 0.0
  %v951 = vand.u32 %v112, 4294901760
  %952 = vmatmul.mubr.f32.gmra.mrb[0].mxu0 %v951
  %v953 = vpop.f32.mrb[0].mxu0
  %v954 = vadd.f32 %v430, %v953
  %v955 = vpop.f32.mrb[0].mxu0
  %956 = vmatprep.mubr.f32.mxu0 0.0
  %v957 = vand.u32 %v115, 4294901760
  %958 = vmatmul.mubr.f32.gmra.mrb[0].mxu0 %v957
  %v959 = vpop.f32.mrb[0].mxu0
  %v960 = vadd.f32 %v440, %v959
  %v961 = vpop.f32.mrb[0].mxu0
  %962 = vmatprep.mubr.f32.mxu0 0.0
  %v963 = vand.u32 %v118, 4294901760
  %964 = vmatmul.mubr.f32.gmra.mrb[0].mxu0 %v963
  %v965 = vpop.f32.mrb[0].mxu0
  %v966 = vadd.f32 %v450, %v965
  %v967 = vpop.f32.mrb[0].mxu0
  %968 = vmatprep.mubr.f32.mxu0 0.0
  %v969 = vand.u32 %v121, 4294901760
  %970 = vmatmul.mubr.f32.gmra.mrb[0].mxu0 %v969
  %v971 = vpop.f32.mrb[0].mxu0
  %v972 = vadd.f32 %v460, %v971
  %v973 = vpop.f32.mrb[0].mxu0
  %974 = vmatprep.mubr.f32.mxu0 0.0
  %v975 = vand.u32 %v124, 4294901760
  %976 = vmatmul.mubr.f32.gmra.mrb[0].mxu0 %v975
  %v977 = vpop.f32.mrb[0].mxu0
  %v978 = vadd.f32 %v470, %v977
  %v979 = vpop.f32.mrb[0].mxu0
  %980 = vmatprep.mubr.f32.mxu0 0.0
  %v981 = vand.u32 %v127, 4294901760
  %982 = vmatmul.mubr.f32.gmra.mrb[0].mxu0 %v981
  %v983 = vpop.f32.mrb[0].mxu0
  %v984 = vadd.f32 %v480, %v983
  %v985 = vpop.f32.mrb[0].mxu0
  %986 = vmatprep.mubr.f32.mxu0 0.0
  %v987 = vand.u32 %v130, 4294901760
  %988 = vmatmul.mubr.f32.gmra.mrb[0].mxu0 %v987
  %v989 = vpop.f32.mrb[0].mxu0
  %v990 = vadd.f32 %v490, %v989
  %v991 = vpop.f32.mrb[0].mxu0
  %992 = vmatprep.mubr.f32.mxu0 0.0
  %v993 = vand.u32 %v133, 4294901760
  %994 = vmatmul.mubr.f32.gmra.mrb[0].mxu0 %v993
  %v995 = vpop.f32.mrb[0].mxu0
  %v996 = vadd.f32 %v500, %v995
  %v997 = vpop.f32.mrb[0].mxu0
  %998 = vmatprep.mubr.f32.mxu0 0.0
  %v999 = vand.u32 %v136, 4294901760
  %1000 = vmatmul.mubr.f32.gmra.mrb[0].mxu0 %v999
  %v1001 = vpop.f32.mrb[0].mxu0
  %v1002 = vadd.f32 %v510, %v1001
  %v1003 = vpop.f32.mrb[0].mxu0
  %1004 = vmatprep.mubr.f32.mxu0 0.0
  %v1005 = vand.u32 %v139, 4294901760
  %1006 = vmatmul.mubr.f32.gmra.mrb[0].mxu0 %v1005
  %v1007 = vpop.f32.mrb[0].mxu0
  %v1008 = vadd.f32 %v520, %v1007
  %v1009 = vpop.f32.mrb[0].mxu0
  %1010 = vmatprep.mubr.f32.mxu0 0.0
  %v1011 = vand.u32 %v142, 4294901760
  %1012 = vmatmul.mubr.f32.gmra.mrb[0].mxu0 %v1011
  %v1013 = vpop.f32.mrb[0].mxu0
  %v1014 = vadd.f32 %v530, %v1013
  %v1015 = vpop.f32.mrb[0].mxu0
  %1016 = vmatprep.mubr.f32.mxu0 0.0
  %v1017 = vand.u32 %v145, 4294901760
  %1018 = vmatmul.mubr.f32.gmra.mrb[0].mxu0 %v1017
  %v1019 = vpop.f32.mrb[0].mxu0
  %v1020 = vadd.f32 %v540, %v1019
  %v1021 = vpop.f32.mrb[0].mxu0
  %1022 = vmatprep.mubr.f32.mxu0 0.0
  %v1023 = vand.u32 %v148, 4294901760
  %1024 = vmatmul.mubr.f32.gmra.mrb[0].mxu0 %v1023
  %v1025 = vpop.f32.mrb[0].mxu0
  %v1026 = vadd.f32 %v550, %v1025
  %v1027 = vpop.f32.mrb[0].mxu0
  %1028 = vmatprep.mubr.f32.mxu0 0.0
  %v1029 = vand.u32 %v151, 4294901760
  %1030 = vmatmul.mubr.f32.gmra.mrb[0].mxu0 %v1029
  %v1031 = vpop.f32.mrb[0].mxu0
  %v1032 = vadd.f32 %v560, %v1031
  %v1033 = vpop.f32.mrb[0].mxu0
  %1034 = vmatprep.mubr.f32.mxu0 0.0
  %v1035 = vand.u32 %v154, 4294901760
  %1036 = vmatmul.mubr.f32.gmra.mrb[0].mxu0 %v1035
  %v1037 = vpop.f32.mrb[0].mxu0
  %v1038 = vadd.f32 %v570, %v1037
  %v1039 = vpop.f32.mrb[0].mxu0
  %1040 = vmatprep.mubr.f32.mxu0 0.0
  %v1041 = vand.u32 %v157, 4294901760
  %1042 = vmatmul.mubr.f32.gmra.mrb[0].mxu0 %v1041
  %v1043 = vpop.f32.mrb[0].mxu0
  %v1044 = vadd.f32 %v580, %v1043
  %v1045 = vpop.f32.mrb[0].mxu0
  %1046 = vmatprep.mubr.f32.mxu0 0.0
  %v1047 = vand.u32 %v160, 4294901760
  %1048 = vmatmul.mubr.f32.gmra.mrb[0].mxu0 %v1047
  %v1049 = vpop.f32.mrb[0].mxu0
  %v1050 = vadd.f32 %v590, %v1049
  %v1051 = vpop.f32.mrb[0].mxu0
  %1052 = vmatprep.mubr.f32.mxu0 0.0
  %v1053 = vand.u32 %v163, 4294901760
  %1054 = vmatmul.mubr.f32.gmra.mrb[0].mxu0 %v1053
  %v1055 = vpop.f32.mrb[0].mxu0
  %v1056 = vadd.f32 %v600, %v1055
  %v1057 = vpop.f32.mrb[0].mxu0
  %1058 = vmatprep.mubr.f32.mxu0 0.0
  %v1059 = vand.u32 %v166, 4294901760
  %1060 = vmatmul.mubr.f32.gmra.mrb[0].mxu0 %v1059
  %v1061 = vpop.f32.mrb[0].mxu0
  %v1062 = vadd.f32 %v610, %v1061
  %v1063 = vpop.f32.mrb[0].mxu0
  %1064 = vmatprep.mubr.f32.mxu0 0.0
  %v1065 = vand.u32 %v169, 4294901760
  %1066 = vmatmul.mubr.f32.gmra.mrb[0].mxu0 %v1065
  %v1067 = vpop.f32.mrb[0].mxu0
  %v1068 = vadd.f32 %v620, %v1067
  %v1069 = vpop.f32.mrb[0].mxu0
  %1070 = vmatprep.mubr.f32.mxu0 0.0
  %v1071 = vand.u32 %v172, 4294901760
  %1072 = vmatmul.mubr.f32.gmra.mrb[0].mxu0 %v1071
  %v1073 = vpop.f32.mrb[0].mxu0
  %v1074 = vadd.f32 %v630, %v1073
  %v1075 = vpop.f32.mrb[0].mxu0
  %1076 = vmatprep.mubr.f32.mxu0 0.0
  %v1077 = vand.u32 %v175, 4294901760
  %1078 = vmatmul.mubr.f32.gmra.mrb[0].mxu0 %v1077
  %v1079 = vpop.f32.mrb[0].mxu0
  %v1080 = vadd.f32 %v640, %v1079
  %v1081 = vpop.f32.mrb[0].mxu0
  %1082 = vmatprep.mubr.f32.mxu0 0.0
  %v1083 = vand.u32 %v178, 4294901760
  %1084 = vmatmul.mubr.f32.gmra.mrb[0].mxu0 %v1083
  %v1085 = vpop.f32.mrb[0].mxu0
  %v1086 = vadd.f32 %v650, %v1085
  %v1087 = vpop.f32.mrb[0].mxu0
  %1088 = vmatprep.mubr.f32.mxu0 0.0
  %v1089 = vand.u32 %v181, 4294901760
  %1090 = vmatmul.mubr.f32.gmra.mrb[0].mxu0 %v1089
  %v1091 = vpop.f32.mrb[0].mxu0
  %v1092 = vadd.f32 %v660, %v1091
  %v1093 = vpop.f32.mrb[0].mxu0
  %1094 = vmatprep.mubr.f32.mxu0 0.0
  %v1095 = vand.u32 %v184, 4294901760
  %1096 = vmatmul.mubr.f32.gmra.mrb[0].mxu0 %v1095
  %v1097 = vpop.f32.mrb[0].mxu0
  %v1098 = vadd.f32 %v670, %v1097
  %v1099 = vpop.f32.mrb[0].mxu0
  %1100 = vmatprep.mubr.f32.mxu0 0.0
  %v1101 = vand.u32 %v187, 4294901760
  %1102 = vmatmul.mubr.f32.gmra.mrb[0].mxu0 %v1101
  %v1103 = vpop.f32.mrb[0].mxu0
  %v1104 = vadd.f32 %v680, %v1103
  %v1105 = vpop.f32.mrb[0].mxu0
  %1106 = vmatprep.mubr.f32.mxu0 0.0
  %v1107 = vand.u32 %v190, 4294901760
  %1108 = vmatmul.mubr.f32.gmra.mrb[0].mxu0 %v1107
  %v1109 = vpop.f32.mrb[0].mxu0
  %v1110 = vadd.f32 %v690, %v1109
  %v1111 = vpop.f32.mrb[0].mxu0
  %1112 = vmatprep.mubr.f32.mxu0 0.0
  %v1113 = vand.u32 %v193, 4294901760
  %1114 = vmatmul.mubr.f32.gmra.mrb[0].mxu0 %v1113
  %v1115 = vpop.f32.mrb[0].mxu0
  %v1116 = vadd.f32 %v700, %v1115
  %v1117 = vpop.f32.mrb[0].mxu0
  %1118 = vmatprep.mubr.f32.mxu0 0.0
  %v1119 = vand.u32 %v196, 4294901760
  %1120 = vmatmul.mubr.f32.gmra.mrb[0].mxu0 %v1119
  %v1121 = vpop.f32.mrb[0].mxu0
  %v1122 = vadd.f32 %v710, %v1121
  %v1123 = vpop.f32.mrb[0].mxu0
  %1124 = vmatprep.mubr.f32.mxu0 0.0
  %v1125 = vand.u32 %v199, 4294901760
  %1126 = vmatmul.mubr.f32.gmra.mrb[0].mxu0 %v1125
  %v1127 = vpop.f32.mrb[0].mxu0
  %v1128 = vadd.f32 %v720, %v1127
  %v1129 = vpop.f32.mrb[0].mxu0
  %1130 = vmatprep.mubr.f32.mxu0 0.0
  %v1131 = vand.u32 %v202, 4294901760
  %1132 = vmatmul.mubr.f32.gmra.mrb[0].mxu0 %v1131
  %v1133 = vpop.f32.mrb[0].mxu0
  %v1134 = vadd.f32 %v730, %v1133
  %v1135 = vpop.f32.mrb[0].mxu0
  %1136 = vmatprep.mubr.f32.mxu0 0.0
  %v1137 = vand.u32 %v205, 4294901760
  %1138 = vmatmul.mubr.f32.gmra.mrb[0].mxu0 %v1137
  %v1139 = vpop.f32.mrb[0].mxu0
  %v1140 = vadd.f32 %v740, %v1139
  %v1141 = vpop.f32.mrb[0].mxu0
  %1142 = vmatprep.mubr.f32.mxu0 0.0
  %v1143 = vand.u32 %v208, 4294901760
  %1144 = vmatmul.mubr.f32.gmra.mrb[0].mxu0 %v1143
  %v1145 = vpop.f32.mrb[0].mxu0
  %v1146 = vadd.f32 %v750, %v1145
  %v1147 = vpop.f32.mrb[0].mxu0
  %1148 = vmatprep.mubr.f32.mxu0 0.0
  %v1149 = vand.u32 %v211, 4294901760
  %1150 = vmatmul.mubr.f32.gmra.mrb[0].mxu0 %v1149
  %v1151 = vpop.f32.mrb[0].mxu0
  %v1152 = vadd.f32 %v760, %v1151
  %v1153 = vpop.f32.mrb[0].mxu0
  %1154 = vmatprep.mubr.f32.mxu0 0.0
  %v1155 = vand.u32 %v214, 4294901760
  %1156 = vmatmul.mubr.f32.gmra.mrb[0].mxu0 %v1155
  %v1157 = vpop.f32.mrb[0].mxu0
  %v1158 = vadd.f32 %v770, %v1157
  %v1159 = vpop.f32.mrb[0].mxu0
  %1160 = vmatprep.mubr.f32.mxu0 0.0
  %v1161 = vand.u32 %v217, 4294901760
  %1162 = vmatmul.mubr.f32.gmra.mrb[0].mxu0 %v1161
  %v1163 = vpop.f32.mrb[0].mxu0
  %v1164 = vadd.f32 %v780, %v1163
  %v1165 = vpop.f32.mrb[0].mxu0
  %1166 = vdwg.mxu0
  %1167 = vmatprep.subr.mxu0 0.0
  %v1168 = vand.u32 %v66, 4294901760
  %v1169 = vsub.f32 %v66, %v1168
  %1170 = vmatpush1.msra.mxu0 %v1169
  %1171 = vmatprep.subr.mxu0 0.0
  %v1172 = vand.u32 %v67, 4294901760
  %v1173 = vsub.f32 %v67, %v1172
  %1174 = vmatpush1.msra.mxu0 %v1173
  %1175 = vmatprep.subr.mxu0 0.0
  %v1176 = vand.u32 %v68, 4294901760
  %v1177 = vsub.f32 %v68, %v1176
  %1178 = vmatpush1.msra.mxu0 %v1177
  %1179 = vmatprep.subr.mxu0 0.0
  %v1180 = vand.u32 %v69, 4294901760
  %v1181 = vsub.f32 %v69, %v1180
  %1182 = vmatpush1.msra.mxu0 %v1181
  %1183 = vmatprep.subr.mxu0 0.0
  %v1184 = vand.u32 %v221, 4294901760
  %v1185 = vsub.f32 %v221, %v1184
  %1186 = vmatpush1.msra.mxu0 %v1185
  %1187 = vmatprep.subr.mxu0 0.0
  %1188 = vmatpush1.msra.mxu0 0.0
  %1189 = vmatprep.subr.mxu0 0.0
  %1190 = vmatpush1.msra.mxu0 0.0
  %1191 = vmatprep.subr.mxu0 0.0
  %1192 = vmatpush1.msra.mxu0 0.0
  %1193 = vmatprep.subr.mxu0 0.0
  %1194 = vmatpush1.msra.mxu0 0.0
  %1195 = vmatprep.subr.mxu0 0.0
  %1196 = vmatpush1.msra.mxu0 0.0
  %1197 = vmatprep.subr.mxu0 0.0
  %1198 = vmatpush1.msra.mxu0 0.0
  %1199 = vmatprep.subr.mxu0 0.0
  %1200 = vmatpush1.msra.mxu0 0.0
  %1201 = vmatprep.subr.mxu0 0.0
  %1202 = vmatpush1.msra.mxu0 0.0
  %1203 = vmatprep.subr.mxu0 0.0
  %1204 = vmatpush1.msra.mxu0 0.0
  %1205 = vmatprep.subr.mxu0 0.0
  %1206 = vmatpush1.msra.mxu0 0.0
  %1207 = vmatprep.subr.mxu0 0.0
  %1208 = vmatpush1.msra.mxu0 0.0
  %1209 = vmatprep.subr.mxu0 0.0
  %1210 = vmatpush1.msra.mxu0 0.0
  %1211 = vmatprep.subr.mxu0 0.0
  %1212 = vmatpush1.msra.mxu0 0.0
  %1213 = vmatprep.subr.mxu0 0.0
  %1214 = vmatpush1.msra.mxu0 0.0
  %1215 = vmatprep.subr.mxu0 0.0
  %1216 = vmatpush1.msra.mxu0 0.0
  %1217 = vmatprep.subr.mxu0 0.0
  %1218 = vmatpush1.msra.mxu0 0.0
  %1219 = vmatprep.subr.mxu0 0.0
  %1220 = vmatpush1.msra.mxu0 0.0
  %1221 = vmatprep.subr.mxu0 0.0
  %1222 = vmatpush1.msra.mxu0 0.0
  %1223 = vmatprep.subr.mxu0 0.0
  %1224 = vmatpush1.msra.mxu0 0.0
  %1225 = vmatprep.subr.mxu0 0.0
  %1226 = vmatpush1.msra.mxu0 0.0
  %1227 = vmatprep.subr.mxu0 0.0
  %1228 = vmatpush1.msra.mxu0 0.0
  %1229 = vmatprep.subr.mxu0 0.0
  %1230 = vmatpush1.msra.mxu0 0.0
  %1231 = vmatprep.subr.mxu0 0.0
  %1232 = vmatpush1.msra.mxu0 0.0
  %1233 = vmatprep.subr.mxu0 0.0
  %1234 = vmatpush1.msra.mxu0 0.0
  %1235 = vmatprep.subr.mxu0 0.0
  %1236 = vmatpush1.msra.mxu0 0.0
  %1237 = vmatprep.subr.mxu0 0.0
  %1238 = vmatpush1.msra.mxu0 0.0
  %1239 = vmatprep.subr.mxu0 0.0
  %1240 = vmatpush1.msra.mxu0 0.0
  %1241 = vmatprep.mubr.f32.mxu0 0.0
  %v1242 = vand.u32 %v73, 4294901760
  %v1243 = vsub.f32 %v73, %v1242
  %1244 = vmatmul.mubr.f32.gmra.mrb[0].mxu0 %v1243
  %v1245 = vpop.f32.mrb[0].mxu0
  %v1246 = vadd.f32 %v876, %v1245
  %v1247 = vpop.f32.mrb[0].mxu0
  %1248 = vmatprep.mubr.f32.mxu0 0.0
  %v1249 = vand.u32 %v76, 4294901760
  %v1250 = vsub.f32 %v76, %v1249
  %1251 = vmatmul.mubr.f32.gmra.mrb[0].mxu0 %v1250
  %v1252 = vpop.f32.mrb[0].mxu0
  %v1253 = vadd.f32 %v882, %v1252
  %v1254 = vpop.f32.mrb[0].mxu0
  %1255 = vmatprep.mubr.f32.mxu0 0.0
  %v1256 = vand.u32 %v79, 4294901760
  %v1257 = vsub.f32 %v79, %v1256
  %1258 = vmatmul.mubr.f32.gmra.mrb[0].mxu0 %v1257
  %v1259 = vpop.f32.mrb[0].mxu0
  %v1260 = vadd.f32 %v888, %v1259
  %v1261 = vpop.f32.mrb[0].mxu0
  %1262 = vmatprep.mubr.f32.mxu0 0.0
  %v1263 = vand.u32 %v82, 4294901760
  %v1264 = vsub.f32 %v82, %v1263
  %1265 = vmatmul.mubr.f32.gmra.mrb[0].mxu0 %v1264
  %v1266 = vpop.f32.mrb[0].mxu0
  %v1267 = vadd.f32 %v894, %v1266
  %v1268 = vpop.f32.mrb[0].mxu0
  %1269 = vmatprep.mubr.f32.mxu0 0.0
  %v1270 = vand.u32 %v85, 4294901760
  %v1271 = vsub.f32 %v85, %v1270
  %1272 = vmatmul.mubr.f32.gmra.mrb[0].mxu0 %v1271
  %v1273 = vpop.f32.mrb[0].mxu0
  %v1274 = vadd.f32 %v900, %v1273
  %v1275 = vpop.f32.mrb[0].mxu0
  %1276 = vmatprep.mubr.f32.mxu0 0.0
  %v1277 = vand.u32 %v88, 4294901760
  %v1278 = vsub.f32 %v88, %v1277
  %1279 = vmatmul.mubr.f32.gmra.mrb[0].mxu0 %v1278
  %v1280 = vpop.f32.mrb[0].mxu0
  %v1281 = vadd.f32 %v906, %v1280
  %v1282 = vpop.f32.mrb[0].mxu0
  %1283 = vmatprep.mubr.f32.mxu0 0.0
  %v1284 = vand.u32 %v91, 4294901760
  %v1285 = vsub.f32 %v91, %v1284
  %1286 = vmatmul.mubr.f32.gmra.mrb[0].mxu0 %v1285
  %v1287 = vpop.f32.mrb[0].mxu0
  %v1288 = vadd.f32 %v912, %v1287
  %v1289 = vpop.f32.mrb[0].mxu0
  %1290 = vmatprep.mubr.f32.mxu0 0.0
  %v1291 = vand.u32 %v94, 4294901760
  %v1292 = vsub.f32 %v94, %v1291
  %1293 = vmatmul.mubr.f32.gmra.mrb[0].mxu0 %v1292
  %v1294 = vpop.f32.mrb[0].mxu0
  %v1295 = vadd.f32 %v918, %v1294
  %v1296 = vpop.f32.mrb[0].mxu0
  %1297 = vmatprep.mubr.f32.mxu0 0.0
  %v1298 = vand.u32 %v97, 4294901760
  %v1299 = vsub.f32 %v97, %v1298
  %1300 = vmatmul.mubr.f32.gmra.mrb[0].mxu0 %v1299
  %v1301 = vpop.f32.mrb[0].mxu0
  %v1302 = vadd.f32 %v924, %v1301
  %v1303 = vpop.f32.mrb[0].mxu0
  %1304 = vmatprep.mubr.f32.mxu0 0.0
  %v1305 = vand.u32 %v100, 4294901760
  %v1306 = vsub.f32 %v100, %v1305
  %1307 = vmatmul.mubr.f32.gmra.mrb[0].mxu0 %v1306
  %v1308 = vpop.f32.mrb[0].mxu0
  %v1309 = vadd.f32 %v930, %v1308
  %v1310 = vpop.f32.mrb[0].mxu0
  %1311 = vmatprep.mubr.f32.mxu0 0.0
  %v1312 = vand.u32 %v103, 4294901760
  %v1313 = vsub.f32 %v103, %v1312
  %1314 = vmatmul.mubr.f32.gmra.mrb[0].mxu0 %v1313
  %v1315 = vpop.f32.mrb[0].mxu0
  %v1316 = vadd.f32 %v936, %v1315
  %v1317 = vpop.f32.mrb[0].mxu0
  %1318 = vmatprep.mubr.f32.mxu0 0.0
  %v1319 = vand.u32 %v106, 4294901760
  %v1320 = vsub.f32 %v106, %v1319
  %1321 = vmatmul.mubr.f32.gmra.mrb[0].mxu0 %v1320
  %v1322 = vpop.f32.mrb[0].mxu0
  %v1323 = vadd.f32 %v942, %v1322
  %v1324 = vpop.f32.mrb[0].mxu0
  %1325 = vmatprep.mubr.f32.mxu0 0.0
  %v1326 = vand.u32 %v109, 4294901760
  %v1327 = vsub.f32 %v109, %v1326
  %1328 = vmatmul.mubr.f32.gmra.mrb[0].mxu0 %v1327
  %v1329 = vpop.f32.mrb[0].mxu0
  %v1330 = vadd.f32 %v948, %v1329
  %v1331 = vpop.f32.mrb[0].mxu0
  %1332 = vmatprep.mubr.f32.mxu0 0.0
  %v1333 = vand.u32 %v112, 4294901760
  %v1334 = vsub.f32 %v112, %v1333
  %1335 = vmatmul.mubr.f32.gmra.mrb[0].mxu0 %v1334
  %v1336 = vpop.f32.mrb[0].mxu0
  %v1337 = vadd.f32 %v954, %v1336
  %v1338 = vpop.f32.mrb[0].mxu0
  %1339 = vmatprep.mubr.f32.mxu0 0.0
  %v1340 = vand.u32 %v115, 4294901760
  %v1341 = vsub.f32 %v115, %v1340
  %1342 = vmatmul.mubr.f32.gmra.mrb[0].mxu0 %v1341
  %v1343 = vpop.f32.mrb[0].mxu0
  %v1344 = vadd.f32 %v960, %v1343
  %v1345 = vpop.f32.mrb[0].mxu0
  %1346 = vmatprep.mubr.f32.mxu0 0.0
  %v1347 = vand.u32 %v118, 4294901760
  %v1348 = vsub.f32 %v118, %v1347
  %1349 = vmatmul.mubr.f32.gmra.mrb[0].mxu0 %v1348
  %v1350 = vpop.f32.mrb[0].mxu0
  %v1351 = vadd.f32 %v966, %v1350
  %v1352 = vpop.f32.mrb[0].mxu0
  %1353 = vmatprep.mubr.f32.mxu0 0.0
  %v1354 = vand.u32 %v121, 4294901760
  %v1355 = vsub.f32 %v121, %v1354
  %1356 = vmatmul.mubr.f32.gmra.mrb[0].mxu0 %v1355
  %v1357 = vpop.f32.mrb[0].mxu0
  %v1358 = vadd.f32 %v972, %v1357
  %v1359 = vpop.f32.mrb[0].mxu0
  %1360 = vmatprep.mubr.f32.mxu0 0.0
  %v1361 = vand.u32 %v124, 4294901760
  %v1362 = vsub.f32 %v124, %v1361
  %1363 = vmatmul.mubr.f32.gmra.mrb[0].mxu0 %v1362
  %v1364 = vpop.f32.mrb[0].mxu0
  %v1365 = vadd.f32 %v978, %v1364
  %v1366 = vpop.f32.mrb[0].mxu0
  %1367 = vmatprep.mubr.f32.mxu0 0.0
  %v1368 = vand.u32 %v127, 4294901760
  %v1369 = vsub.f32 %v127, %v1368
  %1370 = vmatmul.mubr.f32.gmra.mrb[0].mxu0 %v1369
  %v1371 = vpop.f32.mrb[0].mxu0
  %v1372 = vadd.f32 %v984, %v1371
  %v1373 = vpop.f32.mrb[0].mxu0
  %1374 = vmatprep.mubr.f32.mxu0 0.0
  %v1375 = vand.u32 %v130, 4294901760
  %v1376 = vsub.f32 %v130, %v1375
  %1377 = vmatmul.mubr.f32.gmra.mrb[0].mxu0 %v1376
  %v1378 = vpop.f32.mrb[0].mxu0
  %v1379 = vadd.f32 %v990, %v1378
  %v1380 = vpop.f32.mrb[0].mxu0
  %1381 = vmatprep.mubr.f32.mxu0 0.0
  %v1382 = vand.u32 %v133, 4294901760
  %v1383 = vsub.f32 %v133, %v1382
  %1384 = vmatmul.mubr.f32.gmra.mrb[0].mxu0 %v1383
  %v1385 = vpop.f32.mrb[0].mxu0
  %v1386 = vadd.f32 %v996, %v1385
  %v1387 = vpop.f32.mrb[0].mxu0
  %1388 = vmatprep.mubr.f32.mxu0 0.0
  %v1389 = vand.u32 %v136, 4294901760
  %v1390 = vsub.f32 %v136, %v1389
  %1391 = vmatmul.mubr.f32.gmra.mrb[0].mxu0 %v1390
  %v1392 = vpop.f32.mrb[0].mxu0
  %v1393 = vadd.f32 %v1002, %v1392
  %v1394 = vpop.f32.mrb[0].mxu0
  %1395 = vmatprep.mubr.f32.mxu0 0.0
  %v1396 = vand.u32 %v139, 4294901760
  %v1397 = vsub.f32 %v139, %v1396
  %1398 = vmatmul.mubr.f32.gmra.mrb[0].mxu0 %v1397
  %v1399 = vpop.f32.mrb[0].mxu0
  %v1400 = vadd.f32 %v1008, %v1399
  %v1401 = vpop.f32.mrb[0].mxu0
  %1402 = vmatprep.mubr.f32.mxu0 0.0
  %v1403 = vand.u32 %v142, 4294901760
  %v1404 = vsub.f32 %v142, %v1403
  %1405 = vmatmul.mubr.f32.gmra.mrb[0].mxu0 %v1404
  %v1406 = vpop.f32.mrb[0].mxu0
  %v1407 = vadd.f32 %v1014, %v1406
  %v1408 = vpop.f32.mrb[0].mxu0
  %1409 = vmatprep.mubr.f32.mxu0 0.0
  %v1410 = vand.u32 %v145, 4294901760
  %v1411 = vsub.f32 %v145, %v1410
  %1412 = vmatmul.mubr.f32.gmra.mrb[0].mxu0 %v1411
  %v1413 = vpop.f32.mrb[0].mxu0
  %v1414 = vadd.f32 %v1020, %v1413
  %v1415 = vpop.f32.mrb[0].mxu0
  %1416 = vmatprep.mubr.f32.mxu0 0.0
  %v1417 = vand.u32 %v148, 4294901760
  %v1418 = vsub.f32 %v148, %v1417
  %1419 = vmatmul.mubr.f32.gmra.mrb[0].mxu0 %v1418
  %v1420 = vpop.f32.mrb[0].mxu0
  %v1421 = vadd.f32 %v1026, %v1420
  %v1422 = vpop.f32.mrb[0].mxu0
  %1423 = vmatprep.mubr.f32.mxu0 0.0
  %v1424 = vand.u32 %v151, 4294901760
  %v1425 = vsub.f32 %v151, %v1424
  %1426 = vmatmul.mubr.f32.gmra.mrb[0].mxu0 %v1425
  %v1427 = vpop.f32.mrb[0].mxu0
  %v1428 = vadd.f32 %v1032, %v1427
  %v1429 = vpop.f32.mrb[0].mxu0
  %1430 = vmatprep.mubr.f32.mxu0 0.0
  %v1431 = vand.u32 %v154, 4294901760
  %v1432 = vsub.f32 %v154, %v1431
  %1433 = vmatmul.mubr.f32.gmra.mrb[0].mxu0 %v1432
  %v1434 = vpop.f32.mrb[0].mxu0
  %v1435 = vadd.f32 %v1038, %v1434
  %v1436 = vpop.f32.mrb[0].mxu0
  %1437 = vmatprep.mubr.f32.mxu0 0.0
  %v1438 = vand.u32 %v157, 4294901760
  %v1439 = vsub.f32 %v157, %v1438
  %1440 = vmatmul.mubr.f32.gmra.mrb[0].mxu0 %v1439
  %v1441 = vpop.f32.mrb[0].mxu0
  %v1442 = vadd.f32 %v1044, %v1441
  %v1443 = vpop.f32.mrb[0].mxu0
  %1444 = vmatprep.mubr.f32.mxu0 0.0
  %v1445 = vand.u32 %v160, 4294901760
  %v1446 = vsub.f32 %v160, %v1445
  %1447 = vmatmul.mubr.f32.gmra.mrb[0].mxu0 %v1446
  %v1448 = vpop.f32.mrb[0].mxu0
  %v1449 = vadd.f32 %v1050, %v1448
  %v1450 = vpop.f32.mrb[0].mxu0
  %1451 = vmatprep.mubr.f32.mxu0 0.0
  %v1452 = vand.u32 %v163, 4294901760
  %v1453 = vsub.f32 %v163, %v1452
  %1454 = vmatmul.mubr.f32.gmra.mrb[0].mxu0 %v1453
  %v1455 = vpop.f32.mrb[0].mxu0
  %v1456 = vadd.f32 %v1056, %v1455
  %v1457 = vpop.f32.mrb[0].mxu0
  %1458 = vmatprep.mubr.f32.mxu0 0.0
  %v1459 = vand.u32 %v166, 4294901760
  %v1460 = vsub.f32 %v166, %v1459
  %1461 = vmatmul.mubr.f32.gmra.mrb[0].mxu0 %v1460
  %v1462 = vpop.f32.mrb[0].mxu0
  %v1463 = vadd.f32 %v1062, %v1462
  %v1464 = vpop.f32.mrb[0].mxu0
  %1465 = vmatprep.mubr.f32.mxu0 0.0
  %v1466 = vand.u32 %v169, 4294901760
  %v1467 = vsub.f32 %v169, %v1466
  %1468 = vmatmul.mubr.f32.gmra.mrb[0].mxu0 %v1467
  %v1469 = vpop.f32.mrb[0].mxu0
  %v1470 = vadd.f32 %v1068, %v1469
  %v1471 = vpop.f32.mrb[0].mxu0
  %1472 = vmatprep.mubr.f32.mxu0 0.0
  %v1473 = vand.u32 %v172, 4294901760
  %v1474 = vsub.f32 %v172, %v1473
  %1475 = vmatmul.mubr.f32.gmra.mrb[0].mxu0 %v1474
  %v1476 = vpop.f32.mrb[0].mxu0
  %v1477 = vadd.f32 %v1074, %v1476
  %v1478 = vpop.f32.mrb[0].mxu0
  %1479 = vmatprep.mubr.f32.mxu0 0.0
  %v1480 = vand.u32 %v175, 4294901760
  %v1481 = vsub.f32 %v175, %v1480
  %1482 = vmatmul.mubr.f32.gmra.mrb[0].mxu0 %v1481
  %v1483 = vpop.f32.mrb[0].mxu0
  %v1484 = vadd.f32 %v1080, %v1483
  %v1485 = vpop.f32.mrb[0].mxu0
  %1486 = vmatprep.mubr.f32.mxu0 0.0
  %v1487 = vand.u32 %v178, 4294901760
  %v1488 = vsub.f32 %v178, %v1487
  %1489 = vmatmul.mubr.f32.gmra.mrb[0].mxu0 %v1488
  %v1490 = vpop.f32.mrb[0].mxu0
  %v1491 = vadd.f32 %v1086, %v1490
  %v1492 = vpop.f32.mrb[0].mxu0
  %1493 = vmatprep.mubr.f32.mxu0 0.0
  %v1494 = vand.u32 %v181, 4294901760
  %v1495 = vsub.f32 %v181, %v1494
  %1496 = vmatmul.mubr.f32.gmra.mrb[0].mxu0 %v1495
  %v1497 = vpop.f32.mrb[0].mxu0
  %v1498 = vadd.f32 %v1092, %v1497
  %v1499 = vpop.f32.mrb[0].mxu0
  %1500 = vmatprep.mubr.f32.mxu0 0.0
  %v1501 = vand.u32 %v184, 4294901760
  %v1502 = vsub.f32 %v184, %v1501
  %1503 = vmatmul.mubr.f32.gmra.mrb[0].mxu0 %v1502
  %v1504 = vpop.f32.mrb[0].mxu0
  %v1505 = vadd.f32 %v1098, %v1504
  %v1506 = vpop.f32.mrb[0].mxu0
  %1507 = vmatprep.mubr.f32.mxu0 0.0
  %v1508 = vand.u32 %v187, 4294901760
  %v1509 = vsub.f32 %v187, %v1508
  %1510 = vmatmul.mubr.f32.gmra.mrb[0].mxu0 %v1509
  %v1511 = vpop.f32.mrb[0].mxu0
  %v1512 = vadd.f32 %v1104, %v1511
  %v1513 = vpop.f32.mrb[0].mxu0
  %1514 = vmatprep.mubr.f32.mxu0 0.0
  %v1515 = vand.u32 %v190, 4294901760
  %v1516 = vsub.f32 %v190, %v1515
  %1517 = vmatmul.mubr.f32.gmra.mrb[0].mxu0 %v1516
  %v1518 = vpop.f32.mrb[0].mxu0
  %v1519 = vadd.f32 %v1110, %v1518
  %v1520 = vpop.f32.mrb[0].mxu0
  %1521 = vmatprep.mubr.f32.mxu0 0.0
  %v1522 = vand.u32 %v193, 4294901760
  %v1523 = vsub.f32 %v193, %v1522
  %1524 = vmatmul.mubr.f32.gmra.mrb[0].mxu0 %v1523
  %v1525 = vpop.f32.mrb[0].mxu0
  %v1526 = vadd.f32 %v1116, %v1525
  %v1527 = vpop.f32.mrb[0].mxu0
  %1528 = vmatprep.mubr.f32.mxu0 0.0
  %v1529 = vand.u32 %v196, 4294901760
  %v1530 = vsub.f32 %v196, %v1529
  %1531 = vmatmul.mubr.f32.gmra.mrb[0].mxu0 %v1530
  %v1532 = vpop.f32.mrb[0].mxu0
  %v1533 = vadd.f32 %v1122, %v1532
  %v1534 = vpop.f32.mrb[0].mxu0
  %1535 = vmatprep.mubr.f32.mxu0 0.0
  %v1536 = vand.u32 %v199, 4294901760
  %v1537 = vsub.f32 %v199, %v1536
  %1538 = vmatmul.mubr.f32.gmra.mrb[0].mxu0 %v1537
  %v1539 = vpop.f32.mrb[0].mxu0
  %v1540 = vadd.f32 %v1128, %v1539
  %v1541 = vpop.f32.mrb[0].mxu0
  %1542 = vmatprep.mubr.f32.mxu0 0.0
  %v1543 = vand.u32 %v202, 4294901760
  %v1544 = vsub.f32 %v202, %v1543
  %1545 = vmatmul.mubr.f32.gmra.mrb[0].mxu0 %v1544
  %v1546 = vpop.f32.mrb[0].mxu0
  %v1547 = vadd.f32 %v1134, %v1546
  %v1548 = vpop.f32.mrb[0].mxu0
  %1549 = vmatprep.mubr.f32.mxu0 0.0
  %v1550 = vand.u32 %v205, 4294901760
  %v1551 = vsub.f32 %v205, %v1550
  %1552 = vmatmul.mubr.f32.gmra.mrb[0].mxu0 %v1551
  %v1553 = vpop.f32.mrb[0].mxu0
  %v1554 = vadd.f32 %v1140, %v1553
  %v1555 = vpop.f32.mrb[0].mxu0
  %1556 = vmatprep.mubr.f32.mxu0 0.0
  %v1557 = vand.u32 %v208, 4294901760
  %v1558 = vsub.f32 %v208, %v1557
  %1559 = vmatmul.mubr.f32.gmra.mrb[0].mxu0 %v1558
  %v1560 = vpop.f32.mrb[0].mxu0
  %v1561 = vadd.f32 %v1146, %v1560
  %v1562 = vpop.f32.mrb[0].mxu0
  %1563 = vmatprep.mubr.f32.mxu0 0.0
  %v1564 = vand.u32 %v211, 4294901760
  %v1565 = vsub.f32 %v211, %v1564
  %1566 = vmatmul.mubr.f32.gmra.mrb[0].mxu0 %v1565
  %v1567 = vpop.f32.mrb[0].mxu0
  %v1568 = vadd.f32 %v1152, %v1567
  %v1569 = vpop.f32.mrb[0].mxu0
  %1570 = vmatprep.mubr.f32.mxu0 0.0
  %v1571 = vand.u32 %v214, 4294901760
  %v1572 = vsub.f32 %v214, %v1571
  %1573 = vmatmul.mubr.f32.gmra.mrb[0].mxu0 %v1572
  %v1574 = vpop.f32.mrb[0].mxu0
  %v1575 = vadd.f32 %v1158, %v1574
  %v1576 = vpop.f32.mrb[0].mxu0
  %1577 = vmatprep.mubr.f32.mxu0 0.0
  %v1578 = vand.u32 %v217, 4294901760
  %v1579 = vsub.f32 %v217, %v1578
  %1580 = vmatmul.mubr.f32.gmra.mrb[0].mxu0 %v1579
  %v1581 = vpop.f32.mrb[0].mxu0
  %v1582 = vadd.f32 %v1164, %v1581
  %v1583 = vpop.f32.mrb[0].mxu0
  %1584 = vdwg.mxu0
  %1585 = vmatprep.subr.mxu0 0.0
  %v1586 = vand.u32 %v66, 4294901760
  %1587 = vmatpush1.msra.mxu0 %v1586
  %1588 = vmatprep.subr.mxu0 0.0
  %v1589 = vand.u32 %v67, 4294901760
  %1590 = vmatpush1.msra.mxu0 %v1589
  %1591 = vmatprep.subr.mxu0 0.0
  %v1592 = vand.u32 %v68, 4294901760
  %1593 = vmatpush1.msra.mxu0 %v1592
  %1594 = vmatprep.subr.mxu0 0.0
  %v1595 = vand.u32 %v69, 4294901760
  %1596 = vmatpush1.msra.mxu0 %v1595
  %1597 = vmatprep.subr.mxu0 0.0
  %v1598 = vand.u32 %v221, 4294901760
  %1599 = vmatpush1.msra.mxu0 %v1598
  %1600 = vmatprep.subr.mxu0 0.0
  %1601 = vmatpush1.msra.mxu0 0.0
  %1602 = vmatprep.subr.mxu0 0.0
  %1603 = vmatpush1.msra.mxu0 0.0
  %1604 = vmatprep.subr.mxu0 0.0
  %1605 = vmatpush1.msra.mxu0 0.0
  %1606 = vmatprep.subr.mxu0 0.0
  %1607 = vmatpush1.msra.mxu0 0.0
  %1608 = vmatprep.subr.mxu0 0.0
  %1609 = vmatpush1.msra.mxu0 0.0
  %1610 = vmatprep.subr.mxu0 0.0
  %1611 = vmatpush1.msra.mxu0 0.0
  %1612 = vmatprep.subr.mxu0 0.0
  %1613 = vmatpush1.msra.mxu0 0.0
  %1614 = vmatprep.subr.mxu0 0.0
  %1615 = vmatpush1.msra.mxu0 0.0
  %1616 = vmatprep.subr.mxu0 0.0
  %1617 = vmatpush1.msra.mxu0 0.0
  %1618 = vmatprep.subr.mxu0 0.0
  %1619 = vmatpush1.msra.mxu0 0.0
  %1620 = vmatprep.subr.mxu0 0.0
  %1621 = vmatpush1.msra.mxu0 0.0
  %1622 = vmatprep.subr.mxu0 0.0
  %1623 = vmatpush1.msra.mxu0 0.0
  %1624 = vmatprep.subr.mxu0 0.0
  %1625 = vmatpush1.msra.mxu0 0.0
  %1626 = vmatprep.subr.mxu0 0.0
  %1627 = vmatpush1.msra.mxu0 0.0
  %1628 = vmatprep.subr.mxu0 0.0
  %1629 = vmatpush1.msra.mxu0 0.0
  %1630 = vmatprep.subr.mxu0 0.0
  %1631 = vmatpush1.msra.mxu0 0.0
  %1632 = vmatprep.subr.mxu0 0.0
  %1633 = vmatpush1.msra.mxu0 0.0
  %1634 = vmatprep.subr.mxu0 0.0
  %1635 = vmatpush1.msra.mxu0 0.0
  %1636 = vmatprep.subr.mxu0 0.0
  %1637 = vmatpush1.msra.mxu0 0.0
  %1638 = vmatprep.subr.mxu0 0.0
  %1639 = vmatpush1.msra.mxu0 0.0
  %1640 = vmatprep.subr.mxu0 0.0
  %1641 = vmatpush1.msra.mxu0 0.0
  %1642 = vmatprep.subr.mxu0 0.0
  %1643 = vmatpush1.msra.mxu0 0.0
  %1644 = vmatprep.subr.mxu0 0.0
  %1645 = vmatpush1.msra.mxu0 0.0
  %1646 = vmatprep.subr.mxu0 0.0
  %1647 = vmatpush1.msra.mxu0 0.0
  %1648 = vmatprep.subr.mxu0 0.0
  %1649 = vmatpush1.msra.mxu0 0.0
  %1650 = vmatprep.subr.mxu0 0.0
  %1651 = vmatpush1.msra.mxu0 0.0
  %1652 = vmatprep.subr.mxu0 0.0
  %1653 = vmatpush1.msra.mxu0 0.0
  %1654 = vmatprep.mubr.f32.mxu0 0.0
  %v1655 = vand.u32 %v73, 4294901760
  %v1656 = vsub.f32 %v73, %v1655
  %v1657 = vand.u32 %v1656, 4294901760
  %1658 = vmatmul.mubr.f32.gmra.mrb[0].mxu0 %v1657
  %v1659 = vpop.f32.mrb[0].mxu0
  %v1660 = vadd.f32 %v1246, %v1659
  %v1661 = vpop.f32.mrb[0].mxu0
  %1662 = vmatprep.mubr.f32.mxu0 0.0
  %v1663 = vand.u32 %v76, 4294901760
  %v1664 = vsub.f32 %v76, %v1663
  %v1665 = vand.u32 %v1664, 4294901760
  %1666 = vmatmul.mubr.f32.gmra.mrb[0].mxu0 %v1665
  %v1667 = vpop.f32.mrb[0].mxu0
  %v1668 = vadd.f32 %v1253, %v1667
  %v1669 = vpop.f32.mrb[0].mxu0
  %1670 = vmatprep.mubr.f32.mxu0 0.0
  %v1671 = vand.u32 %v79, 4294901760
  %v1672 = vsub.f32 %v79, %v1671
  %v1673 = vand.u32 %v1672, 4294901760
  %1674 = vmatmul.mubr.f32.gmra.mrb[0].mxu0 %v1673
  %v1675 = vpop.f32.mrb[0].mxu0
  %v1676 = vadd.f32 %v1260, %v1675
  %v1677 = vpop.f32.mrb[0].mxu0
  %1678 = vmatprep.mubr.f32.mxu0 0.0
  %v1679 = vand.u32 %v82, 4294901760
  %v1680 = vsub.f32 %v82, %v1679
  %v1681 = vand.u32 %v1680, 4294901760
  %1682 = vmatmul.mubr.f32.gmra.mrb[0].mxu0 %v1681
  %v1683 = vpop.f32.mrb[0].mxu0
  %v1684 = vadd.f32 %v1267, %v1683
  %v1685 = vpop.f32.mrb[0].mxu0
  %1686 = vmatprep.mubr.f32.mxu0 0.0
  %v1687 = vand.u32 %v85, 4294901760
  %v1688 = vsub.f32 %v85, %v1687
  %v1689 = vand.u32 %v1688, 4294901760
  %1690 = vmatmul.mubr.f32.gmra.mrb[0].mxu0 %v1689
  %v1691 = vpop.f32.mrb[0].mxu0
  %v1692 = vadd.f32 %v1274, %v1691
  %v1693 = vpop.f32.mrb[0].mxu0
  %1694 = vmatprep.mubr.f32.mxu0 0.0
  %v1695 = vand.u32 %v88, 4294901760
  %v1696 = vsub.f32 %v88, %v1695
  %v1697 = vand.u32 %v1696, 4294901760
  %1698 = vmatmul.mubr.f32.gmra.mrb[0].mxu0 %v1697
  %v1699 = vpop.f32.mrb[0].mxu0
  %v1700 = vadd.f32 %v1281, %v1699
  %v1701 = vpop.f32.mrb[0].mxu0
  %1702 = vmatprep.mubr.f32.mxu0 0.0
  %v1703 = vand.u32 %v91, 4294901760
  %v1704 = vsub.f32 %v91, %v1703
  %v1705 = vand.u32 %v1704, 4294901760
  %1706 = vmatmul.mubr.f32.gmra.mrb[0].mxu0 %v1705
  %v1707 = vpop.f32.mrb[0].mxu0
  %v1708 = vadd.f32 %v1288, %v1707
  %v1709 = vpop.f32.mrb[0].mxu0
  %1710 = vmatprep.mubr.f32.mxu0 0.0
  %v1711 = vand.u32 %v94, 4294901760
  %v1712 = vsub.f32 %v94, %v1711
  %v1713 = vand.u32 %v1712, 4294901760
  %1714 = vmatmul.mubr.f32.gmra.mrb[0].mxu0 %v1713
  %v1715 = vpop.f32.mrb[0].mxu0
  %v1716 = vadd.f32 %v1295, %v1715
  %v1717 = vpop.f32.mrb[0].mxu0
  %1718 = vmatprep.mubr.f32.mxu0 0.0
  %v1719 = vand.u32 %v97, 4294901760
  %v1720 = vsub.f32 %v97, %v1719
  %v1721 = vand.u32 %v1720, 4294901760
  %1722 = vmatmul.mubr.f32.gmra.mrb[0].mxu0 %v1721
  %v1723 = vpop.f32.mrb[0].mxu0
  %v1724 = vadd.f32 %v1302, %v1723
  %v1725 = vpop.f32.mrb[0].mxu0
  %1726 = vmatprep.mubr.f32.mxu0 0.0
  %v1727 = vand.u32 %v100, 4294901760
  %v1728 = vsub.f32 %v100, %v1727
  %v1729 = vand.u32 %v1728, 4294901760
  %1730 = vmatmul.mubr.f32.gmra.mrb[0].mxu0 %v1729
  %v1731 = vpop.f32.mrb[0].mxu0
  %v1732 = vadd.f32 %v1309, %v1731
  %v1733 = vpop.f32.mrb[0].mxu0
  %1734 = vmatprep.mubr.f32.mxu0 0.0
  %v1735 = vand.u32 %v103, 4294901760
  %v1736 = vsub.f32 %v103, %v1735
  %v1737 = vand.u32 %v1736, 4294901760
  %1738 = vmatmul.mubr.f32.gmra.mrb[0].mxu0 %v1737
  %v1739 = vpop.f32.mrb[0].mxu0
  %v1740 = vadd.f32 %v1316, %v1739
  %v1741 = vpop.f32.mrb[0].mxu0
  %1742 = vmatprep.mubr.f32.mxu0 0.0
  %v1743 = vand.u32 %v106, 4294901760
  %v1744 = vsub.f32 %v106, %v1743
  %v1745 = vand.u32 %v1744, 4294901760
  %1746 = vmatmul.mubr.f32.gmra.mrb[0].mxu0 %v1745
  %v1747 = vpop.f32.mrb[0].mxu0
  %v1748 = vadd.f32 %v1323, %v1747
  %v1749 = vpop.f32.mrb[0].mxu0
  %1750 = vmatprep.mubr.f32.mxu0 0.0
  %v1751 = vand.u32 %v109, 4294901760
  %v1752 = vsub.f32 %v109, %v1751
  %v1753 = vand.u32 %v1752, 4294901760
  %1754 = vmatmul.mubr.f32.gmra.mrb[0].mxu0 %v1753
  %v1755 = vpop.f32.mrb[0].mxu0
  %v1756 = vadd.f32 %v1330, %v1755
  %v1757 = vpop.f32.mrb[0].mxu0
  %1758 = vmatprep.mubr.f32.mxu0 0.0
  %v1759 = vand.u32 %v112, 4294901760
  %v1760 = vsub.f32 %v112, %v1759
  %v1761 = vand.u32 %v1760, 4294901760
  %1762 = vmatmul.mubr.f32.gmra.mrb[0].mxu0 %v1761
  %v1763 = vpop.f32.mrb[0].mxu0
  %v1764 = vadd.f32 %v1337, %v1763
  %v1765 = vpop.f32.mrb[0].mxu0
  %1766 = vmatprep.mubr.f32.mxu0 0.0
  %v1767 = vand.u32 %v115, 4294901760
  %v1768 = vsub.f32 %v115, %v1767
  %v1769 = vand.u32 %v1768, 4294901760
  %1770 = vmatmul.mubr.f32.gmra.mrb[0].mxu0 %v1769
  %v1771 = vpop.f32.mrb[0].mxu0
  %v1772 = vadd.f32 %v1344, %v1771
  %v1773 = vpop.f32.mrb[0].mxu0
  %1774 = vmatprep.mubr.f32.mxu0 0.0
  %v1775 = vand.u32 %v118, 4294901760
  %v1776 = vsub.f32 %v118, %v1775
  %v1777 = vand.u32 %v1776, 4294901760
  %1778 = vmatmul.mubr.f32.gmra.mrb[0].mxu0 %v1777
  %v1779 = vpop.f32.mrb[0].mxu0
  %v1780 = vadd.f32 %v1351, %v1779
  %v1781 = vpop.f32.mrb[0].mxu0
  %1782 = vmatprep.mubr.f32.mxu0 0.0
  %v1783 = vand.u32 %v121, 4294901760
  %v1784 = vsub.f32 %v121, %v1783
  %v1785 = vand.u32 %v1784, 4294901760
  %1786 = vmatmul.mubr.f32.gmra.mrb[0].mxu0 %v1785
  %v1787 = vpop.f32.mrb[0].mxu0
  %v1788 = vadd.f32 %v1358, %v1787
  %v1789 = vpop.f32.mrb[0].mxu0
  %1790 = vmatprep.mubr.f32.mxu0 0.0
  %v1791 = vand.u32 %v124, 4294901760
  %v1792 = vsub.f32 %v124, %v1791
  %v1793 = vand.u32 %v1792, 4294901760
  %1794 = vmatmul.mubr.f32.gmra.mrb[0].mxu0 %v1793
  %v1795 = vpop.f32.mrb[0].mxu0
  %v1796 = vadd.f32 %v1365, %v1795
  %v1797 = vpop.f32.mrb[0].mxu0
  %1798 = vmatprep.mubr.f32.mxu0 0.0
  %v1799 = vand.u32 %v127, 4294901760
  %v1800 = vsub.f32 %v127, %v1799
  %v1801 = vand.u32 %v1800, 4294901760
  %1802 = vmatmul.mubr.f32.gmra.mrb[0].mxu0 %v1801
  %v1803 = vpop.f32.mrb[0].mxu0
  %v1804 = vadd.f32 %v1372, %v1803
  %v1805 = vpop.f32.mrb[0].mxu0
  %1806 = vmatprep.mubr.f32.mxu0 0.0
  %v1807 = vand.u32 %v130, 4294901760
  %v1808 = vsub.f32 %v130, %v1807
  %v1809 = vand.u32 %v1808, 4294901760
  %1810 = vmatmul.mubr.f32.gmra.mrb[0].mxu0 %v1809
  %v1811 = vpop.f32.mrb[0].mxu0
  %v1812 = vadd.f32 %v1379, %v1811
  %v1813 = vpop.f32.mrb[0].mxu0
  %1814 = vmatprep.mubr.f32.mxu0 0.0
  %v1815 = vand.u32 %v133, 4294901760
  %v1816 = vsub.f32 %v133, %v1815
  %v1817 = vand.u32 %v1816, 4294901760
  %1818 = vmatmul.mubr.f32.gmra.mrb[0].mxu0 %v1817
  %v1819 = vpop.f32.mrb[0].mxu0
  %v1820 = vadd.f32 %v1386, %v1819
  %v1821 = vpop.f32.mrb[0].mxu0
  %1822 = vmatprep.mubr.f32.mxu0 0.0
  %v1823 = vand.u32 %v136, 4294901760
  %v1824 = vsub.f32 %v136, %v1823
  %v1825 = vand.u32 %v1824, 4294901760
  %1826 = vmatmul.mubr.f32.gmra.mrb[0].mxu0 %v1825
  %v1827 = vpop.f32.mrb[0].mxu0
  %v1828 = vadd.f32 %v1393, %v1827
  %v1829 = vpop.f32.mrb[0].mxu0
  %1830 = vmatprep.mubr.f32.mxu0 0.0
  %v1831 = vand.u32 %v139, 4294901760
  %v1832 = vsub.f32 %v139, %v1831
  %v1833 = vand.u32 %v1832, 4294901760
  %1834 = vmatmul.mubr.f32.gmra.mrb[0].mxu0 %v1833
  %v1835 = vpop.f32.mrb[0].mxu0
  %v1836 = vadd.f32 %v1400, %v1835
  %v1837 = vpop.f32.mrb[0].mxu0
  %1838 = vmatprep.mubr.f32.mxu0 0.0
  %v1839 = vand.u32 %v142, 4294901760
  %v1840 = vsub.f32 %v142, %v1839
  %v1841 = vand.u32 %v1840, 4294901760
  %1842 = vmatmul.mubr.f32.gmra.mrb[0].mxu0 %v1841
  %v1843 = vpop.f32.mrb[0].mxu0
  %v1844 = vadd.f32 %v1407, %v1843
  %v1845 = vpop.f32.mrb[0].mxu0
  %1846 = vmatprep.mubr.f32.mxu0 0.0
  %v1847 = vand.u32 %v145, 4294901760
  %v1848 = vsub.f32 %v145, %v1847
  %v1849 = vand.u32 %v1848, 4294901760
  %1850 = vmatmul.mubr.f32.gmra.mrb[0].mxu0 %v1849
  %v1851 = vpop.f32.mrb[0].mxu0
  %v1852 = vadd.f32 %v1414, %v1851
  %v1853 = vpop.f32.mrb[0].mxu0
  %1854 = vmatprep.mubr.f32.mxu0 0.0
  %v1855 = vand.u32 %v148, 4294901760
  %v1856 = vsub.f32 %v148, %v1855
  %v1857 = vand.u32 %v1856, 4294901760
  %1858 = vmatmul.mubr.f32.gmra.mrb[0].mxu0 %v1857
  %v1859 = vpop.f32.mrb[0].mxu0
  %v1860 = vadd.f32 %v1421, %v1859
  %v1861 = vpop.f32.mrb[0].mxu0
  %1862 = vmatprep.mubr.f32.mxu0 0.0
  %v1863 = vand.u32 %v151, 4294901760
  %v1864 = vsub.f32 %v151, %v1863
  %v1865 = vand.u32 %v1864, 4294901760
  %1866 = vmatmul.mubr.f32.gmra.mrb[0].mxu0 %v1865
  %v1867 = vpop.f32.mrb[0].mxu0
  %v1868 = vadd.f32 %v1428, %v1867
  %v1869 = vpop.f32.mrb[0].mxu0
  %1870 = vmatprep.mubr.f32.mxu0 0.0
  %v1871 = vand.u32 %v154, 4294901760
  %v1872 = vsub.f32 %v154, %v1871
  %v1873 = vand.u32 %v1872, 4294901760
  %1874 = vmatmul.mubr.f32.gmra.mrb[0].mxu0 %v1873
  %v1875 = vpop.f32.mrb[0].mxu0
  %v1876 = vadd.f32 %v1435, %v1875
  %v1877 = vpop.f32.mrb[0].mxu0
  %1878 = vmatprep.mubr.f32.mxu0 0.0
  %v1879 = vand.u32 %v157, 4294901760
  %v1880 = vsub.f32 %v157, %v1879
  %v1881 = vand.u32 %v1880, 4294901760
  %1882 = vmatmul.mubr.f32.gmra.mrb[0].mxu0 %v1881
  %v1883 = vpop.f32.mrb[0].mxu0
  %v1884 = vadd.f32 %v1442, %v1883
  %v1885 = vpop.f32.mrb[0].mxu0
  %1886 = vmatprep.mubr.f32.mxu0 0.0
  %v1887 = vand.u32 %v160, 4294901760
  %v1888 = vsub.f32 %v160, %v1887
  %v1889 = vand.u32 %v1888, 4294901760
  %1890 = vmatmul.mubr.f32.gmra.mrb[0].mxu0 %v1889
  %v1891 = vpop.f32.mrb[0].mxu0
  %v1892 = vadd.f32 %v1449, %v1891
  %v1893 = vpop.f32.mrb[0].mxu0
  %1894 = vmatprep.mubr.f32.mxu0 0.0
  %v1895 = vand.u32 %v163, 4294901760
  %v1896 = vsub.f32 %v163, %v1895
  %v1897 = vand.u32 %v1896, 4294901760
  %1898 = vmatmul.mubr.f32.gmra.mrb[0].mxu0 %v1897
  %v1899 = vpop.f32.mrb[0].mxu0
  %v1900 = vadd.f32 %v1456, %v1899
  %v1901 = vpop.f32.mrb[0].mxu0
  %1902 = vmatprep.mubr.f32.mxu0 0.0
  %v1903 = vand.u32 %v166, 4294901760
  %v1904 = vsub.f32 %v166, %v1903
  %v1905 = vand.u32 %v1904, 4294901760
  %1906 = vmatmul.mubr.f32.gmra.mrb[0].mxu0 %v1905
  %v1907 = vpop.f32.mrb[0].mxu0
  %v1908 = vadd.f32 %v1463, %v1907
  %v1909 = vpop.f32.mrb[0].mxu0
  %1910 = vmatprep.mubr.f32.mxu0 0.0
  %v1911 = vand.u32 %v169, 4294901760
  %v1912 = vsub.f32 %v169, %v1911
  %v1913 = vand.u32 %v1912, 4294901760
  %1914 = vmatmul.mubr.f32.gmra.mrb[0].mxu0 %v1913
  %v1915 = vpop.f32.mrb[0].mxu0
  %v1916 = vadd.f32 %v1470, %v1915
  %v1917 = vpop.f32.mrb[0].mxu0
  %1918 = vmatprep.mubr.f32.mxu0 0.0
  %v1919 = vand.u32 %v172, 4294901760
  %v1920 = vsub.f32 %v172, %v1919
  %v1921 = vand.u32 %v1920, 4294901760
  %1922 = vmatmul.mubr.f32.gmra.mrb[0].mxu0 %v1921
  %v1923 = vpop.f32.mrb[0].mxu0
  %v1924 = vadd.f32 %v1477, %v1923
  %v1925 = vpop.f32.mrb[0].mxu0
  %1926 = vmatprep.mubr.f32.mxu0 0.0
  %v1927 = vand.u32 %v175, 4294901760
  %v1928 = vsub.f32 %v175, %v1927
  %v1929 = vand.u32 %v1928, 4294901760
  %1930 = vmatmul.mubr.f32.gmra.mrb[0].mxu0 %v1929
  %v1931 = vpop.f32.mrb[0].mxu0
  %v1932 = vadd.f32 %v1484, %v1931
  %v1933 = vpop.f32.mrb[0].mxu0
  %1934 = vmatprep.mubr.f32.mxu0 0.0
  %v1935 = vand.u32 %v178, 4294901760
  %v1936 = vsub.f32 %v178, %v1935
  %v1937 = vand.u32 %v1936, 4294901760
  %1938 = vmatmul.mubr.f32.gmra.mrb[0].mxu0 %v1937
  %v1939 = vpop.f32.mrb[0].mxu0
  %v1940 = vadd.f32 %v1491, %v1939
  %v1941 = vpop.f32.mrb[0].mxu0
  %1942 = vmatprep.mubr.f32.mxu0 0.0
  %v1943 = vand.u32 %v181, 4294901760
  %v1944 = vsub.f32 %v181, %v1943
  %v1945 = vand.u32 %v1944, 4294901760
  %1946 = vmatmul.mubr.f32.gmra.mrb[0].mxu0 %v1945
  %v1947 = vpop.f32.mrb[0].mxu0
  %v1948 = vadd.f32 %v1498, %v1947
  %v1949 = vpop.f32.mrb[0].mxu0
  %1950 = vmatprep.mubr.f32.mxu0 0.0
  %v1951 = vand.u32 %v184, 4294901760
  %v1952 = vsub.f32 %v184, %v1951
  %v1953 = vand.u32 %v1952, 4294901760
  %1954 = vmatmul.mubr.f32.gmra.mrb[0].mxu0 %v1953
  %v1955 = vpop.f32.mrb[0].mxu0
  %v1956 = vadd.f32 %v1505, %v1955
  %v1957 = vpop.f32.mrb[0].mxu0
  %1958 = vmatprep.mubr.f32.mxu0 0.0
  %v1959 = vand.u32 %v187, 4294901760
  %v1960 = vsub.f32 %v187, %v1959
  %v1961 = vand.u32 %v1960, 4294901760
  %1962 = vmatmul.mubr.f32.gmra.mrb[0].mxu0 %v1961
  %v1963 = vpop.f32.mrb[0].mxu0
  %v1964 = vadd.f32 %v1512, %v1963
  %v1965 = vpop.f32.mrb[0].mxu0
  %1966 = vmatprep.mubr.f32.mxu0 0.0
  %v1967 = vand.u32 %v190, 4294901760
  %v1968 = vsub.f32 %v190, %v1967
  %v1969 = vand.u32 %v1968, 4294901760
  %1970 = vmatmul.mubr.f32.gmra.mrb[0].mxu0 %v1969
  %v1971 = vpop.f32.mrb[0].mxu0
  %v1972 = vadd.f32 %v1519, %v1971
  %v1973 = vpop.f32.mrb[0].mxu0
  %1974 = vmatprep.mubr.f32.mxu0 0.0
  %v1975 = vand.u32 %v193, 4294901760
  %v1976 = vsub.f32 %v193, %v1975
  %v1977 = vand.u32 %v1976, 4294901760
  %1978 = vmatmul.mubr.f32.gmra.mrb[0].mxu0 %v1977
  %v1979 = vpop.f32.mrb[0].mxu0
  %v1980 = vadd.f32 %v1526, %v1979
  %v1981 = vpop.f32.mrb[0].mxu0
  %1982 = vmatprep.mubr.f32.mxu0 0.0
  %v1983 = vand.u32 %v196, 4294901760
  %v1984 = vsub.f32 %v196, %v1983
  %v1985 = vand.u32 %v1984, 4294901760
  %1986 = vmatmul.mubr.f32.gmra.mrb[0].mxu0 %v1985
  %v1987 = vpop.f32.mrb[0].mxu0
  %v1988 = vadd.f32 %v1533, %v1987
  %v1989 = vpop.f32.mrb[0].mxu0
  %1990 = vmatprep.mubr.f32.mxu0 0.0
  %v1991 = vand.u32 %v199, 4294901760
  %v1992 = vsub.f32 %v199, %v1991
  %v1993 = vand.u32 %v1992, 4294901760
  %1994 = vmatmul.mubr.f32.gmra.mrb[0].mxu0 %v1993
  %v1995 = vpop.f32.mrb[0].mxu0
  %v1996 = vadd.f32 %v1540, %v1995
  %v1997 = vpop.f32.mrb[0].mxu0
  %1998 = vmatprep.mubr.f32.mxu0 0.0
  %v1999 = vand.u32 %v202, 4294901760
  %v2000 = vsub.f32 %v202, %v1999
  %v2001 = vand.u32 %v2000, 4294901760
  %2002 = vmatmul.mubr.f32.gmra.mrb[0].mxu0 %v2001
  %v2003 = vpop.f32.mrb[0].mxu0
  %v2004 = vadd.f32 %v1547, %v2003
  %v2005 = vpop.f32.mrb[0].mxu0
  %2006 = vmatprep.mubr.f32.mxu0 0.0
  %v2007 = vand.u32 %v205, 4294901760
  %v2008 = vsub.f32 %v205, %v2007
  %v2009 = vand.u32 %v2008, 4294901760
  %2010 = vmatmul.mubr.f32.gmra.mrb[0].mxu0 %v2009
  %v2011 = vpop.f32.mrb[0].mxu0
  %v2012 = vadd.f32 %v1554, %v2011
  %v2013 = vpop.f32.mrb[0].mxu0
  %2014 = vmatprep.mubr.f32.mxu0 0.0
  %v2015 = vand.u32 %v208, 4294901760
  %v2016 = vsub.f32 %v208, %v2015
  %v2017 = vand.u32 %v2016, 4294901760
  %2018 = vmatmul.mubr.f32.gmra.mrb[0].mxu0 %v2017
  %v2019 = vpop.f32.mrb[0].mxu0
  %v2020 = vadd.f32 %v1561, %v2019
  %v2021 = vpop.f32.mrb[0].mxu0
  %2022 = vmatprep.mubr.f32.mxu0 0.0
  %v2023 = vand.u32 %v211, 4294901760
  %v2024 = vsub.f32 %v211, %v2023
  %v2025 = vand.u32 %v2024, 4294901760
  %2026 = vmatmul.mubr.f32.gmra.mrb[0].mxu0 %v2025
  %v2027 = vpop.f32.mrb[0].mxu0
  %v2028 = vadd.f32 %v1568, %v2027
  %v2029 = vpop.f32.mrb[0].mxu0
  %2030 = vmatprep.mubr.f32.mxu0 0.0
  %v2031 = vand.u32 %v214, 4294901760
  %v2032 = vsub.f32 %v214, %v2031
  %v2033 = vand.u32 %v2032, 4294901760
  %2034 = vmatmul.mubr.f32.gmra.mrb[0].mxu0 %v2033
  %v2035 = vpop.f32.mrb[0].mxu0
  %v2036 = vadd.f32 %v1575, %v2035
  %v2037 = vpop.f32.mrb[0].mxu0
  %2038 = vmatprep.mubr.f32.mxu0 0.0
  %v2039 = vand.u32 %v217, 4294901760
  %v2040 = vsub.f32 %v217, %v2039
  %v2041 = vand.u32 %v2040, 4294901760
  %2042 = vmatmul.mubr.f32.gmra.mrb[0].mxu0 %v2041
  %v2043 = vpop.f32.mrb[0].mxu0
  %v2044 = vadd.f32 %v1582, %v2043
  %v2045 = vpop.f32.mrb[0].mxu0
  %2046 = vdwg.mxu0
  %2047 = vmatprep.subr.mxu0 0.0
  %v2048 = vand.u32 %v66, 4294901760
  %v2049 = vsub.f32 %v66, %v2048
  %v2050 = vand.u32 %v2049, 4294901760
  %2051 = vmatpush1.msra.mxu0 %v2050
  %2052 = vmatprep.subr.mxu0 0.0
  %v2053 = vand.u32 %v67, 4294901760
  %v2054 = vsub.f32 %v67, %v2053
  %v2055 = vand.u32 %v2054, 4294901760
  %2056 = vmatpush1.msra.mxu0 %v2055
  %2057 = vmatprep.subr.mxu0 0.0
  %v2058 = vand.u32 %v68, 4294901760
  %v2059 = vsub.f32 %v68, %v2058
  %v2060 = vand.u32 %v2059, 4294901760
  %2061 = vmatpush1.msra.mxu0 %v2060
  %2062 = vmatprep.subr.mxu0 0.0
  %v2063 = vand.u32 %v69, 4294901760
  %v2064 = vsub.f32 %v69, %v2063
  %v2065 = vand.u32 %v2064, 4294901760
  %2066 = vmatpush1.msra.mxu0 %v2065
  %2067 = vmatprep.subr.mxu0 0.0
  %v2068 = vand.u32 %v221, 4294901760
  %v2069 = vsub.f32 %v221, %v2068
  %v2070 = vand.u32 %v2069, 4294901760
  %2071 = vmatpush1.msra.mxu0 %v2070
  %2072 = vmatprep.subr.mxu0 0.0
  %2073 = vmatpush1.msra.mxu0 0.0
  %2074 = vmatprep.subr.mxu0 0.0
  %2075 = vmatpush1.msra.mxu0 0.0
  %2076 = vmatprep.subr.mxu0 0.0
  %2077 = vmatpush1.msra.mxu0 0.0
  %2078 = vmatprep.subr.mxu0 0.0
  %2079 = vmatpush1.msra.mxu0 0.0
  %2080 = vmatprep.subr.mxu0 0.0
  %2081 = vmatpush1.msra.mxu0 0.0
  %2082 = vmatprep.subr.mxu0 0.0
  %2083 = vmatpush1.msra.mxu0 0.0
  %2084 = vmatprep.subr.mxu0 0.0
  %2085 = vmatpush1.msra.mxu0 0.0
  %2086 = vmatprep.subr.mxu0 0.0
  %2087 = vmatpush1.msra.mxu0 0.0
  %2088 = vmatprep.subr.mxu0 0.0
  %2089 = vmatpush1.msra.mxu0 0.0
  %2090 = vmatprep.subr.mxu0 0.0
  %2091 = vmatpush1.msra.mxu0 0.0
  %2092 = vmatprep.subr.mxu0 0.0
  %2093 = vmatpush1.msra.mxu0 0.0
  %2094 = vmatprep.subr.mxu0 0.0
  %2095 = vmatpush1.msra.mxu0 0.0
  %2096 = vmatprep.subr.mxu0 0.0
  %2097 = vmatpush1.msra.mxu0 0.0
  %2098 = vmatprep.subr.mxu0 0.0
  %2099 = vmatpush1.msra.mxu0 0.0
  %2100 = vmatprep.subr.mxu0 0.0
  %2101 = vmatpush1.msra.mxu0 0.0
  %2102 = vmatprep.subr.mxu0 0.0
  %2103 = vmatpush1.msra.mxu0 0.0
  %2104 = vmatprep.subr.mxu0 0.0
  %2105 = vmatpush1.msra.mxu0 0.0
  %2106 = vmatprep.subr.mxu0 0.0
  %2107 = vmatpush1.msra.mxu0 0.0
  %2108 = vmatprep.subr.mxu0 0.0
  %2109 = vmatpush1.msra.mxu0 0.0
  %2110 = vmatprep.subr.mxu0 0.0
  %2111 = vmatpush1.msra.mxu0 0.0
  %2112 = vmatprep.subr.mxu0 0.0
  %2113 = vmatpush1.msra.mxu0 0.0
  %2114 = vmatprep.subr.mxu0 0.0
  %2115 = vmatpush1.msra.mxu0 0.0
  %2116 = vmatprep.subr.mxu0 0.0
  %2117 = vmatpush1.msra.mxu0 0.0
  %2118 = vmatprep.subr.mxu0 0.0
  %2119 = vmatpush1.msra.mxu0 0.0
  %2120 = vmatprep.subr.mxu0 0.0
  %2121 = vmatpush1.msra.mxu0 0.0
  %2122 = vmatprep.subr.mxu0 0.0
  %2123 = vmatpush1.msra.mxu0 0.0
  %2124 = vmatprep.subr.mxu0 0.0
  %2125 = vmatpush1.msra.mxu0 0.0
  %2126 = vmatprep.mubr.f32.mxu0 0.0
  %v2127 = vand.u32 %v73, 4294901760
  %2128 = vmatmul.mubr.f32.gmra.mrb[0].mxu0 %v2127
  %v2129 = vpop.f32.mrb[0].mxu0
  %v2130 = vadd.f32 %v1660, %v2129
  %v2131 = vpop.f32.mrb[0].mxu0
  %2132 = vmatprep.mubr.f32.mxu0 0.0
  %v2133 = vand.u32 %v76, 4294901760
  %2134 = vmatmul.mubr.f32.gmra.mrb[0].mxu0 %v2133
  %v2135 = vpop.f32.mrb[0].mxu0
  %v2136 = vadd.f32 %v1668, %v2135
  %v2137 = vpop.f32.mrb[0].mxu0
  %2138 = vmatprep.mubr.f32.mxu0 0.0
  %v2139 = vand.u32 %v79, 4294901760
  %2140 = vmatmul.mubr.f32.gmra.mrb[0].mxu0 %v2139
  %v2141 = vpop.f32.mrb[0].mxu0
  %v2142 = vadd.f32 %v1676, %v2141
  %v2143 = vpop.f32.mrb[0].mxu0
  %2144 = vmatprep.mubr.f32.mxu0 0.0
  %v2145 = vand.u32 %v82, 4294901760
  %2146 = vmatmul.mubr.f32.gmra.mrb[0].mxu0 %v2145
  %v2147 = vpop.f32.mrb[0].mxu0
  %v2148 = vadd.f32 %v1684, %v2147
  %v2149 = vpop.f32.mrb[0].mxu0
  %2150 = vmatprep.mubr.f32.mxu0 0.0
  %v2151 = vand.u32 %v85, 4294901760
  %2152 = vmatmul.mubr.f32.gmra.mrb[0].mxu0 %v2151
  %v2153 = vpop.f32.mrb[0].mxu0
  %v2154 = vadd.f32 %v1692, %v2153
  %v2155 = vpop.f32.mrb[0].mxu0
  %2156 = vmatprep.mubr.f32.mxu0 0.0
  %v2157 = vand.u32 %v88, 4294901760
  %2158 = vmatmul.mubr.f32.gmra.mrb[0].mxu0 %v2157
  %v2159 = vpop.f32.mrb[0].mxu0
  %v2160 = vadd.f32 %v1700, %v2159
  %v2161 = vpop.f32.mrb[0].mxu0
  %2162 = vmatprep.mubr.f32.mxu0 0.0
  %v2163 = vand.u32 %v91, 4294901760
  %2164 = vmatmul.mubr.f32.gmra.mrb[0].mxu0 %v2163
  %v2165 = vpop.f32.mrb[0].mxu0
  %v2166 = vadd.f32 %v1708, %v2165
  %v2167 = vpop.f32.mrb[0].mxu0
  %2168 = vmatprep.mubr.f32.mxu0 0.0
  %v2169 = vand.u32 %v94, 4294901760
  %2170 = vmatmul.mubr.f32.gmra.mrb[0].mxu0 %v2169
  %v2171 = vpop.f32.mrb[0].mxu0
  %v2172 = vadd.f32 %v1716, %v2171
  %v2173 = vpop.f32.mrb[0].mxu0
  %2174 = vmatprep.mubr.f32.mxu0 0.0
  %v2175 = vand.u32 %v97, 4294901760
  %2176 = vmatmul.mubr.f32.gmra.mrb[0].mxu0 %v2175
  %v2177 = vpop.f32.mrb[0].mxu0
  %v2178 = vadd.f32 %v1724, %v2177
  %v2179 = vpop.f32.mrb[0].mxu0
  %2180 = vmatprep.mubr.f32.mxu0 0.0
  %v2181 = vand.u32 %v100, 4294901760
  %2182 = vmatmul.mubr.f32.gmra.mrb[0].mxu0 %v2181
  %v2183 = vpop.f32.mrb[0].mxu0
  %v2184 = vadd.f32 %v1732, %v2183
  %v2185 = vpop.f32.mrb[0].mxu0
  %2186 = vmatprep.mubr.f32.mxu0 0.0
  %v2187 = vand.u32 %v103, 4294901760
  %2188 = vmatmul.mubr.f32.gmra.mrb[0].mxu0 %v2187
  %v2189 = vpop.f32.mrb[0].mxu0
  %v2190 = vadd.f32 %v1740, %v2189
  %v2191 = vpop.f32.mrb[0].mxu0
  %2192 = vmatprep.mubr.f32.mxu0 0.0
  %v2193 = vand.u32 %v106, 4294901760
  %2194 = vmatmul.mubr.f32.gmra.mrb[0].mxu0 %v2193
  %v2195 = vpop.f32.mrb[0].mxu0
  %v2196 = vadd.f32 %v1748, %v2195
  %v2197 = vpop.f32.mrb[0].mxu0
  %2198 = vmatprep.mubr.f32.mxu0 0.0
  %v2199 = vand.u32 %v109, 4294901760
  %2200 = vmatmul.mubr.f32.gmra.mrb[0].mxu0 %v2199
  %v2201 = vpop.f32.mrb[0].mxu0
  %v2202 = vadd.f32 %v1756, %v2201
  %v2203 = vpop.f32.mrb[0].mxu0
  %2204 = vmatprep.mubr.f32.mxu0 0.0
  %v2205 = vand.u32 %v112, 4294901760
  %2206 = vmatmul.mubr.f32.gmra.mrb[0].mxu0 %v2205
  %v2207 = vpop.f32.mrb[0].mxu0
  %v2208 = vadd.f32 %v1764, %v2207
  %v2209 = vpop.f32.mrb[0].mxu0
  %2210 = vmatprep.mubr.f32.mxu0 0.0
  %v2211 = vand.u32 %v115, 4294901760
  %2212 = vmatmul.mubr.f32.gmra.mrb[0].mxu0 %v2211
  %v2213 = vpop.f32.mrb[0].mxu0
  %v2214 = vadd.f32 %v1772, %v2213
  %v2215 = vpop.f32.mrb[0].mxu0
  %2216 = vmatprep.mubr.f32.mxu0 0.0
  %v2217 = vand.u32 %v118, 4294901760
  %2218 = vmatmul.mubr.f32.gmra.mrb[0].mxu0 %v2217
  %v2219 = vpop.f32.mrb[0].mxu0
  %v2220 = vadd.f32 %v1780, %v2219
  %v2221 = vpop.f32.mrb[0].mxu0
  %2222 = vmatprep.mubr.f32.mxu0 0.0
  %v2223 = vand.u32 %v121, 4294901760
  %2224 = vmatmul.mubr.f32.gmra.mrb[0].mxu0 %v2223
  %v2225 = vpop.f32.mrb[0].mxu0
  %v2226 = vadd.f32 %v1788, %v2225
  %v2227 = vpop.f32.mrb[0].mxu0
  %2228 = vmatprep.mubr.f32.mxu0 0.0
  %v2229 = vand.u32 %v124, 4294901760
  %2230 = vmatmul.mubr.f32.gmra.mrb[0].mxu0 %v2229
  %v2231 = vpop.f32.mrb[0].mxu0
  %v2232 = vadd.f32 %v1796, %v2231
  %v2233 = vpop.f32.mrb[0].mxu0
  %2234 = vmatprep.mubr.f32.mxu0 0.0
  %v2235 = vand.u32 %v127, 4294901760
  %2236 = vmatmul.mubr.f32.gmra.mrb[0].mxu0 %v2235
  %v2237 = vpop.f32.mrb[0].mxu0
  %v2238 = vadd.f32 %v1804, %v2237
  %v2239 = vpop.f32.mrb[0].mxu0
  %2240 = vmatprep.mubr.f32.mxu0 0.0
  %v2241 = vand.u32 %v130, 4294901760
  %2242 = vmatmul.mubr.f32.gmra.mrb[0].mxu0 %v2241
  %v2243 = vpop.f32.mrb[0].mxu0
  %v2244 = vadd.f32 %v1812, %v2243
  %v2245 = vpop.f32.mrb[0].mxu0
  %2246 = vmatprep.mubr.f32.mxu0 0.0
  %v2247 = vand.u32 %v133, 4294901760
  %2248 = vmatmul.mubr.f32.gmra.mrb[0].mxu0 %v2247
  %v2249 = vpop.f32.mrb[0].mxu0
  %v2250 = vadd.f32 %v1820, %v2249
  %v2251 = vpop.f32.mrb[0].mxu0
  %2252 = vmatprep.mubr.f32.mxu0 0.0
  %v2253 = vand.u32 %v136, 4294901760
  %2254 = vmatmul.mubr.f32.gmra.mrb[0].mxu0 %v2253
  %v2255 = vpop.f32.mrb[0].mxu0
  %v2256 = vadd.f32 %v1828, %v2255
  %v2257 = vpop.f32.mrb[0].mxu0
  %2258 = vmatprep.mubr.f32.mxu0 0.0
  %v2259 = vand.u32 %v139, 4294901760
  %2260 = vmatmul.mubr.f32.gmra.mrb[0].mxu0 %v2259
  %v2261 = vpop.f32.mrb[0].mxu0
  %v2262 = vadd.f32 %v1836, %v2261
  %v2263 = vpop.f32.mrb[0].mxu0
  %2264 = vmatprep.mubr.f32.mxu0 0.0
  %v2265 = vand.u32 %v142, 4294901760
  %2266 = vmatmul.mubr.f32.gmra.mrb[0].mxu0 %v2265
  %v2267 = vpop.f32.mrb[0].mxu0
  %v2268 = vadd.f32 %v1844, %v2267
  %v2269 = vpop.f32.mrb[0].mxu0
  %2270 = vmatprep.mubr.f32.mxu0 0.0
  %v2271 = vand.u32 %v145, 4294901760
  %2272 = vmatmul.mubr.f32.gmra.mrb[0].mxu0 %v2271
  %v2273 = vpop.f32.mrb[0].mxu0
  %v2274 = vadd.f32 %v1852, %v2273
  %v2275 = vpop.f32.mrb[0].mxu0
  %2276 = vmatprep.mubr.f32.mxu0 0.0
  %v2277 = vand.u32 %v148, 4294901760
  %2278 = vmatmul.mubr.f32.gmra.mrb[0].mxu0 %v2277
  %v2279 = vpop.f32.mrb[0].mxu0
  %v2280 = vadd.f32 %v1860, %v2279
  %v2281 = vpop.f32.mrb[0].mxu0
  %2282 = vmatprep.mubr.f32.mxu0 0.0
  %v2283 = vand.u32 %v151, 4294901760
  %2284 = vmatmul.mubr.f32.gmra.mrb[0].mxu0 %v2283
  %v2285 = vpop.f32.mrb[0].mxu0
  %v2286 = vadd.f32 %v1868, %v2285
  %v2287 = vpop.f32.mrb[0].mxu0
  %2288 = vmatprep.mubr.f32.mxu0 0.0
  %v2289 = vand.u32 %v154, 4294901760
  %2290 = vmatmul.mubr.f32.gmra.mrb[0].mxu0 %v2289
  %v2291 = vpop.f32.mrb[0].mxu0
  %v2292 = vadd.f32 %v1876, %v2291
  %v2293 = vpop.f32.mrb[0].mxu0
  %2294 = vmatprep.mubr.f32.mxu0 0.0
  %v2295 = vand.u32 %v157, 4294901760
  %2296 = vmatmul.mubr.f32.gmra.mrb[0].mxu0 %v2295
  %v2297 = vpop.f32.mrb[0].mxu0
  %v2298 = vadd.f32 %v1884, %v2297
  %v2299 = vpop.f32.mrb[0].mxu0
  %2300 = vmatprep.mubr.f32.mxu0 0.0
  %v2301 = vand.u32 %v160, 4294901760
  %2302 = vmatmul.mubr.f32.gmra.mrb[0].mxu0 %v2301
  %v2303 = vpop.f32.mrb[0].mxu0
  %v2304 = vadd.f32 %v1892, %v2303
  %v2305 = vpop.f32.mrb[0].mxu0
  %2306 = vmatprep.mubr.f32.mxu0 0.0
  %v2307 = vand.u32 %v163, 4294901760
  %2308 = vmatmul.mubr.f32.gmra.mrb[0].mxu0 %v2307
  %v2309 = vpop.f32.mrb[0].mxu0
  %v2310 = vadd.f32 %v1900, %v2309
  %v2311 = vpop.f32.mrb[0].mxu0
  %2312 = vmatprep.mubr.f32.mxu0 0.0
  %v2313 = vand.u32 %v166, 4294901760
  %2314 = vmatmul.mubr.f32.gmra.mrb[0].mxu0 %v2313
  %v2315 = vpop.f32.mrb[0].mxu0
  %v2316 = vadd.f32 %v1908, %v2315
  %v2317 = vpop.f32.mrb[0].mxu0
  %2318 = vmatprep.mubr.f32.mxu0 0.0
  %v2319 = vand.u32 %v169, 4294901760
  %2320 = vmatmul.mubr.f32.gmra.mrb[0].mxu0 %v2319
  %v2321 = vpop.f32.mrb[0].mxu0
  %v2322 = vadd.f32 %v1916, %v2321
  %v2323 = vpop.f32.mrb[0].mxu0
  %2324 = vmatprep.mubr.f32.mxu0 0.0
  %v2325 = vand.u32 %v172, 4294901760
  %2326 = vmatmul.mubr.f32.gmra.mrb[0].mxu0 %v2325
  %v2327 = vpop.f32.mrb[0].mxu0
  %v2328 = vadd.f32 %v1924, %v2327
  %v2329 = vpop.f32.mrb[0].mxu0
  %2330 = vmatprep.mubr.f32.mxu0 0.0
  %v2331 = vand.u32 %v175, 4294901760
  %2332 = vmatmul.mubr.f32.gmra.mrb[0].mxu0 %v2331
  %v2333 = vpop.f32.mrb[0].mxu0
  %v2334 = vadd.f32 %v1932, %v2333
  %v2335 = vpop.f32.mrb[0].mxu0
  %2336 = vmatprep.mubr.f32.mxu0 0.0
  %v2337 = vand.u32 %v178, 4294901760
  %2338 = vmatmul.mubr.f32.gmra.mrb[0].mxu0 %v2337
  %v2339 = vpop.f32.mrb[0].mxu0
  %v2340 = vadd.f32 %v1940, %v2339
  %v2341 = vpop.f32.mrb[0].mxu0
  %2342 = vmatprep.mubr.f32.mxu0 0.0
  %v2343 = vand.u32 %v181, 4294901760
  %2344 = vmatmul.mubr.f32.gmra.mrb[0].mxu0 %v2343
  %v2345 = vpop.f32.mrb[0].mxu0
  %v2346 = vadd.f32 %v1948, %v2345
  %v2347 = vpop.f32.mrb[0].mxu0
  %2348 = vmatprep.mubr.f32.mxu0 0.0
  %v2349 = vand.u32 %v184, 4294901760
  %2350 = vmatmul.mubr.f32.gmra.mrb[0].mxu0 %v2349
  %v2351 = vpop.f32.mrb[0].mxu0
  %v2352 = vadd.f32 %v1956, %v2351
  %v2353 = vpop.f32.mrb[0].mxu0
  %2354 = vmatprep.mubr.f32.mxu0 0.0
  %v2355 = vand.u32 %v187, 4294901760
  %2356 = vmatmul.mubr.f32.gmra.mrb[0].mxu0 %v2355
  %v2357 = vpop.f32.mrb[0].mxu0
  %v2358 = vadd.f32 %v1964, %v2357
  %v2359 = vpop.f32.mrb[0].mxu0
  %2360 = vmatprep.mubr.f32.mxu0 0.0
  %v2361 = vand.u32 %v190, 4294901760
  %2362 = vmatmul.mubr.f32.gmra.mrb[0].mxu0 %v2361
  %v2363 = vpop.f32.mrb[0].mxu0
  %v2364 = vadd.f32 %v1972, %v2363
  %v2365 = vpop.f32.mrb[0].mxu0
  %2366 = vmatprep.mubr.f32.mxu0 0.0
  %v2367 = vand.u32 %v193, 4294901760
  %2368 = vmatmul.mubr.f32.gmra.mrb[0].mxu0 %v2367
  %v2369 = vpop.f32.mrb[0].mxu0
  %v2370 = vadd.f32 %v1980, %v2369
  %v2371 = vpop.f32.mrb[0].mxu0
  %2372 = vmatprep.mubr.f32.mxu0 0.0
  %v2373 = vand.u32 %v196, 4294901760
  %2374 = vmatmul.mubr.f32.gmra.mrb[0].mxu0 %v2373
  %v2375 = vpop.f32.mrb[0].mxu0
  %v2376 = vadd.f32 %v1988, %v2375
  %v2377 = vpop.f32.mrb[0].mxu0
  %2378 = vmatprep.mubr.f32.mxu0 0.0
  %v2379 = vand.u32 %v199, 4294901760
  %2380 = vmatmul.mubr.f32.gmra.mrb[0].mxu0 %v2379
  %v2381 = vpop.f32.mrb[0].mxu0
  %v2382 = vadd.f32 %v1996, %v2381
  %v2383 = vpop.f32.mrb[0].mxu0
  %2384 = vmatprep.mubr.f32.mxu0 0.0
  %v2385 = vand.u32 %v202, 4294901760
  %2386 = vmatmul.mubr.f32.gmra.mrb[0].mxu0 %v2385
  %v2387 = vpop.f32.mrb[0].mxu0
  %v2388 = vadd.f32 %v2004, %v2387
  %v2389 = vpop.f32.mrb[0].mxu0
  %2390 = vmatprep.mubr.f32.mxu0 0.0
  %v2391 = vand.u32 %v205, 4294901760
  %2392 = vmatmul.mubr.f32.gmra.mrb[0].mxu0 %v2391
  %v2393 = vpop.f32.mrb[0].mxu0
  %v2394 = vadd.f32 %v2012, %v2393
  %v2395 = vpop.f32.mrb[0].mxu0
  %2396 = vmatprep.mubr.f32.mxu0 0.0
  %v2397 = vand.u32 %v208, 4294901760
  %2398 = vmatmul.mubr.f32.gmra.mrb[0].mxu0 %v2397
  %v2399 = vpop.f32.mrb[0].mxu0
  %v2400 = vadd.f32 %v2020, %v2399
  %v2401 = vpop.f32.mrb[0].mxu0
  %2402 = vmatprep.mubr.f32.mxu0 0.0
  %v2403 = vand.u32 %v211, 4294901760
  %2404 = vmatmul.mubr.f32.gmra.mrb[0].mxu0 %v2403
  %v2405 = vpop.f32.mrb[0].mxu0
  %v2406 = vadd.f32 %v2028, %v2405
  %v2407 = vpop.f32.mrb[0].mxu0
  %2408 = vmatprep.mubr.f32.mxu0 0.0
  %v2409 = vand.u32 %v214, 4294901760
  %2410 = vmatmul.mubr.f32.gmra.mrb[0].mxu0 %v2409
  %v2411 = vpop.f32.mrb[0].mxu0
  %v2412 = vadd.f32 %v2036, %v2411
  %v2413 = vpop.f32.mrb[0].mxu0
  %2414 = vmatprep.mubr.f32.mxu0 0.0
  %v2415 = vand.u32 %v217, 4294901760
  %2416 = vmatmul.mubr.f32.gmra.mrb[0].mxu0 %v2415
  %v2417 = vpop.f32.mrb[0].mxu0
  %v2418 = vadd.f32 %v2044, %v2417
  %v2419 = vpop.f32.mrb[0].mxu0
  %2420 = vdwg.mxu0
  %2421 = vmatprep.subr.mxu0 0.0
  %v2422 = vand.u32 %v66, 4294901760
  %2423 = vmatpush1.msra.mxu0 %v2422
  %2424 = vmatprep.subr.mxu0 0.0
  %v2425 = vand.u32 %v67, 4294901760
  %2426 = vmatpush1.msra.mxu0 %v2425
  %2427 = vmatprep.subr.mxu0 0.0
  %v2428 = vand.u32 %v68, 4294901760
  %2429 = vmatpush1.msra.mxu0 %v2428
  %2430 = vmatprep.subr.mxu0 0.0
  %v2431 = vand.u32 %v69, 4294901760
  %2432 = vmatpush1.msra.mxu0 %v2431
  %2433 = vmatprep.subr.mxu0 0.0
  %v2434 = vand.u32 %v221, 4294901760
  %2435 = vmatpush1.msra.mxu0 %v2434
  %2436 = vmatprep.subr.mxu0 0.0
  %2437 = vmatpush1.msra.mxu0 0.0
  %2438 = vmatprep.subr.mxu0 0.0
  %2439 = vmatpush1.msra.mxu0 0.0
  %2440 = vmatprep.subr.mxu0 0.0
  %2441 = vmatpush1.msra.mxu0 0.0
  %2442 = vmatprep.subr.mxu0 0.0
  %2443 = vmatpush1.msra.mxu0 0.0
  %2444 = vmatprep.subr.mxu0 0.0
  %2445 = vmatpush1.msra.mxu0 0.0
  %2446 = vmatprep.subr.mxu0 0.0
  %2447 = vmatpush1.msra.mxu0 0.0
  %2448 = vmatprep.subr.mxu0 0.0
  %2449 = vmatpush1.msra.mxu0 0.0
  %2450 = vmatprep.subr.mxu0 0.0
  %2451 = vmatpush1.msra.mxu0 0.0
  %2452 = vmatprep.subr.mxu0 0.0
  %2453 = vmatpush1.msra.mxu0 0.0
  %2454 = vmatprep.subr.mxu0 0.0
  %2455 = vmatpush1.msra.mxu0 0.0
  %2456 = vmatprep.subr.mxu0 0.0
  %2457 = vmatpush1.msra.mxu0 0.0
  %2458 = vmatprep.subr.mxu0 0.0
  %2459 = vmatpush1.msra.mxu0 0.0
  %2460 = vmatprep.subr.mxu0 0.0
  %2461 = vmatpush1.msra.mxu0 0.0
  %2462 = vmatprep.subr.mxu0 0.0
  %2463 = vmatpush1.msra.mxu0 0.0
  %2464 = vmatprep.subr.mxu0 0.0
  %2465 = vmatpush1.msra.mxu0 0.0
  %2466 = vmatprep.subr.mxu0 0.0
  %2467 = vmatpush1.msra.mxu0 0.0
  %2468 = vmatprep.subr.mxu0 0.0
  %2469 = vmatpush1.msra.mxu0 0.0
  %2470 = vmatprep.subr.mxu0 0.0
  %2471 = vmatpush1.msra.mxu0 0.0
  %2472 = vmatprep.subr.mxu0 0.0
  %2473 = vmatpush1.msra.mxu0 0.0
  %2474 = vmatprep.subr.mxu0 0.0
  %2475 = vmatpush1.msra.mxu0 0.0
  %2476 = vmatprep.subr.mxu0 0.0
  %2477 = vmatpush1.msra.mxu0 0.0
  %2478 = vmatprep.subr.mxu0 0.0
  %2479 = vmatpush1.msra.mxu0 0.0
  %2480 = vmatprep.subr.mxu0 0.0
  %2481 = vmatpush1.msra.mxu0 0.0
  %2482 = vmatprep.subr.mxu0 0.0
  %2483 = vmatpush1.msra.mxu0 0.0
  %2484 = vmatprep.subr.mxu0 0.0
  %2485 = vmatpush1.msra.mxu0 0.0
  %2486 = vmatprep.subr.mxu0 0.0
  %2487 = vmatpush1.msra.mxu0 0.0
  %2488 = vmatprep.subr.mxu0 0.0
  %2489 = vmatpush1.msra.mxu0 0.0
  %2490 = vmatprep.mubr.f32.mxu0 0.0
  %v2491 = vand.u32 %v73, 4294901760
  %2492 = vmatmul.mubr.f32.gmra.mrb[0].mxu0 %v2491
  %v2493 = vpop.f32.mrb[0].mxu0
  %v2494 = vadd.f32 %v2130, %v2493
  %v2495 = vpop.f32.mrb[0].mxu0
  %2496 = vmatprep.mubr.f32.mxu0 0.0
  %v2497 = vand.u32 %v76, 4294901760
  %2498 = vmatmul.mubr.f32.gmra.mrb[0].mxu0 %v2497
  %v2499 = vpop.f32.mrb[0].mxu0
  %v2500 = vadd.f32 %v2136, %v2499
  %v2501 = vpop.f32.mrb[0].mxu0
  %2502 = vmatprep.mubr.f32.mxu0 0.0
  %v2503 = vand.u32 %v79, 4294901760
  %2504 = vmatmul.mubr.f32.gmra.mrb[0].mxu0 %v2503
  %v2505 = vpop.f32.mrb[0].mxu0
  %v2506 = vadd.f32 %v2142, %v2505
  %v2507 = vpop.f32.mrb[0].mxu0
  %2508 = vmatprep.mubr.f32.mxu0 0.0
  %v2509 = vand.u32 %v82, 4294901760
  %2510 = vmatmul.mubr.f32.gmra.mrb[0].mxu0 %v2509
  %v2511 = vpop.f32.mrb[0].mxu0
  %v2512 = vadd.f32 %v2148, %v2511
  %v2513 = vpop.f32.mrb[0].mxu0
  %2514 = vmatprep.mubr.f32.mxu0 0.0
  %v2515 = vand.u32 %v85, 4294901760
  %2516 = vmatmul.mubr.f32.gmra.mrb[0].mxu0 %v2515
  %v2517 = vpop.f32.mrb[0].mxu0
  %v2518 = vadd.f32 %v2154, %v2517
  %v2519 = vpop.f32.mrb[0].mxu0
  %2520 = vmatprep.mubr.f32.mxu0 0.0
  %v2521 = vand.u32 %v88, 4294901760
  %2522 = vmatmul.mubr.f32.gmra.mrb[0].mxu0 %v2521
  %v2523 = vpop.f32.mrb[0].mxu0
  %v2524 = vadd.f32 %v2160, %v2523
  %v2525 = vpop.f32.mrb[0].mxu0
  %2526 = vmatprep.mubr.f32.mxu0 0.0
  %v2527 = vand.u32 %v91, 4294901760
  %2528 = vmatmul.mubr.f32.gmra.mrb[0].mxu0 %v2527
  %v2529 = vpop.f32.mrb[0].mxu0
  %v2530 = vadd.f32 %v2166, %v2529
  %v2531 = vpop.f32.mrb[0].mxu0
  %2532 = vmatprep.mubr.f32.mxu0 0.0
  %v2533 = vand.u32 %v94, 4294901760
  %2534 = vmatmul.mubr.f32.gmra.mrb[0].mxu0 %v2533
  %v2535 = vpop.f32.mrb[0].mxu0
  %v2536 = vadd.f32 %v2172, %v2535
  %v2537 = vpop.f32.mrb[0].mxu0
  %2538 = vmatprep.mubr.f32.mxu0 0.0
  %v2539 = vand.u32 %v97, 4294901760
  %2540 = vmatmul.mubr.f32.gmra.mrb[0].mxu0 %v2539
  %v2541 = vpop.f32.mrb[0].mxu0
  %v2542 = vadd.f32 %v2178, %v2541
  %v2543 = vpop.f32.mrb[0].mxu0
  %2544 = vmatprep.mubr.f32.mxu0 0.0
  %v2545 = vand.u32 %v100, 4294901760
  %2546 = vmatmul.mubr.f32.gmra.mrb[0].mxu0 %v2545
  %v2547 = vpop.f32.mrb[0].mxu0
  %v2548 = vadd.f32 %v2184, %v2547
  %v2549 = vpop.f32.mrb[0].mxu0
  %2550 = vmatprep.mubr.f32.mxu0 0.0
  %v2551 = vand.u32 %v103, 4294901760
  %2552 = vmatmul.mubr.f32.gmra.mrb[0].mxu0 %v2551
  %v2553 = vpop.f32.mrb[0].mxu0
  %v2554 = vadd.f32 %v2190, %v2553
  %v2555 = vpop.f32.mrb[0].mxu0
  %2556 = vmatprep.mubr.f32.mxu0 0.0
  %v2557 = vand.u32 %v106, 4294901760
  %2558 = vmatmul.mubr.f32.gmra.mrb[0].mxu0 %v2557
  %v2559 = vpop.f32.mrb[0].mxu0
  %v2560 = vadd.f32 %v2196, %v2559
  %v2561 = vpop.f32.mrb[0].mxu0
  %2562 = vmatprep.mubr.f32.mxu0 0.0
  %v2563 = vand.u32 %v109, 4294901760
  %2564 = vmatmul.mubr.f32.gmra.mrb[0].mxu0 %v2563
  %v2565 = vpop.f32.mrb[0].mxu0
  %v2566 = vadd.f32 %v2202, %v2565
  %v2567 = vpop.f32.mrb[0].mxu0
  %2568 = vmatprep.mubr.f32.mxu0 0.0
  %v2569 = vand.u32 %v112, 4294901760
  %2570 = vmatmul.mubr.f32.gmra.mrb[0].mxu0 %v2569
  %v2571 = vpop.f32.mrb[0].mxu0
  %v2572 = vadd.f32 %v2208, %v2571
  %v2573 = vpop.f32.mrb[0].mxu0
  %2574 = vmatprep.mubr.f32.mxu0 0.0
  %v2575 = vand.u32 %v115, 4294901760
  %2576 = vmatmul.mubr.f32.gmra.mrb[0].mxu0 %v2575
  %v2577 = vpop.f32.mrb[0].mxu0
  %v2578 = vadd.f32 %v2214, %v2577
  %v2579 = vpop.f32.mrb[0].mxu0
  %2580 = vmatprep.mubr.f32.mxu0 0.0
  %v2581 = vand.u32 %v118, 4294901760
  %2582 = vmatmul.mubr.f32.gmra.mrb[0].mxu0 %v2581
  %v2583 = vpop.f32.mrb[0].mxu0
  %v2584 = vadd.f32 %v2220, %v2583
  %v2585 = vpop.f32.mrb[0].mxu0
  %2586 = vmatprep.mubr.f32.mxu0 0.0
  %v2587 = vand.u32 %v121, 4294901760
  %2588 = vmatmul.mubr.f32.gmra.mrb[0].mxu0 %v2587
  %v2589 = vpop.f32.mrb[0].mxu0
  %v2590 = vadd.f32 %v2226, %v2589
  %v2591 = vpop.f32.mrb[0].mxu0
  %2592 = vmatprep.mubr.f32.mxu0 0.0
  %v2593 = vand.u32 %v124, 4294901760
  %2594 = vmatmul.mubr.f32.gmra.mrb[0].mxu0 %v2593
  %v2595 = vpop.f32.mrb[0].mxu0
  %v2596 = vadd.f32 %v2232, %v2595
  %v2597 = vpop.f32.mrb[0].mxu0
  %2598 = vmatprep.mubr.f32.mxu0 0.0
  %v2599 = vand.u32 %v127, 4294901760
  %2600 = vmatmul.mubr.f32.gmra.mrb[0].mxu0 %v2599
  %v2601 = vpop.f32.mrb[0].mxu0
  %v2602 = vadd.f32 %v2238, %v2601
  %v2603 = vpop.f32.mrb[0].mxu0
  %2604 = vmatprep.mubr.f32.mxu0 0.0
  %v2605 = vand.u32 %v130, 4294901760
  %2606 = vmatmul.mubr.f32.gmra.mrb[0].mxu0 %v2605
  %v2607 = vpop.f32.mrb[0].mxu0
  %v2608 = vadd.f32 %v2244, %v2607
  %v2609 = vpop.f32.mrb[0].mxu0
  %2610 = vmatprep.mubr.f32.mxu0 0.0
  %v2611 = vand.u32 %v133, 4294901760
  %2612 = vmatmul.mubr.f32.gmra.mrb[0].mxu0 %v2611
  %v2613 = vpop.f32.mrb[0].mxu0
  %v2614 = vadd.f32 %v2250, %v2613
  %v2615 = vpop.f32.mrb[0].mxu0
  %2616 = vmatprep.mubr.f32.mxu0 0.0
  %v2617 = vand.u32 %v136, 4294901760
  %2618 = vmatmul.mubr.f32.gmra.mrb[0].mxu0 %v2617
  %v2619 = vpop.f32.mrb[0].mxu0
  %v2620 = vadd.f32 %v2256, %v2619
  %v2621 = vpop.f32.mrb[0].mxu0
  %2622 = vmatprep.mubr.f32.mxu0 0.0
  %v2623 = vand.u32 %v139, 4294901760
  %2624 = vmatmul.mubr.f32.gmra.mrb[0].mxu0 %v2623
  %v2625 = vpop.f32.mrb[0].mxu0
  %v2626 = vadd.f32 %v2262, %v2625
  %v2627 = vpop.f32.mrb[0].mxu0
  %2628 = vmatprep.mubr.f32.mxu0 0.0
  %v2629 = vand.u32 %v142, 4294901760
  %2630 = vmatmul.mubr.f32.gmra.mrb[0].mxu0 %v2629
  %v2631 = vpop.f32.mrb[0].mxu0
  %v2632 = vadd.f32 %v2268, %v2631
  %v2633 = vpop.f32.mrb[0].mxu0
  %2634 = vmatprep.mubr.f32.mxu0 0.0
  %v2635 = vand.u32 %v145, 4294901760
  %2636 = vmatmul.mubr.f32.gmra.mrb[0].mxu0 %v2635
  %v2637 = vpop.f32.mrb[0].mxu0
  %v2638 = vadd.f32 %v2274, %v2637
  %v2639 = vpop.f32.mrb[0].mxu0
  %2640 = vmatprep.mubr.f32.mxu0 0.0
  %v2641 = vand.u32 %v148, 4294901760
  %2642 = vmatmul.mubr.f32.gmra.mrb[0].mxu0 %v2641
  %v2643 = vpop.f32.mrb[0].mxu0
  %v2644 = vadd.f32 %v2280, %v2643
  %v2645 = vpop.f32.mrb[0].mxu0
  %2646 = vmatprep.mubr.f32.mxu0 0.0
  %v2647 = vand.u32 %v151, 4294901760
  %2648 = vmatmul.mubr.f32.gmra.mrb[0].mxu0 %v2647
  %v2649 = vpop.f32.mrb[0].mxu0
  %v2650 = vadd.f32 %v2286, %v2649
  %v2651 = vpop.f32.mrb[0].mxu0
  %2652 = vmatprep.mubr.f32.mxu0 0.0
  %v2653 = vand.u32 %v154, 4294901760
  %2654 = vmatmul.mubr.f32.gmra.mrb[0].mxu0 %v2653
  %v2655 = vpop.f32.mrb[0].mxu0
  %v2656 = vadd.f32 %v2292, %v2655
  %v2657 = vpop.f32.mrb[0].mxu0
  %2658 = vmatprep.mubr.f32.mxu0 0.0
  %v2659 = vand.u32 %v157, 4294901760
  %2660 = vmatmul.mubr.f32.gmra.mrb[0].mxu0 %v2659
  %v2661 = vpop.f32.mrb[0].mxu0
  %v2662 = vadd.f32 %v2298, %v2661
  %v2663 = vpop.f32.mrb[0].mxu0
  %2664 = vmatprep.mubr.f32.mxu0 0.0
  %v2665 = vand.u32 %v160, 4294901760
  %2666 = vmatmul.mubr.f32.gmra.mrb[0].mxu0 %v2665
  %v2667 = vpop.f32.mrb[0].mxu0
  %v2668 = vadd.f32 %v2304, %v2667
  %v2669 = vpop.f32.mrb[0].mxu0
  %2670 = vmatprep.mubr.f32.mxu0 0.0
  %v2671 = vand.u32 %v163, 4294901760
  %2672 = vmatmul.mubr.f32.gmra.mrb[0].mxu0 %v2671
  %v2673 = vpop.f32.mrb[0].mxu0
  %v2674 = vadd.f32 %v2310, %v2673
  %v2675 = vpop.f32.mrb[0].mxu0
  %2676 = vmatprep.mubr.f32.mxu0 0.0
  %v2677 = vand.u32 %v166, 4294901760
  %2678 = vmatmul.mubr.f32.gmra.mrb[0].mxu0 %v2677
  %v2679 = vpop.f32.mrb[0].mxu0
  %v2680 = vadd.f32 %v2316, %v2679
  %v2681 = vpop.f32.mrb[0].mxu0
  %2682 = vmatprep.mubr.f32.mxu0 0.0
  %v2683 = vand.u32 %v169, 4294901760
  %2684 = vmatmul.mubr.f32.gmra.mrb[0].mxu0 %v2683
  %v2685 = vpop.f32.mrb[0].mxu0
  %v2686 = vadd.f32 %v2322, %v2685
  %v2687 = vpop.f32.mrb[0].mxu0
  %2688 = vmatprep.mubr.f32.mxu0 0.0
  %v2689 = vand.u32 %v172, 4294901760
  %2690 = vmatmul.mubr.f32.gmra.mrb[0].mxu0 %v2689
  %v2691 = vpop.f32.mrb[0].mxu0
  %v2692 = vadd.f32 %v2328, %v2691
  %v2693 = vpop.f32.mrb[0].mxu0
  %2694 = vmatprep.mubr.f32.mxu0 0.0
  %v2695 = vand.u32 %v175, 4294901760
  %2696 = vmatmul.mubr.f32.gmra.mrb[0].mxu0 %v2695
  %v2697 = vpop.f32.mrb[0].mxu0
  %v2698 = vadd.f32 %v2334, %v2697
  %v2699 = vpop.f32.mrb[0].mxu0
  %2700 = vmatprep.mubr.f32.mxu0 0.0
  %v2701 = vand.u32 %v178, 4294901760
  %2702 = vmatmul.mubr.f32.gmra.mrb[0].mxu0 %v2701
  %v2703 = vpop.f32.mrb[0].mxu0
  %v2704 = vadd.f32 %v2340, %v2703
  %v2705 = vpop.f32.mrb[0].mxu0
  %2706 = vmatprep.mubr.f32.mxu0 0.0
  %v2707 = vand.u32 %v181, 4294901760
  %2708 = vmatmul.mubr.f32.gmra.mrb[0].mxu0 %v2707
  %v2709 = vpop.f32.mrb[0].mxu0
  %v2710 = vadd.f32 %v2346, %v2709
  %v2711 = vpop.f32.mrb[0].mxu0
  %2712 = vmatprep.mubr.f32.mxu0 0.0
  %v2713 = vand.u32 %v184, 4294901760
  %2714 = vmatmul.mubr.f32.gmra.mrb[0].mxu0 %v2713
  %v2715 = vpop.f32.mrb[0].mxu0
  %v2716 = vadd.f32 %v2352, %v2715
  %v2717 = vpop.f32.mrb[0].mxu0
  %2718 = vmatprep.mubr.f32.mxu0 0.0
  %v2719 = vand.u32 %v187, 4294901760
  %2720 = vmatmul.mubr.f32.gmra.mrb[0].mxu0 %v2719
  %v2721 = vpop.f32.mrb[0].mxu0
  %v2722 = vadd.f32 %v2358, %v2721
  %v2723 = vpop.f32.mrb[0].mxu0
  %2724 = vmatprep.mubr.f32.mxu0 0.0
  %v2725 = vand.u32 %v190, 4294901760
  %2726 = vmatmul.mubr.f32.gmra.mrb[0].mxu0 %v2725
  %v2727 = vpop.f32.mrb[0].mxu0
  %v2728 = vadd.f32 %v2364, %v2727
  %v2729 = vpop.f32.mrb[0].mxu0
  %2730 = vmatprep.mubr.f32.mxu0 0.0
  %v2731 = vand.u32 %v193, 4294901760
  %2732 = vmatmul.mubr.f32.gmra.mrb[0].mxu0 %v2731
  %v2733 = vpop.f32.mrb[0].mxu0
  %v2734 = vadd.f32 %v2370, %v2733
  %v2735 = vpop.f32.mrb[0].mxu0
  %2736 = vmatprep.mubr.f32.mxu0 0.0
  %v2737 = vand.u32 %v196, 4294901760
  %2738 = vmatmul.mubr.f32.gmra.mrb[0].mxu0 %v2737
  %v2739 = vpop.f32.mrb[0].mxu0
  %v2740 = vadd.f32 %v2376, %v2739
  %v2741 = vpop.f32.mrb[0].mxu0
  %2742 = vmatprep.mubr.f32.mxu0 0.0
  %v2743 = vand.u32 %v199, 4294901760
  %2744 = vmatmul.mubr.f32.gmra.mrb[0].mxu0 %v2743
  %v2745 = vpop.f32.mrb[0].mxu0
  %v2746 = vadd.f32 %v2382, %v2745
  %v2747 = vpop.f32.mrb[0].mxu0
  %2748 = vmatprep.mubr.f32.mxu0 0.0
  %v2749 = vand.u32 %v202, 4294901760
  %2750 = vmatmul.mubr.f32.gmra.mrb[0].mxu0 %v2749
  %v2751 = vpop.f32.mrb[0].mxu0
  %v2752 = vadd.f32 %v2388, %v2751
  %v2753 = vpop.f32.mrb[0].mxu0
  %2754 = vmatprep.mubr.f32.mxu0 0.0
  %v2755 = vand.u32 %v205, 4294901760
  %2756 = vmatmul.mubr.f32.gmra.mrb[0].mxu0 %v2755
  %v2757 = vpop.f32.mrb[0].mxu0
  %v2758 = vadd.f32 %v2394, %v2757
  %v2759 = vpop.f32.mrb[0].mxu0
  %2760 = vmatprep.mubr.f32.mxu0 0.0
  %v2761 = vand.u32 %v208, 4294901760
  %2762 = vmatmul.mubr.f32.gmra.mrb[0].mxu0 %v2761
  %v2763 = vpop.f32.mrb[0].mxu0
  %v2764 = vadd.f32 %v2400, %v2763
  %v2765 = vpop.f32.mrb[0].mxu0
  %2766 = vmatprep.mubr.f32.mxu0 0.0
  %v2767 = vand.u32 %v211, 4294901760
  %2768 = vmatmul.mubr.f32.gmra.mrb[0].mxu0 %v2767
  %v2769 = vpop.f32.mrb[0].mxu0
  %v2770 = vadd.f32 %v2406, %v2769
  %v2771 = vpop.f32.mrb[0].mxu0
  %2772 = vmatprep.mubr.f32.mxu0 0.0
  %v2773 = vand.u32 %v214, 4294901760
  %2774 = vmatmul.mubr.f32.gmra.mrb[0].mxu0 %v2773
  %v2775 = vpop.f32.mrb[0].mxu0
  %v2776 = vadd.f32 %v2412, %v2775
  %v2777 = vpop.f32.mrb[0].mxu0
  %2778 = vmatprep.mubr.f32.mxu0 0.0
  %v2779 = vand.u32 %v217, 4294901760
  %2780 = vmatmul.mubr.f32.gmra.mrb[0].mxu0 %v2779
  %v2781 = vpop.f32.mrb[0].mxu0
  %v2782 = vadd.f32 %v2418, %v2781
  %v2783 = vpop.f32.mrb[0].mxu0
  %2784 = vdwg.mxu0
  %v2785 = vld [vmem:[%s2] sm:$0x1]
  %v2787 = vlaneseq
  %v2788 = vshrl.u32 %v2787, 7
  %v2789 = vsub.s32 0, %v2788
  %v2790 = vrot.slane %v2785, %v2789
  %v2792 = vmul.f32 %v2494, %v2790
  %v2793 = vmul.f32 %v2500, %v2790
  %v2794 = vmul.f32 %v2506, %v2790
  %v2795 = vmul.f32 %v2512, %v2790
  %v2796 = vmul.f32 %v2518, %v2790
  %v2797 = vmul.f32 %v2524, %v2790
  %v2798 = vmul.f32 %v2530, %v2790
  %v2799 = vmul.f32 %v2536, %v2790
  %v2800 = vmul.f32 %v2542, %v2790
  %v2801 = vmul.f32 %v2548, %v2790
  %v2802 = vmul.f32 %v2554, %v2790
  %v2803 = vmul.f32 %v2560, %v2790
  %v2804 = vmul.f32 %v2566, %v2790
  %v2805 = vmul.f32 %v2572, %v2790
  %v2806 = vmul.f32 %v2578, %v2790
  %v2807 = vmul.f32 %v2584, %v2790
  %v2808 = vmul.f32 %v2590, %v2790
  %v2809 = vmul.f32 %v2596, %v2790
  %v2810 = vmul.f32 %v2602, %v2790
  %v2811 = vmul.f32 %v2608, %v2790
  %v2812 = vmul.f32 %v2614, %v2790
  %v2813 = vmul.f32 %v2620, %v2790
  %v2814 = vmul.f32 %v2626, %v2790
  %v2815 = vmul.f32 %v2632, %v2790
  %v2816 = vmul.f32 %v2638, %v2790
  %v2817 = vmul.f32 %v2644, %v2790
  %v2818 = vmul.f32 %v2650, %v2790
  %v2819 = vmul.f32 %v2656, %v2790
  %v2820 = vmul.f32 %v2662, %v2790
  %v2821 = vmul.f32 %v2668, %v2790
  %v2822 = vmul.f32 %v2674, %v2790
  %v2823 = vmul.f32 %v2680, %v2790
  %v2824 = vmul.f32 %v2686, %v2790
  %v2825 = vmul.f32 %v2692, %v2790
  %v2826 = vmul.f32 %v2698, %v2790
  %v2827 = vmul.f32 %v2704, %v2790
  %v2828 = vmul.f32 %v2710, %v2790
  %v2829 = vmul.f32 %v2716, %v2790
  %v2830 = vmul.f32 %v2722, %v2790
  %v2831 = vmul.f32 %v2728, %v2790
  %v2832 = vmul.f32 %v2734, %v2790
  %v2833 = vmul.f32 %v2740, %v2790
  %v2834 = vmul.f32 %v2746, %v2790
  %v2835 = vmul.f32 %v2752, %v2790
  %v2836 = vmul.f32 %v2758, %v2790
  %v2837 = vmul.f32 %v2764, %v2790
  %v2838 = vmul.f32 %v2770, %v2790
  %v2839 = vmul.f32 %v2776, %v2790
  %v2840 = vmul.f32 %v2782, %v2790
  %v2841 = vld [vmem:[%s3] sm:$0x1]
  %v2843 = vlaneseq
  %v2844 = vshrl.u32 %v2843, 7
  %v2845 = vsub.s32 0, %v2844
  %v2846 = vrot.slane %v2841, %v2845
  %v2848 = vadd.f32 %v2792, %v2846
  %v2849 = vadd.f32 %v2793, %v2846
  %v2850 = vadd.f32 %v2794, %v2846
  %v2851 = vadd.f32 %v2795, %v2846
  %v2852 = vadd.f32 %v2796, %v2846
  %v2853 = vadd.f32 %v2797, %v2846
  %v2854 = vadd.f32 %v2798, %v2846
  %v2855 = vadd.f32 %v2799, %v2846
  %v2856 = vadd.f32 %v2800, %v2846
  %v2857 = vadd.f32 %v2801, %v2846
  %v2858 = vadd.f32 %v2802, %v2846
  %v2859 = vadd.f32 %v2803, %v2846
  %v2860 = vadd.f32 %v2804, %v2846
  %v2861 = vadd.f32 %v2805, %v2846
  %v2862 = vadd.f32 %v2806, %v2846
  %v2863 = vadd.f32 %v2807, %v2846
  %v2864 = vadd.f32 %v2808, %v2846
  %v2865 = vadd.f32 %v2809, %v2846
  %v2866 = vadd.f32 %v2810, %v2846
  %v2867 = vadd.f32 %v2811, %v2846
  %v2868 = vadd.f32 %v2812, %v2846
  %v2869 = vadd.f32 %v2813, %v2846
  %v2870 = vadd.f32 %v2814, %v2846
  %v2871 = vadd.f32 %v2815, %v2846
  %v2872 = vadd.f32 %v2816, %v2846
  %v2873 = vadd.f32 %v2817, %v2846
  %v2874 = vadd.f32 %v2818, %v2846
  %v2875 = vadd.f32 %v2819, %v2846
  %v2876 = vadd.f32 %v2820, %v2846
  %v2877 = vadd.f32 %v2821, %v2846
  %v2878 = vadd.f32 %v2822, %v2846
  %v2879 = vadd.f32 %v2823, %v2846
  %v2880 = vadd.f32 %v2824, %v2846
  %v2881 = vadd.f32 %v2825, %v2846
  %v2882 = vadd.f32 %v2826, %v2846
  %v2883 = vadd.f32 %v2827, %v2846
  %v2884 = vadd.f32 %v2828, %v2846
  %v2885 = vadd.f32 %v2829, %v2846
  %v2886 = vadd.f32 %v2830, %v2846
  %v2887 = vadd.f32 %v2831, %v2846
  %v2888 = vadd.f32 %v2832, %v2846
  %v2889 = vadd.f32 %v2833, %v2846
  %v2890 = vadd.f32 %v2834, %v2846
  %v2891 = vadd.f32 %v2835, %v2846
  %v2892 = vadd.f32 %v2836, %v2846
  %v2893 = vadd.f32 %v2837, %v2846
  %v2894 = vadd.f32 %v2838, %v2846
  %v2895 = vadd.f32 %v2839, %v2846
  %v2896 = vadd.f32 %v2840, %v2846
  %v2897 = vmax.f32 %v2848, 0.0
  %v2898 = vmax.f32 %v2849, 0.0
  %v2899 = vmax.f32 %v2850, 0.0
  %v2900 = vmax.f32 %v2851, 0.0
  %v2901 = vmax.f32 %v2852, 0.0
  %v2902 = vmax.f32 %v2853, 0.0
  %v2903 = vmax.f32 %v2854, 0.0
  %v2904 = vmax.f32 %v2855, 0.0
  %v2905 = vmax.f32 %v2856, 0.0
  %v2906 = vmax.f32 %v2857, 0.0
  %v2907 = vmax.f32 %v2858, 0.0
  %v2908 = vmax.f32 %v2859, 0.0
  %v2909 = vmax.f32 %v2860, 0.0
  %v2910 = vmax.f32 %v2861, 0.0
  %v2911 = vmax.f32 %v2862, 0.0
  %v2912 = vmax.f32 %v2863, 0.0
  %v2913 = vmax.f32 %v2864, 0.0
  %v2914 = vmax.f32 %v2865, 0.0
  %v2915 = vmax.f32 %v2866, 0.0
  %v2916 = vmax.f32 %v2867, 0.0
  %v2917 = vmax.f32 %v2868, 0.0
  %v2918 = vmax.f32 %v2869, 0.0
  %v2919 = vmax.f32 %v2870, 0.0
  %v2920 = vmax.f32 %v2871, 0.0
  %v2921 = vmax.f32 %v2872, 0.0
  %v2922 = vmax.f32 %v2873, 0.0
  %v2923 = vmax.f32 %v2874, 0.0
  %v2924 = vmax.f32 %v2875, 0.0
  %v2925 = vmax.f32 %v2876, 0.0
  %v2926 = vmax.f32 %v2877, 0.0
  %v2927 = vmax.f32 %v2878, 0.0
  %v2928 = vmax.f32 %v2879, 0.0
  %v2929 = vmax.f32 %v2880, 0.0
  %v2930 = vmax.f32 %v2881, 0.0
  %v2931 = vmax.f32 %v2882, 0.0
  %v2932 = vmax.f32 %v2883, 0.0
  %v2933 = vmax.f32 %v2884, 0.0
  %v2934 = vmax.f32 %v2885, 0.0
  %v2935 = vmax.f32 %v2886, 0.0
  %v2936 = vmax.f32 %v2887, 0.0
  %v2937 = vmax.f32 %v2888, 0.0
  %v2938 = vmax.f32 %v2889, 0.0
  %v2939 = vmax.f32 %v2890, 0.0
  %v2940 = vmax.f32 %v2891, 0.0
  %v2941 = vmax.f32 %v2892, 0.0
  %v2942 = vmax.f32 %v2893, 0.0
  %v2943 = vmax.f32 %v2894, 0.0
  %v2944 = vmax.f32 %v2895, 0.0
  %v2945 = vmax.f32 %v2896, 0.0
  %vm2946 = vcmask 261120
  %2947 = vst.msk [vmem:[%s4] sm:$0xff] %vm2946, %v2897
  %2948 = vst.msk [vmem:[%s4 + $0x8] sm:$0xff] %vm2946, %v2898
  %2949 = vst.msk [vmem:[%s4 + $0x10] sm:$0xff] %vm2946, %v2899
  %2950 = vst.msk [vmem:[%s4 + $0x18] sm:$0xff] %vm2946, %v2900
  %2951 = vst.msk [vmem:[%s4 + $0x20] sm:$0xff] %vm2946, %v2901
  %2952 = vst.msk [vmem:[%s4 + $0x28] sm:$0xff] %vm2946, %v2902
  %2953 = vst.msk [vmem:[%s4 + $0x30] sm:$0xff] %vm2946, %v2903
  %2954 = vst.msk [vmem:[%s4 + $0x38] sm:$0xff] %vm2946, %v2904
  %2955 = vst.msk [vmem:[%s4 + $0x40] sm:$0xff] %vm2946, %v2905
  %2956 = vst.msk [vmem:[%s4 + $0x48] sm:$0xff] %vm2946, %v2906
  %2957 = vst.msk [vmem:[%s4 + $0x50] sm:$0xff] %vm2946, %v2907
  %2958 = vst.msk [vmem:[%s4 + $0x58] sm:$0xff] %vm2946, %v2908
  %2959 = vst.msk [vmem:[%s4 + $0x60] sm:$0xff] %vm2946, %v2909
  %2960 = vst.msk [vmem:[%s4 + $0x68] sm:$0xff] %vm2946, %v2910
  %2961 = vst.msk [vmem:[%s4 + $0x70] sm:$0xff] %vm2946, %v2911
  %2962 = vst.msk [vmem:[%s4 + $0x78] sm:$0xff] %vm2946, %v2912
  %2963 = vst.msk [vmem:[%s4 + $0x80] sm:$0xff] %vm2946, %v2913
  %2964 = vst.msk [vmem:[%s4 + $0x88] sm:$0xff] %vm2946, %v2914
  %2965 = vst.msk [vmem:[%s4 + $0x90] sm:$0xff] %vm2946, %v2915
  %2966 = vst.msk [vmem:[%s4 + $0x98] sm:$0xff] %vm2946, %v2916
  %2967 = vst.msk [vmem:[%s4 + $0xa0] sm:$0xff] %vm2946, %v2917
  %2968 = vst.msk [vmem:[%s4 + $0xa8] sm:$0xff] %vm2946, %v2918
  %2969 = vst.msk [vmem:[%s4 + $0xb0] sm:$0xff] %vm2946, %v2919
  %2970 = vst.msk [vmem:[%s4 + $0xb8] sm:$0xff] %vm2946, %v2920
  %2971 = vst.msk [vmem:[%s4 + $0xc0] sm:$0xff] %vm2946, %v2921
  %2972 = vst.msk [vmem:[%s4 + $0xc8] sm:$0xff] %vm2946, %v2922
  %2973 = vst.msk [vmem:[%s4 + $0xd0] sm:$0xff] %vm2946, %v2923
  %2974 = vst.msk [vmem:[%s4 + $0xd8] sm:$0xff] %vm2946, %v2924
  %2975 = vst.msk [vmem:[%s4 + $0xe0] sm:$0xff] %vm2946, %v2925
  %2976 = vst.msk [vmem:[%s4 + $0xe8] sm:$0xff] %vm2946, %v2926
  %2977 = vst.msk [vmem:[%s4 + $0xf0] sm:$0xff] %vm2946, %v2927
  %2978 = vst.msk [vmem:[%s4 + $0xf8] sm:$0xff] %vm2946, %v2928
  %2979 = vst.msk [vmem:[%s4 + $0x100] sm:$0xff] %vm2946, %v2929
  %2980 = vst.msk [vmem:[%s4 + $0x108] sm:$0xff] %vm2946, %v2930
  %2981 = vst.msk [vmem:[%s4 + $0x110] sm:$0xff] %vm2946, %v2931
  %2982 = vst.msk [vmem:[%s4 + $0x118] sm:$0xff] %vm2946, %v2932
  %2983 = vst.msk [vmem:[%s4 + $0x120] sm:$0xff] %vm2946, %v2933
  %2984 = vst.msk [vmem:[%s4 + $0x128] sm:$0xff] %vm2946, %v2934
  %2985 = vst.msk [vmem:[%s4 + $0x130] sm:$0xff] %vm2946, %v2935
  %2986 = vst.msk [vmem:[%s4 + $0x138] sm:$0xff] %vm2946, %v2936
  %2987 = vst.msk [vmem:[%s4 + $0x140] sm:$0xff] %vm2946, %v2937
  %2988 = vst.msk [vmem:[%s4 + $0x148] sm:$0xff] %vm2946, %v2938
  %2989 = vst.msk [vmem:[%s4 + $0x150] sm:$0xff] %vm2946, %v2939
  %2990 = vst.msk [vmem:[%s4 + $0x158] sm:$0xff] %vm2946, %v2940
  %2991 = vst.msk [vmem:[%s4 + $0x160] sm:$0xff] %vm2946, %v2941
  %2992 = vst.msk [vmem:[%s4 + $0x168] sm:$0xff] %vm2946, %v2942
  %2993 = vst.msk [vmem:[%s4 + $0x170] sm:$0xff] %vm2946, %v2943
  %2994 = vst.msk [vmem:[%s4 + $0x178] sm:$0xff] %vm2946, %v2944
  %2995 = vst.msk [vmem:[%s4 + $0x180] sm:$0xff] %vm2946, %v2945
  // Predicated region
  $region18: #{tpu_custom_call.1} parent=0 // pred_check
    _
  $region19: #{tpu_custom_call.1} parent=0 // pred_check_branch
    %2997 = sbr.rel (0) target = $region21
  $region20: #{tpu_custom_call.1} parent=0 // pred_region
    _
  $region21: #{tpu_custom_call.1} parent=0 // pred_fallthru
    _
  // Predicated region
  $region22: #{tpu_custom_call.1} parent=0 // pred_check
    _
  $region23: #{tpu_custom_call.1} parent=0 // pred_check_branch
    %2999 = sbr.rel (0) target = $region25
  $region24: #{tpu_custom_call.1} parent=0 // pred_region
    _
  $region25: #{tpu_custom_call.1} parent=0 // pred_fallthru
    _

</llo_original>
